<compile_context>
chip_gen: v7x
topology: tpu7x:2x2x1
jax: 0.10.0
libtpu: 0.0.40
codegen_flags: <defaults>
</compile_context>

<pallas_src>
import functools

import jax
import jax.numpy as jnp
from jax import lax
from jax.experimental import pallas as pl
from jax.experimental.pallas import tpu as pltpu


# ----------------------------------------------------------------------------
# Fused decoder kernel.
#   xm_ref : (1, TH, Wp, Cin)   main row-tile of the (padded) NHWC input
#   xh_ref : (1, 1,  Wp, Cin)   halo row (first row of the next tile)
#   w1/s1/b1, wt(9,mid,mid)/st/bt, w2/s2/b2 : folded weights / BN params
#   o_ref  : (1, 2, 2, TH, W, Cout)   phase-separated output tile
# ----------------------------------------------------------------------------
def _decoder_fused_kernel(xm_ref, xh_ref,
                          w1_ref, s1_ref, b1_ref,
                          wt_ref, st_ref, bt_ref,
                          w2_ref, s2_ref, b2_ref,
                          o_ref):
    TH = xm_ref.shape[1]
    Wp = xm_ref.shape[2]
    Cin = xm_ref.shape[3]
    mid = w1_ref.shape[1]
    W = o_ref.shape[4]
    Cout = o_ref.shape[5]

    def conv1(x2d):
        y = jnp.dot(x2d, w1_ref[...], preferred_element_type=jnp.float32)
        return jnp.maximum(y * s1_ref[...] + b1_ref[...], 0.0)

    # conv1 (1x1) + BN + ReLU on the tile rows and on the single halo row.
    ym = conv1(xm_ref[0].reshape(TH * Wp, Cin)).reshape(TH, Wp, mid)
    yh = conv1(xh_ref[0].reshape(Wp, Cin)).reshape(1, Wp, mid)

    # The padded columns / padded bottom row of x are zeros, but conv1 maps
    # zeros to ReLU(b1) != 0 -> mask them back to zero (they must contribute
    # nothing to the transposed conv).
    col = lax.broadcasted_iota(jnp.int32, (1, Wp, 1), 1)
    ym = jnp.where(col < W, ym, 0.0)
    yh = jnp.where(col < W, yh, 0.0)
    keep_halo = (pl.program_id(1) != pl.num_programs(1) - 1).astype(jnp.float32)
    yh = yh * keep_halo                      # last row-tile: halo row is OOB -> 0

    y_ext = jnp.concatenate([ym, yh], axis=0)          # (TH+1, Wp, mid)

    # Shifted views needed by the 4 output phases of the s=2 deconv.
    y00 = y_ext[0:TH, 0:W, :].reshape(TH * W, mid)
    y01 = y_ext[0:TH, 1:W + 1, :].reshape(TH * W, mid)
    y10 = y_ext[1:TH + 1, 0:W, :].reshape(TH * W, mid)
    y11 = y_ext[1:TH + 1, 1:W + 1, :].reshape(TH * W, mid)

    def tap(a, kh, kw):
        return jnp.dot(a, wt_ref[kh * 3 + kw],
                       preferred_element_type=jnp.float32)

    # ConvTranspose2d(k=3, s=2, p=1, op=1) phase decomposition:
    #   out[2h  , 2w  ] = y[h,w]W11
    #   out[2h  , 2w+1] = y[h,w]W12 + y[h,w+1]W10
    #   out[2h+1, 2w  ] = y[h,w]W21 + y[h+1,w]W01
    #   out[2h+1, 2w+1] = y[h,w]W22 + y[h,w+1]W20 + y[h+1,w]W02 + y[h+1,w+1]W00
    p00 = tap(y00, 1, 1)
    p01 = tap(y00, 1, 2) + tap(y01, 1, 0)
    p10 = tap(y00, 2, 1) + tap(y10, 0, 1)
    p11 = tap(y00, 2, 2) + tap(y01, 2, 0) + tap(y10, 0, 2) + tap(y11, 0, 0)

    def epilogue(p):
        z = jnp.maximum(p * st_ref[...] + bt_ref[...], 0.0)     # BN+ReLU (tp)
        o = jnp.dot(z, w2_ref[...], preferred_element_type=jnp.float32)
        o = jnp.maximum(o * s2_ref[...] + b2_ref[...], 0.0)     # BN+ReLU (conv2)
        return o.reshape(TH, W, Cout).astype(o_ref.dtype)

    o_ref[0, 0, 0] = epilogue(p00)
    o_ref[0, 0, 1] = epilogue(p01)
    o_ref[0, 1, 0] = epilogue(p10)
    o_ref[0, 1, 1] = epilogue(p11)


def _pick_row_tile(H, target=8):
    """Largest divisor of H not exceeding `target` (>=1)."""
    best = 1
    for t in range(1, H + 1):
        if H % t == 0 and t <= target:
            best = t
    return best


# ----------------------------------------------------------------------------
# Decoder forward (NCHW in, NCHW out).  Specialized to the LinkNet deconv
# configuration: kernel_size=3, stride=2, padding=1, output_padding=1.
# ----------------------------------------------------------------------------
@functools.partial(jax.jit, static_argnames=("kernel_size", "stride", "padding",
                                             "output_padding", "row_tile"))
def decoder_forward(x_nchw, params, *, kernel_size=3, stride=2, padding=1,
                    output_padding=1, row_tile=None):
    assert (kernel_size, stride, padding, output_padding) == (3, 2, 1, 1), (
        "fused kernel specializes the LinkNet deconv (k=3, s=2, p=1, op=1)")
    N, Cin, H, W = x_nchw.shape
    mid = params["w1"].shape[1]
    Cout = params["w2"].shape[1]

    TH = row_tile if row_tile is not None else _pick_row_tile(H)
    assert H % TH == 0
    nH = H // TH
    wpad = 8 - (W % 8) if (W % 8) else 8      # >=1 zero col; width stays %8==0
    Wp = W + wpad

    # NCHW -> NHWC, plus one halo row at the bottom and `wpad` zero cols.
    x = jnp.transpose(x_nchw, (0, 2, 3, 1))
    x = jnp.pad(x, ((0, 0), (0, 1), (0, wpad), (0, 0)))

    out_ph = pl.pallas_call(
        _decoder_fused_kernel,
        out_shape=jax.ShapeDtypeStruct((N, 2, 2, H, W, Cout), jnp.float32),
        grid_spec=pl.GridSpec(
            grid=(N, nH),
            in_specs=[
                pl.BlockSpec((1, TH, Wp, Cin), lambda n, h: (n, h, 0, 0)),
                pl.BlockSpec((1, 1, Wp, Cin),
                             lambda n, h: (n, (h + 1) * TH, 0, 0)),
                pl.BlockSpec((Cin, mid), lambda n, h: (0, 0)),
                pl.BlockSpec((1, mid), lambda n, h: (0, 0)),
                pl.BlockSpec((1, mid), lambda n, h: (0, 0)),
                pl.BlockSpec((9, mid, mid), lambda n, h: (0, 0, 0)),
                pl.BlockSpec((1, mid), lambda n, h: (0, 0)),
                pl.BlockSpec((1, mid), lambda n, h: (0, 0)),
                pl.BlockSpec((mid, Cout), lambda n, h: (0, 0)),
                pl.BlockSpec((1, Cout), lambda n, h: (0, 0)),
                pl.BlockSpec((1, Cout), lambda n, h: (0, 0)),
            ],
            out_specs=pl.BlockSpec((1, 2, 2, TH, W, Cout),
                                   lambda n, h: (n, 0, 0, h, 0, 0)),
        ),
        compiler_params=pltpu.CompilerParams(
            dimension_semantics=("parallel", "parallel")),
    )(x, x,
      params["w1"], params["s1"], params["b1"],
      params["w_tp_taps"], params["s_tp"], params["b_tp"],
      params["w2"], params["s2"], params["b2"])

    # (N, ph, pw, H, W, C) -> (N, C, H, ph, W, pw) -> (N, C, 2H, 2W).
    # Single transpose pass: folds the phase interleave into the NCHW layout
    # conversion that the PyTorch interface requires anyway.
    out = jnp.transpose(out_ph, (0, 5, 3, 1, 4, 2))
    return out.reshape(N, Cout, 2 * H, 2 * W)


# ----------------------------------------------------------------------------
# Parameter construction (deterministic, synthetic; BN folded to scale/shift).
# ----------------------------------------------------------------------------
def make_params(key, in_planes, out_planes, kernel_size=3):
    mid = in_planes // 4
    ks = jax.random.split(key, 16)
    eps = 1e-5

    def bn(kg, kb, km, kv, c):
        gamma = jax.random.normal(kg, (c,), jnp.float32) * 0.1 + 1.0
        beta = jax.random.normal(kb, (c,), jnp.float32) * 0.1
        mean = jax.random.normal(km, (c,), jnp.float32) * 0.1
        var = jax.nn.softplus(jax.random.normal(kv, (c,), jnp.float32)) + 0.5
        scale = gamma / jnp.sqrt(var + eps)
        shift = beta - mean * scale
        return scale.reshape(1, c), shift.reshape(1, c)

    p = {}
    # conv1: PyTorch weight (mid, in, 1, 1) -> matmul weight (in, mid)
    p["w1"] = jax.random.normal(ks[0], (in_planes, mid), jnp.float32) * 0.1
    p["s1"], p["b1"] = bn(ks[1], ks[2], ks[3], ks[4], mid)
    # tp_conv: PyTorch ConvTranspose2d weight, layout (in_ch, out_ch, kh, kw)
    w_t = jax.random.normal(ks[5], (mid, mid, kernel_size, kernel_size),
                            jnp.float32) * 0.1
    p["w_tp_raw"] = w_t                                    # for the reference
    # per-tap (ci, co) matrices, flattened over (kh, kw) for the fused kernel
    p["w_tp_taps"] = jnp.transpose(w_t, (2, 3, 0, 1)).reshape(
        kernel_size * kernel_size, mid, mid)
    p["s_tp"], p["b_tp"] = bn(ks[6], ks[7], ks[8], ks[9], mid)
    # conv2: PyTorch weight (out, mid, 1, 1) -> matmul weight (mid, out)
    p["w2"] = jax.random.normal(ks[10], (mid, out_planes), jnp.float32) * 0.1
    p["s2"], p["b2"] = bn(ks[11], ks[12], ks[13], ks[14], out_planes)
    return p


# ----------------------------------------------------------------------------
# Pure-JAX reference using the independent zero-insertion formulation of the
# transposed convolution (cross-checks the phase decomposition).
# ----------------------------------------------------------------------------
def decoder_reference(x_nchw, params, kernel_size=3, stride=2, padding=1,
                      out_pad=1):
    N, Cin, H, W = x_nchw.shape
    mid = params["w1"].shape[1]
    x = jnp.transpose(x_nchw, (0, 2, 3, 1))
    y = jnp.maximum(x @ params["w1"] * params["s1"] + params["b1"], 0.0)
    Hd, Wd = (H - 1) * stride + 1, (W - 1) * stride + 1
    y_dil = jnp.zeros((N, Hd, Wd, mid), jnp.float32)
    y_dil = y_dil.at[:, ::stride, ::stride, :].set(y)
    pad_lo = kernel_size - 1 - padding
    pad_hi = kernel_size - 1 - padding + out_pad
    y_pad = jnp.pad(y_dil, ((0, 0), (pad_lo, pad_hi), (pad_lo, pad_hi), (0, 0)))
    Ho = (H - 1) * stride - 2 * padding + kernel_size + out_pad
    Wo = (W - 1) * stride - 2 * padding + kernel_size + out_pad
    # equivalent stride-1 conv weight in HWIO: flip spatially, contract ci->co
    w_hwio = jnp.transpose(params["w_tp_raw"][:, :, ::-1, ::-1], (2, 3, 0, 1))
    acc = jnp.zeros((N, Ho, Wo, mid), jnp.float32)
    for kh in range(kernel_size):
        for kw in range(kernel_size):
            acc = acc + jnp.einsum("nhwc,cd->nhwd",
                                   y_pad[:, kh:kh + Ho, kw:kw + Wo, :],
                                   w_hwio[kh, kw])
    z = jnp.maximum(acc * params["s_tp"] + params["b_tp"], 0.0)
    o = jnp.maximum(z @ params["w2"] * params["s2"] + params["b2"], 0.0)
    return jnp.transpose(o, (0, 3, 1, 2))


if __name__ == "__main__":
    key = jax.random.PRNGKey(0)
    k_x, k_p = jax.random.split(key)

    in_planes, out_planes = 16, 8
    N, H, W = 2, 16, 16
    x = jax.random.normal(k_x, (N, in_planes, H, W), jnp.float32)
    params = make_params(k_p, in_planes, out_planes, kernel_size=3)

    out = decoder_forward(x, params)          # grid (N=2, row-tiles=2)
    out = jax.block_until_ready(out)

    ref = decoder_reference(x, params)
    assert out.shape == (N, out_planes, 2 * H, 2 * W), out.shape
    assert jnp.allclose(out, ref, atol=1e-4, rtol=1e-4), \
        float(jnp.max(jnp.abs(out - ref)))

    print("KERNEL_OK")
</pallas_src>

<mosaic_0001>
module attributes {stable_mosaic.version = 11 : i64} {
  func.func @_decoder_fused_kernel(%arg0: i32, %arg1: i32, %arg2: memref<1x8x24x16xf32, #tpu.memory_space<vmem>>, %arg3: memref<1x1x24x16xf32, #tpu.memory_space<vmem>>, %arg4: memref<16x4xf32, #tpu.memory_space<vmem>>, %arg5: memref<1x4xf32, #tpu.memory_space<vmem>>, %arg6: memref<1x4xf32, #tpu.memory_space<vmem>>, %arg7: memref<9x4x4xf32, #tpu.memory_space<vmem>>, %arg8: memref<1x4xf32, #tpu.memory_space<vmem>>, %arg9: memref<1x4xf32, #tpu.memory_space<vmem>>, %arg10: memref<4x8xf32, #tpu.memory_space<vmem>>, %arg11: memref<1x8xf32, #tpu.memory_space<vmem>>, %arg12: memref<1x8xf32, #tpu.memory_space<vmem>>, %arg13: memref<1x2x2x8x16x8xf32, #tpu.memory_space<vmem>>) attributes {dimension_semantics = [#tpu.dimension_semantics<parallel>, #tpu.dimension_semantics<parallel>], iteration_bounds = array<i64: 2, 2>, scalar_prefetch = 0 : i64, scratch_operands = 0 : i64, tpu.core_type = #tpu.core_type<tc>, window_params = [{transform_indices = @transform_0, window_bounds = array<i64: 1, 8, 24, 16>}, {transform_indices = @transform_1, window_bounds = array<i64: 1, 1, 24, 16>}, {pipeline_mode = #tpu.pipeline_mode<synchronous>, transform_indices = @transform_2, window_bounds = array<i64: 16, 4>}, {pipeline_mode = #tpu.pipeline_mode<synchronous>, transform_indices = @transform_3, window_bounds = array<i64: 1, 4>}, {pipeline_mode = #tpu.pipeline_mode<synchronous>, transform_indices = @transform_4, window_bounds = array<i64: 1, 4>}, {pipeline_mode = #tpu.pipeline_mode<synchronous>, transform_indices = @transform_5, window_bounds = array<i64: 9, 4, 4>}, {pipeline_mode = #tpu.pipeline_mode<synchronous>, transform_indices = @transform_6, window_bounds = array<i64: 1, 4>}, {pipeline_mode = #tpu.pipeline_mode<synchronous>, transform_indices = @transform_7, window_bounds = array<i64: 1, 4>}, {pipeline_mode = #tpu.pipeline_mode<synchronous>, transform_indices = @transform_8, window_bounds = array<i64: 4, 8>}, {pipeline_mode = #tpu.pipeline_mode<synchronous>, transform_indices = @transform_9, window_bounds = array<i64: 1, 8>}, {pipeline_mode = #tpu.pipeline_mode<synchronous>, transform_indices = @transform_10, window_bounds = array<i64: 1, 8>}, {transform_indices = @transform_11, window_bounds = array<i64: 1, 2, 2, 8, 16, 8>}]} {
    %c0 = arith.constant 0 : index
    %c0_0 = arith.constant 0 : index
    %c0_1 = arith.constant 0 : index
    %c0_2 = arith.constant 0 : index
    %0 = vector.load %arg2[%c0, %c0_0, %c0_1, %c0_2] : memref<1x8x24x16xf32, #tpu.memory_space<vmem>>, vector<1x8x24x16xf32>
    %1 = vector.shape_cast %0 : vector<1x8x24x16xf32> to vector<8x24x16xf32>
    %2 = vector.shape_cast %1 : vector<8x24x16xf32> to vector<192x16xf32>
    %c0_3 = arith.constant 0 : index
    %c0_4 = arith.constant 0 : index
    %3 = vector.load %arg4[%c0_3, %c0_4] : memref<16x4xf32, #tpu.memory_space<vmem>>, vector<16x4xf32>
    %cst = arith.constant dense<0.000000e+00> : vector<192x4xf32>
    %4 = tpu.matmul %2, %3, %cst {dimension_numbers = #tpu.dot_dimension_numbers<[1], [0], [0], [1], [0, 0, 1, 1], [], []>} : vector<192x16xf32>, vector<16x4xf32>, vector<192x4xf32> -> vector<192x4xf32>
    %c0_5 = arith.constant 0 : index
    %c0_6 = arith.constant 0 : index
    %5 = vector.load %arg5[%c0_5, %c0_6] : memref<1x4xf32, #tpu.memory_space<vmem>>, vector<1x4xf32>
    %6 = vector.broadcast %5 : vector<1x4xf32> to vector<192x4xf32>
    %7 = arith.mulf %4, %6 : vector<192x4xf32>
    %c0_7 = arith.constant 0 : index
    %c0_8 = arith.constant 0 : index
    %8 = vector.load %arg6[%c0_7, %c0_8] : memref<1x4xf32, #tpu.memory_space<vmem>>, vector<1x4xf32>
    %9 = vector.broadcast %8 : vector<1x4xf32> to vector<192x4xf32>
    %10 = arith.addf %7, %9 : vector<192x4xf32>
    %cst_9 = arith.constant 0.000000e+00 : f32
    %11 = vector.broadcast %cst_9 : f32 to vector<192x4xf32>
    %12 = arith.maximumf %10, %11 : vector<192x4xf32>
    %13 = vector.shape_cast %12 : vector<192x4xf32> to vector<8x24x4xf32>
    %c0_10 = arith.constant 0 : index
    %c0_11 = arith.constant 0 : index
    %c0_12 = arith.constant 0 : index
    %c0_13 = arith.constant 0 : index
    %14 = vector.load %arg3[%c0_10, %c0_11, %c0_12, %c0_13] : memref<1x1x24x16xf32, #tpu.memory_space<vmem>>, vector<1x1x24x16xf32>
    %15 = vector.shape_cast %14 : vector<1x1x24x16xf32> to vector<1x24x16xf32>
    %16 = vector.shape_cast %15 : vector<1x24x16xf32> to vector<24x16xf32>
    %c0_14 = arith.constant 0 : index
    %c0_15 = arith.constant 0 : index
    %17 = vector.load %arg4[%c0_14, %c0_15] : memref<16x4xf32, #tpu.memory_space<vmem>>, vector<16x4xf32>
    %cst_16 = arith.constant dense<0.000000e+00> : vector<24x4xf32>
    %18 = tpu.matmul %16, %17, %cst_16 {dimension_numbers = #tpu.dot_dimension_numbers<[1], [0], [0], [1], [0, 0, 1, 1], [], []>} : vector<24x16xf32>, vector<16x4xf32>, vector<24x4xf32> -> vector<24x4xf32>
    %c0_17 = arith.constant 0 : index
    %c0_18 = arith.constant 0 : index
    %19 = vector.load %arg5[%c0_17, %c0_18] : memref<1x4xf32, #tpu.memory_space<vmem>>, vector<1x4xf32>
    %20 = vector.broadcast %19 : vector<1x4xf32> to vector<24x4xf32>
    %21 = arith.mulf %18, %20 : vector<24x4xf32>
    %c0_19 = arith.constant 0 : index
    %c0_20 = arith.constant 0 : index
    %22 = vector.load %arg6[%c0_19, %c0_20] : memref<1x4xf32, #tpu.memory_space<vmem>>, vector<1x4xf32>
    %23 = vector.broadcast %22 : vector<1x4xf32> to vector<24x4xf32>
    %24 = arith.addf %21, %23 : vector<24x4xf32>
    %cst_21 = arith.constant 0.000000e+00 : f32
    %25 = vector.broadcast %cst_21 : f32 to vector<24x4xf32>
    %26 = arith.maximumf %24, %25 : vector<24x4xf32>
    %27 = vector.shape_cast %26 : vector<24x4xf32> to vector<1x24x4xf32>
    %28 = tpu.iota {dimensions = array<i32: 1>} : vector<1x24x1xi32>
    %c16_i32 = arith.constant 16 : i32
    %29 = vector.broadcast %c16_i32 : i32 to vector<1x24x1xi32>
    %30 = arith.cmpi slt, %28, %29 : vector<1x24x1xi32>
    %cst_22 = arith.constant 0.000000e+00 : f32
    %31 = vector.shape_cast %30 : vector<1x24x1xi1> to vector<1x24x1xi1>
    %32 = vector.broadcast %31 : vector<1x24x1xi1> to vector<8x24x4xi1>
    %33 = vector.broadcast %cst_22 : f32 to vector<8x24x4xf32>
    %34 = arith.select %32, %13, %33 : vector<8x24x4xi1>, vector<8x24x4xf32>
    %c16_i32_23 = arith.constant 16 : i32
    %35 = vector.broadcast %c16_i32_23 : i32 to vector<1x24x1xi32>
    %36 = arith.cmpi slt, %28, %35 : vector<1x24x1xi32>
    %cst_24 = arith.constant 0.000000e+00 : f32
    %37 = vector.shape_cast %36 : vector<1x24x1xi1> to vector<1x24x1xi1>
    %38 = vector.broadcast %37 : vector<1x24x1xi1> to vector<1x24x4xi1>
    %39 = vector.broadcast %cst_24 : f32 to vector<1x24x4xf32>
    %40 = arith.select %38, %27, %39 : vector<1x24x4xi1>, vector<1x24x4xf32>
    %c1_i32 = arith.constant 1 : i32
    %41 = arith.cmpi ne, %arg1, %c1_i32 : i32
    %42 = arith.extui %41 : i1 to i32
    %43 = arith.sitofp %42 : i32 to f32
    %44 = vector.broadcast %43 : f32 to vector<1x24x4xf32>
    %45 = arith.mulf %40, %44 : vector<1x24x4xf32>
    %46 = tpu.concatenate %34, %45 in 0 : vector<8x24x4xf32>, vector<1x24x4xf32> -> vector<9x24x4xf32>
    %47 = vector.extract_strided_slice %46 {offsets = [0, 0, 0], sizes = [8, 16, 4], strides = [1, 1, 1]} : vector<9x24x4xf32> to vector<8x16x4xf32>
    %48 = vector.shape_cast %47 : vector<8x16x4xf32> to vector<128x4xf32>
    %49 = vector.extract_strided_slice %46 {offsets = [0, 1, 0], sizes = [8, 16, 4], strides = [1, 1, 1]} : vector<9x24x4xf32> to vector<8x16x4xf32>
    %50 = vector.shape_cast %49 : vector<8x16x4xf32> to vector<128x4xf32>
    %51 = vector.extract_strided_slice %46 {offsets = [1, 0, 0], sizes = [8, 16, 4], strides = [1, 1, 1]} : vector<9x24x4xf32> to vector<8x16x4xf32>
    %52 = vector.shape_cast %51 : vector<8x16x4xf32> to vector<128x4xf32>
    %53 = vector.extract_strided_slice %46 {offsets = [1, 1, 0], sizes = [8, 16, 4], strides = [1, 1, 1]} : vector<9x24x4xf32> to vector<8x16x4xf32>
    %54 = vector.shape_cast %53 : vector<8x16x4xf32> to vector<128x4xf32>
    %c4 = arith.constant 4 : index
    %c0_25 = arith.constant 0 : index
    %c0_26 = arith.constant 0 : index
    %55 = vector.load %arg7[%c4, %c0_25, %c0_26] : memref<9x4x4xf32, #tpu.memory_space<vmem>>, vector<1x4x4xf32>
    %56 = vector.shape_cast %55 : vector<1x4x4xf32> to vector<4x4xf32>
    %cst_27 = arith.constant dense<0.000000e+00> : vector<128x4xf32>
    %57 = tpu.matmul %48, %56, %cst_27 {dimension_numbers = #tpu.dot_dimension_numbers<[1], [0], [0], [1], [0, 0, 1, 1], [], []>} : vector<128x4xf32>, vector<4x4xf32>, vector<128x4xf32> -> vector<128x4xf32>
    %c5 = arith.constant 5 : index
    %c0_28 = arith.constant 0 : index
    %c0_29 = arith.constant 0 : index
    %58 = vector.load %arg7[%c5, %c0_28, %c0_29] : memref<9x4x4xf32, #tpu.memory_space<vmem>>, vector<1x4x4xf32>
    %59 = vector.shape_cast %58 : vector<1x4x4xf32> to vector<4x4xf32>
    %cst_30 = arith.constant dense<0.000000e+00> : vector<128x4xf32>
    %60 = tpu.matmul %48, %59, %cst_30 {dimension_numbers = #tpu.dot_dimension_numbers<[1], [0], [0], [1], [0, 0, 1, 1], [], []>} : vector<128x4xf32>, vector<4x4xf32>, vector<128x4xf32> -> vector<128x4xf32>
    %c3 = arith.constant 3 : index
    %c0_31 = arith.constant 0 : index
    %c0_32 = arith.constant 0 : index
    %61 = vector.load %arg7[%c3, %c0_31, %c0_32] : memref<9x4x4xf32, #tpu.memory_space<vmem>>, vector<1x4x4xf32>
    %62 = vector.shape_cast %61 : vector<1x4x4xf32> to vector<4x4xf32>
    %cst_33 = arith.constant dense<0.000000e+00> : vector<128x4xf32>
    %63 = tpu.matmul %50, %62, %cst_33 {dimension_numbers = #tpu.dot_dimension_numbers<[1], [0], [0], [1], [0, 0, 1, 1], [], []>} : vector<128x4xf32>, vector<4x4xf32>, vector<128x4xf32> -> vector<128x4xf32>
    %64 = arith.addf %60, %63 : vector<128x4xf32>
    %c7 = arith.constant 7 : index
    %c0_34 = arith.constant 0 : index
    %c0_35 = arith.constant 0 : index
    %65 = vector.load %arg7[%c7, %c0_34, %c0_35] : memref<9x4x4xf32, #tpu.memory_space<vmem>>, vector<1x4x4xf32>
    %66 = vector.shape_cast %65 : vector<1x4x4xf32> to vector<4x4xf32>
    %cst_36 = arith.constant dense<0.000000e+00> : vector<128x4xf32>
    %67 = tpu.matmul %48, %66, %cst_36 {dimension_numbers = #tpu.dot_dimension_numbers<[1], [0], [0], [1], [0, 0, 1, 1], [], []>} : vector<128x4xf32>, vector<4x4xf32>, vector<128x4xf32> -> vector<128x4xf32>
    %c1 = arith.constant 1 : index
    %c0_37 = arith.constant 0 : index
    %c0_38 = arith.constant 0 : index
    %68 = vector.load %arg7[%c1, %c0_37, %c0_38] : memref<9x4x4xf32, #tpu.memory_space<vmem>>, vector<1x4x4xf32>
    %69 = vector.shape_cast %68 : vector<1x4x4xf32> to vector<4x4xf32>
    %cst_39 = arith.constant dense<0.000000e+00> : vector<128x4xf32>
    %70 = tpu.matmul %52, %69, %cst_39 {dimension_numbers = #tpu.dot_dimension_numbers<[1], [0], [0], [1], [0, 0, 1, 1], [], []>} : vector<128x4xf32>, vector<4x4xf32>, vector<128x4xf32> -> vector<128x4xf32>
    %71 = arith.addf %67, %70 : vector<128x4xf32>
    %c8 = arith.constant 8 : index
    %c0_40 = arith.constant 0 : index
    %c0_41 = arith.constant 0 : index
    %72 = vector.load %arg7[%c8, %c0_40, %c0_41] : memref<9x4x4xf32, #tpu.memory_space<vmem>>, vector<1x4x4xf32>
    %73 = vector.shape_cast %72 : vector<1x4x4xf32> to vector<4x4xf32>
    %cst_42 = arith.constant dense<0.000000e+00> : vector<128x4xf32>
    %74 = tpu.matmul %48, %73, %cst_42 {dimension_numbers = #tpu.dot_dimension_numbers<[1], [0], [0], [1], [0, 0, 1, 1], [], []>} : vector<128x4xf32>, vector<4x4xf32>, vector<128x4xf32> -> vector<128x4xf32>
    %c6 = arith.constant 6 : index
    %c0_43 = arith.constant 0 : index
    %c0_44 = arith.constant 0 : index
    %75 = vector.load %arg7[%c6, %c0_43, %c0_44] : memref<9x4x4xf32, #tpu.memory_space<vmem>>, vector<1x4x4xf32>
    %76 = vector.shape_cast %75 : vector<1x4x4xf32> to vector<4x4xf32>
    %cst_45 = arith.constant dense<0.000000e+00> : vector<128x4xf32>
    %77 = tpu.matmul %50, %76, %cst_45 {dimension_numbers = #tpu.dot_dimension_numbers<[1], [0], [0], [1], [0, 0, 1, 1], [], []>} : vector<128x4xf32>, vector<4x4xf32>, vector<128x4xf32> -> vector<128x4xf32>
    %78 = arith.addf %74, %77 : vector<128x4xf32>
    %c2 = arith.constant 2 : index
    %c0_46 = arith.constant 0 : index
    %c0_47 = arith.constant 0 : index
    %79 = vector.load %arg7[%c2, %c0_46, %c0_47] : memref<9x4x4xf32, #tpu.memory_space<vmem>>, vector<1x4x4xf32>
    %80 = vector.shape_cast %79 : vector<1x4x4xf32> to vector<4x4xf32>
    %cst_48 = arith.constant dense<0.000000e+00> : vector<128x4xf32>
    %81 = tpu.matmul %52, %80, %cst_48 {dimension_numbers = #tpu.dot_dimension_numbers<[1], [0], [0], [1], [0, 0, 1, 1], [], []>} : vector<128x4xf32>, vector<4x4xf32>, vector<128x4xf32> -> vector<128x4xf32>
    %82 = arith.addf %78, %81 : vector<128x4xf32>
    %c0_49 = arith.constant 0 : index
    %c0_50 = arith.constant 0 : index
    %c0_51 = arith.constant 0 : index
    %83 = vector.load %arg7[%c0_49, %c0_50, %c0_51] : memref<9x4x4xf32, #tpu.memory_space<vmem>>, vector<1x4x4xf32>
    %84 = vector.shape_cast %83 : vector<1x4x4xf32> to vector<4x4xf32>
    %cst_52 = arith.constant dense<0.000000e+00> : vector<128x4xf32>
    %85 = tpu.matmul %54, %84, %cst_52 {dimension_numbers = #tpu.dot_dimension_numbers<[1], [0], [0], [1], [0, 0, 1, 1], [], []>} : vector<128x4xf32>, vector<4x4xf32>, vector<128x4xf32> -> vector<128x4xf32>
    %86 = arith.addf %82, %85 : vector<128x4xf32>
    %c0_53 = arith.constant 0 : index
    %c0_54 = arith.constant 0 : index
    %87 = vector.load %arg8[%c0_53, %c0_54] : memref<1x4xf32, #tpu.memory_space<vmem>>, vector<1x4xf32>
    %88 = vector.broadcast %87 : vector<1x4xf32> to vector<128x4xf32>
    %89 = arith.mulf %57, %88 : vector<128x4xf32>
    %c0_55 = arith.constant 0 : index
    %c0_56 = arith.constant 0 : index
    %90 = vector.load %arg9[%c0_55, %c0_56] : memref<1x4xf32, #tpu.memory_space<vmem>>, vector<1x4xf32>
    %91 = vector.broadcast %90 : vector<1x4xf32> to vector<128x4xf32>
    %92 = arith.addf %89, %91 : vector<128x4xf32>
    %cst_57 = arith.constant 0.000000e+00 : f32
    %93 = vector.broadcast %cst_57 : f32 to vector<128x4xf32>
    %94 = arith.maximumf %92, %93 : vector<128x4xf32>
    %c0_58 = arith.constant 0 : index
    %c0_59 = arith.constant 0 : index
    %95 = vector.load %arg10[%c0_58, %c0_59] : memref<4x8xf32, #tpu.memory_space<vmem>>, vector<4x8xf32>
    %cst_60 = arith.constant dense<0.000000e+00> : vector<128x8xf32>
    %96 = tpu.matmul %94, %95, %cst_60 {dimension_numbers = #tpu.dot_dimension_numbers<[1], [0], [0], [1], [0, 0, 1, 1], [], []>} : vector<128x4xf32>, vector<4x8xf32>, vector<128x8xf32> -> vector<128x8xf32>
    %c0_61 = arith.constant 0 : index
    %c0_62 = arith.constant 0 : index
    %97 = vector.load %arg11[%c0_61, %c0_62] : memref<1x8xf32, #tpu.memory_space<vmem>>, vector<1x8xf32>
    %98 = vector.broadcast %97 : vector<1x8xf32> to vector<128x8xf32>
    %99 = arith.mulf %96, %98 : vector<128x8xf32>
    %c0_63 = arith.constant 0 : index
    %c0_64 = arith.constant 0 : index
    %100 = vector.load %arg12[%c0_63, %c0_64] : memref<1x8xf32, #tpu.memory_space<vmem>>, vector<1x8xf32>
    %101 = vector.broadcast %100 : vector<1x8xf32> to vector<128x8xf32>
    %102 = arith.addf %99, %101 : vector<128x8xf32>
    %cst_65 = arith.constant 0.000000e+00 : f32
    %103 = vector.broadcast %cst_65 : f32 to vector<128x8xf32>
    %104 = arith.maximumf %102, %103 : vector<128x8xf32>
    %105 = vector.shape_cast %104 : vector<128x8xf32> to vector<8x16x8xf32>
    %c0_66 = arith.constant 0 : index
    %c0_67 = arith.constant 0 : index
    %c0_68 = arith.constant 0 : index
    %c0_69 = arith.constant 0 : index
    %c0_70 = arith.constant 0 : index
    %c0_71 = arith.constant 0 : index
    %106 = vector.load %arg13[%c0_66, %c0_67, %c0_68, %c0_69, %c0_70, %c0_71] : memref<1x2x2x8x16x8xf32, #tpu.memory_space<vmem>>, vector<1x1x1x8x16x8xf32>
    %107 = vector.shape_cast %106 : vector<1x1x1x8x16x8xf32> to vector<8x16x8xf32>
    %108 = vector.shape_cast %105 : vector<8x16x8xf32> to vector<1x1x1x8x16x8xf32>
    tpu.vector_store %arg13[%c0_66, %c0_67, %c0_68, %c0_69, %c0_70, %c0_71], %108 {strides = array<i32>} : memref<1x2x2x8x16x8xf32, #tpu.memory_space<vmem>>, vector<1x1x1x8x16x8xf32>,
    %c0_72 = arith.constant 0 : index
    %c0_73 = arith.constant 0 : index
    %109 = vector.load %arg8[%c0_72, %c0_73] : memref<1x4xf32, #tpu.memory_space<vmem>>, vector<1x4xf32>
    %110 = vector.broadcast %109 : vector<1x4xf32> to vector<128x4xf32>
    %111 = arith.mulf %64, %110 : vector<128x4xf32>
    %c0_74 = arith.constant 0 : index
    %c0_75 = arith.constant 0 : index
    %112 = vector.load %arg9[%c0_74, %c0_75] : memref<1x4xf32, #tpu.memory_space<vmem>>, vector<1x4xf32>
    %113 = vector.broadcast %112 : vector<1x4xf32> to vector<128x4xf32>
    %114 = arith.addf %111, %113 : vector<128x4xf32>
    %cst_76 = arith.constant 0.000000e+00 : f32
    %115 = vector.broadcast %cst_76 : f32 to vector<128x4xf32>
    %116 = arith.maximumf %114, %115 : vector<128x4xf32>
    %c0_77 = arith.constant 0 : index
    %c0_78 = arith.constant 0 : index
    %117 = vector.load %arg10[%c0_77, %c0_78] : memref<4x8xf32, #tpu.memory_space<vmem>>, vector<4x8xf32>
    %cst_79 = arith.constant dense<0.000000e+00> : vector<128x8xf32>
    %118 = tpu.matmul %116, %117, %cst_79 {dimension_numbers = #tpu.dot_dimension_numbers<[1], [0], [0], [1], [0, 0, 1, 1], [], []>} : vector<128x4xf32>, vector<4x8xf32>, vector<128x8xf32> -> vector<128x8xf32>
    %c0_80 = arith.constant 0 : index
    %c0_81 = arith.constant 0 : index
    %119 = vector.load %arg11[%c0_80, %c0_81] : memref<1x8xf32, #tpu.memory_space<vmem>>, vector<1x8xf32>
    %120 = vector.broadcast %119 : vector<1x8xf32> to vector<128x8xf32>
    %121 = arith.mulf %118, %120 : vector<128x8xf32>
    %c0_82 = arith.constant 0 : index
    %c0_83 = arith.constant 0 : index
    %122 = vector.load %arg12[%c0_82, %c0_83] : memref<1x8xf32, #tpu.memory_space<vmem>>, vector<1x8xf32>
    %123 = vector.broadcast %122 : vector<1x8xf32> to vector<128x8xf32>
    %124 = arith.addf %121, %123 : vector<128x8xf32>
    %cst_84 = arith.constant 0.000000e+00 : f32
    %125 = vector.broadcast %cst_84 : f32 to vector<128x8xf32>
    %126 = arith.maximumf %124, %125 : vector<128x8xf32>
    %127 = vector.shape_cast %126 : vector<128x8xf32> to vector<8x16x8xf32>
    %c0_85 = arith.constant 0 : index
    %c0_86 = arith.constant 0 : index
    %c1_87 = arith.constant 1 : index
    %c0_88 = arith.constant 0 : index
    %c0_89 = arith.constant 0 : index
    %c0_90 = arith.constant 0 : index
    %128 = vector.load %arg13[%c0_85, %c0_86, %c1_87, %c0_88, %c0_89, %c0_90] : memref<1x2x2x8x16x8xf32, #tpu.memory_space<vmem>>, vector<1x1x1x8x16x8xf32>
    %129 = vector.shape_cast %128 : vector<1x1x1x8x16x8xf32> to vector<8x16x8xf32>
    %130 = vector.shape_cast %127 : vector<8x16x8xf32> to vector<1x1x1x8x16x8xf32>
    tpu.vector_store %arg13[%c0_85, %c0_86, %c1_87, %c0_88, %c0_89, %c0_90], %130 {strides = array<i32>} : memref<1x2x2x8x16x8xf32, #tpu.memory_space<vmem>>, vector<1x1x1x8x16x8xf32>,
    %c0_91 = arith.constant 0 : index
    %c0_92 = arith.constant 0 : index
    %131 = vector.load %arg8[%c0_91, %c0_92] : memref<1x4xf32, #tpu.memory_space<vmem>>, vector<1x4xf32>
    %132 = vector.broadcast %131 : vector<1x4xf32> to vector<128x4xf32>
    %133 = arith.mulf %71, %132 : vector<128x4xf32>
    %c0_93 = arith.constant 0 : index
    %c0_94 = arith.constant 0 : index
    %134 = vector.load %arg9[%c0_93, %c0_94] : memref<1x4xf32, #tpu.memory_space<vmem>>, vector<1x4xf32>
    %135 = vector.broadcast %134 : vector<1x4xf32> to vector<128x4xf32>
    %136 = arith.addf %133, %135 : vector<128x4xf32>
    %cst_95 = arith.constant 0.000000e+00 : f32
    %137 = vector.broadcast %cst_95 : f32 to vector<128x4xf32>
    %138 = arith.maximumf %136, %137 : vector<128x4xf32>
    %c0_96 = arith.constant 0 : index
    %c0_97 = arith.constant 0 : index
    %139 = vector.load %arg10[%c0_96, %c0_97] : memref<4x8xf32, #tpu.memory_space<vmem>>, vector<4x8xf32>
    %cst_98 = arith.constant dense<0.000000e+00> : vector<128x8xf32>
    %140 = tpu.matmul %138, %139, %cst_98 {dimension_numbers = #tpu.dot_dimension_numbers<[1], [0], [0], [1], [0, 0, 1, 1], [], []>} : vector<128x4xf32>, vector<4x8xf32>, vector<128x8xf32> -> vector<128x8xf32>
    %c0_99 = arith.constant 0 : index
    %c0_100 = arith.constant 0 : index
    %141 = vector.load %arg11[%c0_99, %c0_100] : memref<1x8xf32, #tpu.memory_space<vmem>>, vector<1x8xf32>
    %142 = vector.broadcast %141 : vector<1x8xf32> to vector<128x8xf32>
    %143 = arith.mulf %140, %142 : vector<128x8xf32>
    %c0_101 = arith.constant 0 : index
    %c0_102 = arith.constant 0 : index
    %144 = vector.load %arg12[%c0_101, %c0_102] : memref<1x8xf32, #tpu.memory_space<vmem>>, vector<1x8xf32>
    %145 = vector.broadcast %144 : vector<1x8xf32> to vector<128x8xf32>
    %146 = arith.addf %143, %145 : vector<128x8xf32>
    %cst_103 = arith.constant 0.000000e+00 : f32
    %147 = vector.broadcast %cst_103 : f32 to vector<128x8xf32>
    %148 = arith.maximumf %146, %147 : vector<128x8xf32>
    %149 = vector.shape_cast %148 : vector<128x8xf32> to vector<8x16x8xf32>
    %c0_104 = arith.constant 0 : index
    %c1_105 = arith.constant 1 : index
    %c0_106 = arith.constant 0 : index
    %c0_107 = arith.constant 0 : index
    %c0_108 = arith.constant 0 : index
    %c0_109 = arith.constant 0 : index
    %150 = vector.load %arg13[%c0_104, %c1_105, %c0_106, %c0_107, %c0_108, %c0_109] : memref<1x2x2x8x16x8xf32, #tpu.memory_space<vmem>>, vector<1x1x1x8x16x8xf32>
    %151 = vector.shape_cast %150 : vector<1x1x1x8x16x8xf32> to vector<8x16x8xf32>
    %152 = vector.shape_cast %149 : vector<8x16x8xf32> to vector<1x1x1x8x16x8xf32>
    tpu.vector_store %arg13[%c0_104, %c1_105, %c0_106, %c0_107, %c0_108, %c0_109], %152 {strides = array<i32>} : memref<1x2x2x8x16x8xf32, #tpu.memory_space<vmem>>, vector<1x1x1x8x16x8xf32>,
    %c0_110 = arith.constant 0 : index
    %c0_111 = arith.constant 0 : index
    %153 = vector.load %arg8[%c0_110, %c0_111] : memref<1x4xf32, #tpu.memory_space<vmem>>, vector<1x4xf32>
    %154 = vector.broadcast %153 : vector<1x4xf32> to vector<128x4xf32>
    %155 = arith.mulf %86, %154 : vector<128x4xf32>
    %c0_112 = arith.constant 0 : index
    %c0_113 = arith.constant 0 : index
    %156 = vector.load %arg9[%c0_112, %c0_113] : memref<1x4xf32, #tpu.memory_space<vmem>>, vector<1x4xf32>
    %157 = vector.broadcast %156 : vector<1x4xf32> to vector<128x4xf32>
    %158 = arith.addf %155, %157 : vector<128x4xf32>
    %cst_114 = arith.constant 0.000000e+00 : f32
    %159 = vector.broadcast %cst_114 : f32 to vector<128x4xf32>
    %160 = arith.maximumf %158, %159 : vector<128x4xf32>
    %c0_115 = arith.constant 0 : index
    %c0_116 = arith.constant 0 : index
    %161 = vector.load %arg10[%c0_115, %c0_116] : memref<4x8xf32, #tpu.memory_space<vmem>>, vector<4x8xf32>
    %cst_117 = arith.constant dense<0.000000e+00> : vector<128x8xf32>
    %162 = tpu.matmul %160, %161, %cst_117 {dimension_numbers = #tpu.dot_dimension_numbers<[1], [0], [0], [1], [0, 0, 1, 1], [], []>} : vector<128x4xf32>, vector<4x8xf32>, vector<128x8xf32> -> vector<128x8xf32>
    %c0_118 = arith.constant 0 : index
    %c0_119 = arith.constant 0 : index
    %163 = vector.load %arg11[%c0_118, %c0_119] : memref<1x8xf32, #tpu.memory_space<vmem>>, vector<1x8xf32>
    %164 = vector.broadcast %163 : vector<1x8xf32> to vector<128x8xf32>
    %165 = arith.mulf %162, %164 : vector<128x8xf32>
    %c0_120 = arith.constant 0 : index
    %c0_121 = arith.constant 0 : index
    %166 = vector.load %arg12[%c0_120, %c0_121] : memref<1x8xf32, #tpu.memory_space<vmem>>, vector<1x8xf32>
    %167 = vector.broadcast %166 : vector<1x8xf32> to vector<128x8xf32>
    %168 = arith.addf %165, %167 : vector<128x8xf32>
    %cst_122 = arith.constant 0.000000e+00 : f32
    %169 = vector.broadcast %cst_122 : f32 to vector<128x8xf32>
    %170 = arith.maximumf %168, %169 : vector<128x8xf32>
    %171 = vector.shape_cast %170 : vector<128x8xf32> to vector<8x16x8xf32>
    %c0_123 = arith.constant 0 : index
    %c1_124 = arith.constant 1 : index
    %c1_125 = arith.constant 1 : index
    %c0_126 = arith.constant 0 : index
    %c0_127 = arith.constant 0 : index
    %c0_128 = arith.constant 0 : index
    %172 = vector.load %arg13[%c0_123, %c1_124, %c1_125, %c0_126, %c0_127, %c0_128] : memref<1x2x2x8x16x8xf32, #tpu.memory_space<vmem>>, vector<1x1x1x8x16x8xf32>
    %173 = vector.shape_cast %172 : vector<1x1x1x8x16x8xf32> to vector<8x16x8xf32>
    %174 = vector.shape_cast %171 : vector<8x16x8xf32> to vector<1x1x1x8x16x8xf32>
    tpu.vector_store %arg13[%c0_123, %c1_124, %c1_125, %c0_126, %c0_127, %c0_128], %174 {strides = array<i32>} : memref<1x2x2x8x16x8xf32, #tpu.memory_space<vmem>>, vector<1x1x1x8x16x8xf32>,
    return
  }
  func.func @transform_0(%arg0: i32, %arg1: i32) -> (i32, i32, i32, i32) {
    %c0_i32 = arith.constant 0 : i32
    %c0_i32_0 = arith.constant 0 : i32
    %c0_i32_1 = arith.constant 0 : i32
    return %arg0, %arg1, %c0_i32, %c0_i32_0 : i32, i32, i32, i32
  }
  func.func @transform_1(%arg0: i32, %arg1: i32) -> (i32, i32, i32, i32) {
    %c1_i32 = arith.constant 1 : i32
    %0 = arith.addi %arg1, %c1_i32 : i32
    %c8_i32 = arith.constant 8 : i32
    %1 = arith.muli %0, %c8_i32 : i32
    %c0_i32 = arith.constant 0 : i32
    %c0_i32_0 = arith.constant 0 : i32
    %c0_i32_1 = arith.constant 0 : i32
    return %arg0, %1, %c0_i32, %c0_i32_0 : i32, i32, i32, i32
  }
  func.func @transform_2(%arg0: i32, %arg1: i32) -> (i32, i32) {
    %c0_i32 = arith.constant 0 : i32
    %c0_i32_0 = arith.constant 0 : i32
    %c0_i32_1 = arith.constant 0 : i32
    return %c0_i32, %c0_i32_0 : i32, i32
  }
  func.func @transform_3(%arg0: i32, %arg1: i32) -> (i32, i32) {
    %c0_i32 = arith.constant 0 : i32
    %c0_i32_0 = arith.constant 0 : i32
    %c0_i32_1 = arith.constant 0 : i32
    return %c0_i32, %c0_i32_0 : i32, i32
  }
  func.func @transform_4(%arg0: i32, %arg1: i32) -> (i32, i32) {
    %c0_i32 = arith.constant 0 : i32
    %c0_i32_0 = arith.constant 0 : i32
    %c0_i32_1 = arith.constant 0 : i32
    return %c0_i32, %c0_i32_0 : i32, i32
  }
  func.func @transform_5(%arg0: i32, %arg1: i32) -> (i32, i32, i32) {
    %c0_i32 = arith.constant 0 : i32
    %c0_i32_0 = arith.constant 0 : i32
    %c0_i32_1 = arith.constant 0 : i32
    %c0_i32_2 = arith.constant 0 : i32
    return %c0_i32, %c0_i32_0, %c0_i32_1 : i32, i32, i32
  }
  func.func @transform_6(%arg0: i32, %arg1: i32) -> (i32, i32) {
    %c0_i32 = arith.constant 0 : i32
    %c0_i32_0 = arith.constant 0 : i32
    %c0_i32_1 = arith.constant 0 : i32
    return %c0_i32, %c0_i32_0 : i32, i32
  }
  func.func @transform_7(%arg0: i32, %arg1: i32) -> (i32, i32) {
    %c0_i32 = arith.constant 0 : i32
    %c0_i32_0 = arith.constant 0 : i32
    %c0_i32_1 = arith.constant 0 : i32
    return %c0_i32, %c0_i32_0 : i32, i32
  }
  func.func @transform_8(%arg0: i32, %arg1: i32) -> (i32, i32) {
    %c0_i32 = arith.constant 0 : i32
    %c0_i32_0 = arith.constant 0 : i32
    %c0_i32_1 = arith.constant 0 : i32
    return %c0_i32, %c0_i32_0 : i32, i32
  }
  func.func @transform_9(%arg0: i32, %arg1: i32) -> (i32, i32) {
    %c0_i32 = arith.constant 0 : i32
    %c0_i32_0 = arith.constant 0 : i32
    %c0_i32_1 = arith.constant 0 : i32
    return %c0_i32, %c0_i32_0 : i32, i32
  }
  func.func @transform_10(%arg0: i32, %arg1: i32) -> (i32, i32) {
    %c0_i32 = arith.constant 0 : i32
    %c0_i32_0 = arith.constant 0 : i32
    %c0_i32_1 = arith.constant 0 : i32
    return %c0_i32, %c0_i32_0 : i32, i32
  }
  func.func @transform_11(%arg0: i32, %arg1: i32) -> (i32, i32, i32, i32, i32, i32) {
    %c0_i32 = arith.constant 0 : i32
    %c0_i32_0 = arith.constant 0 : i32
    %c0_i32_1 = arith.constant 0 : i32
    %c0_i32_2 = arith.constant 0 : i32
    %c0_i32_3 = arith.constant 0 : i32
    return %arg0, %c0_i32, %c0_i32_0, %arg1, %c0_i32_1, %c0_i32_2 : i32, i32, i32, i32, i32, i32
  }
}

</mosaic_0001>

<llo_original>
// kernel: decoder_forward.1
$region0: #{decoder_forward.1}
  #allocation0 [shape = 'u32[]', space=smem, size = 0x4, offset = 0x4, fixed_abs, tag = 'smem constant byte address 0x4 - core index']
  #allocation1 [shape = 'u32[144,128]{1,0:T(1,128)}', space=vmem, size = 0x12000, scoped, tag = 'internal scratch']
  %s0 = inlined_call_operand.vmem [shape: f32[2,17,24,16], index: 0, kind: input, shape index: {}, may-alias: {0,1}]
  %s1 = inlined_call_operand.vmem [shape: f32[2,17,24,16], index: 1, kind: input, shape index: {}, may-alias: {0,1}]
  %s2 = inlined_call_operand.vmem [shape: f32[16,4], index: 2, kind: input, shape index: {}]
  %s3 = inlined_call_operand.vmem [shape: f32[1,4], index: 3, kind: input, shape index: {}]
  %s4 = inlined_call_operand.vmem [shape: f32[1,4], index: 4, kind: input, shape index: {}]
  %s5 = inlined_call_operand.vmem [shape: f32[9,4,4], index: 5, kind: input, shape index: {}]
  %s6 = inlined_call_operand.vmem [shape: f32[1,4], index: 6, kind: input, shape index: {}]
  %s7 = inlined_call_operand.vmem [shape: f32[1,4], index: 7, kind: input, shape index: {}]
  %s8 = inlined_call_operand.vmem [shape: f32[4,8], index: 8, kind: input, shape index: {}]
  %s9 = inlined_call_operand.vmem [shape: f32[1,8], index: 9, kind: input, shape index: {}]
  %s10 = inlined_call_operand.vmem [shape: f32[1,8], index: 10, kind: input, shape index: {}]
  %s11 = inlined_call_operand.vmem [shape: f32[2,2,2,16,16,8], index: 11, kind: output, shape index: {}]
  %s12 = sld [smem:[#allocation0]]
  $region111: #{decoder_forward.1} parent=0
    _
  %s14 = ssub.s32 1, %s12
  %s15 = scalar_select 0, %s14, %s12
  $region1: #{decoder_forward.1} parent=0
    #allocation2 [shape = 'u8[524288]{0}', space=vmem, size = 0x80000, scoped, tag = 'output window, operand 0']
    loop: start=0, step=1, limit=6
    $region2: #{decoder_forward.1} parent=1 // loop_pre_header
      _
    $region3: #{decoder_forward.1} parent=1 // loop_header
      %s17 = sphi 0, %s21
      %p18 = scmp.ge.s32.totalorder %s17, 6
      %s24 = sphi 0, %s36
      %s25 = sphi 0, %s32
      %s26 = sphi 0, %s24
      %s27 = sphi 0, %s25
      %s28 = sphi 0, %s26
      %s29 = sphi 0, %s27
      %s41 = sphi 0, %s43
      %s44 = sphi 0, %s41
      %s45 = sphi 0, %s44
      %s61 = sphi 0, %s45
      %s73 = sphi 0, %s75
      %s76 = sphi 0, %s73
      %s77 = sphi 0, %s76
      %s93 = sphi 0, %s77
      %s97 = sphi 0, %s97
      %s99 = sphi 0, %s97
      %s100 = sphi 0, %s99
      %s114 = sphi 0, %s100
      %s118 = sphi 0, %s118
      %s120 = sphi 0, %s118
      %s121 = sphi 0, %s120
      %s135 = sphi 0, %s121
      %s139 = sphi 0, %s139
      %s141 = sphi 0, %s139
      %s142 = sphi 0, %s141
      %s156 = sphi 0, %s142
      %s160 = sphi 0, %s160
      %s162 = sphi 0, %s160
      %s163 = sphi 0, %s162
      %s177 = sphi 0, %s163
      %s181 = sphi 0, %s181
      %s183 = sphi 0, %s181
      %s184 = sphi 0, %s183
      %s198 = sphi 0, %s184
      %s202 = sphi 0, %s202
      %s204 = sphi 0, %s202
      %s205 = sphi 0, %s204
      %s219 = sphi 0, %s205
      %s223 = sphi 0, %s223
      %s225 = sphi 0, %s223
      %s226 = sphi 0, %s225
      %s240 = sphi 0, %s226
      %s244 = sphi 0, %s244
      %s246 = sphi 0, %s244
      %s247 = sphi 0, %s246
      %s261 = sphi 0, %s247
      %s265 = sphi 0, %s265
      %s267 = sphi 0, %s265
      %s268 = sphi 0, %s267
      %s282 = sphi 0, %s268
      %s290 = sphi 0, %s292
      %s293 = sphi 0, %s290
      %s294 = sphi 0, %s293
      %s310 = sphi 0, %s294
    $region4: #{decoder_forward.1} parent=1 // loop_header_branch
      %20 = sbr.rel (%p18) target = $region8
    $region5: #{decoder_forward.1} parent=1 // loop_body
      %s22 = ssub.s32 %s17, 1
      %s23 = ssub.s32 %s17, 2
      %s30 = sadd.s32 1, %s25
      %p31 = scmp.ge.s32.totalorder %s30, 2
      %s32 = scalar_select %p31, 0, %s30
      %s33 = sadd.s32 1, %s24
      %s34 = scalar_select %p31, %s33, %s24
      %p35 = scmp.ge.s32.totalorder %s34, 2
      %s36 = scalar_select %p35, 0, %s34
      %s37 = ssub.s32 %s24, %s36
      %s38 = ssub.s32 %s25, %s32
      %s39 = sor.u32 %s37, %s38
      %p40 = scmp.eq.s32.totalorder %s39, 0
      %s42 = sadd.s32 %s41, 1
      %s43 = scalar_select %p40, %s41, %s42
      %p46 = pneg %p40
      %p47 = scmp.eq.s32.totalorder %s17, 3
      %p48 = por %p46, %p47
      %p49 = scmp.ne.s32.totalorder %s41, %s44
      %p50 = scmp.eq.s32.totalorder %s17, 0
      %p51 = por %p49, %p50
      %p52 = scmp.ne.s32.totalorder %s41, %s44
      %p53 = scmp.eq.s32.totalorder %s22, 3
      %p54 = por %p52, %p53
      %p55 = scmp.ne.s32.totalorder %s44, %s45
      %p56 = scmp.eq.s32.totalorder %s22, 0
      %p57 = por %p55, %p56
      %p58 = scmp.ne.s32.totalorder %s44, %s45
      %p59 = scmp.eq.s32.totalorder %s23, 3
      %p60 = por %p58, %p59
      %p62 = scmp.ne.s32.totalorder %s45, %s61
      %p63 = scmp.eq.s32.totalorder %s23, 0
      %p64 = por %p62, %p63
      %s65 = sadd.s32 %s25, 1
      %s66 = smul.u32 %s65, 8
      %s67 = sadd.s32 %s32, 1
      %s68 = smul.u32 %s67, 8
      %s69 = ssub.s32 %s24, %s36
      %s70 = ssub.s32 %s66, %s68
      %s71 = sor.u32 %s69, %s70
      %p72 = scmp.eq.s32.totalorder %s71, 0
      %s74 = sadd.s32 %s73, 1
      %s75 = scalar_select %p72, %s73, %s74
      %p78 = pneg %p72
      %p79 = scmp.eq.s32.totalorder %s17, 3
      %p80 = por %p78, %p79
      %p81 = scmp.ne.s32.totalorder %s73, %s76
      %p82 = scmp.eq.s32.totalorder %s17, 0
      %p83 = por %p81, %p82
      %p84 = scmp.ne.s32.totalorder %s73, %s76
      %p85 = scmp.eq.s32.totalorder %s22, 3
      %p86 = por %p84, %p85
      %p87 = scmp.ne.s32.totalorder %s76, %s77
      %p88 = scmp.eq.s32.totalorder %s22, 0
      %p89 = por %p87, %p88
      %p90 = scmp.ne.s32.totalorder %s76, %s77
      %p91 = scmp.eq.s32.totalorder %s23, 3
      %p92 = por %p90, %p91
      %p94 = scmp.ne.s32.totalorder %s77, %s93
      %p95 = scmp.eq.s32.totalorder %s23, 0
      %p96 = por %p94, %p95
      %s98 = sadd.s32 %s97, 1
      %p101 = scmp.eq.s32.totalorder %s17, 3
      %p102 = scmp.ne.s32.totalorder %s97, %s99
      %p103 = scmp.eq.s32.totalorder %s17, 0
      %p104 = por %p102, %p103
      %p105 = scmp.ne.s32.totalorder %s97, %s99
      %p106 = scmp.eq.s32.totalorder %s22, 3
      %p107 = por %p105, %p106
      %p108 = scmp.ne.s32.totalorder %s99, %s100
      %p109 = scmp.eq.s32.totalorder %s22, 0
      %p110 = por %p108, %p109
      %p111 = scmp.ne.s32.totalorder %s99, %s100
      %p112 = scmp.eq.s32.totalorder %s23, 3
      %p113 = por %p111, %p112
      %p115 = scmp.ne.s32.totalorder %s100, %s114
      %p116 = scmp.eq.s32.totalorder %s23, 0
      %p117 = por %p115, %p116
      %s119 = sadd.s32 %s118, 1
      %p122 = scmp.eq.s32.totalorder %s17, 3
      %p123 = scmp.ne.s32.totalorder %s118, %s120
      %p124 = scmp.eq.s32.totalorder %s17, 0
      %p125 = por %p123, %p124
      %p126 = scmp.ne.s32.totalorder %s118, %s120
      %p127 = scmp.eq.s32.totalorder %s22, 3
      %p128 = por %p126, %p127
      %p129 = scmp.ne.s32.totalorder %s120, %s121
      %p130 = scmp.eq.s32.totalorder %s22, 0
      %p131 = por %p129, %p130
      %p132 = scmp.ne.s32.totalorder %s120, %s121
      %p133 = scmp.eq.s32.totalorder %s23, 3
      %p134 = por %p132, %p133
      %p136 = scmp.ne.s32.totalorder %s121, %s135
      %p137 = scmp.eq.s32.totalorder %s23, 0
      %p138 = por %p136, %p137
      %s140 = sadd.s32 %s139, 1
      %p143 = scmp.eq.s32.totalorder %s17, 3
      %p144 = scmp.ne.s32.totalorder %s139, %s141
      %p145 = scmp.eq.s32.totalorder %s17, 0
      %p146 = por %p144, %p145
      %p147 = scmp.ne.s32.totalorder %s139, %s141
      %p148 = scmp.eq.s32.totalorder %s22, 3
      %p149 = por %p147, %p148
      %p150 = scmp.ne.s32.totalorder %s141, %s142
      %p151 = scmp.eq.s32.totalorder %s22, 0
      %p152 = por %p150, %p151
      %p153 = scmp.ne.s32.totalorder %s141, %s142
      %p154 = scmp.eq.s32.totalorder %s23, 3
      %p155 = por %p153, %p154
      %p157 = scmp.ne.s32.totalorder %s142, %s156
      %p158 = scmp.eq.s32.totalorder %s23, 0
      %p159 = por %p157, %p158
      %s161 = sadd.s32 %s160, 1
      %p164 = scmp.eq.s32.totalorder %s17, 3
      %p165 = scmp.ne.s32.totalorder %s160, %s162
      %p166 = scmp.eq.s32.totalorder %s17, 0
      %p167 = por %p165, %p166
      %p168 = scmp.ne.s32.totalorder %s160, %s162
      %p169 = scmp.eq.s32.totalorder %s22, 3
      %p170 = por %p168, %p169
      %p171 = scmp.ne.s32.totalorder %s162, %s163
      %p172 = scmp.eq.s32.totalorder %s22, 0
      %p173 = por %p171, %p172
      %p174 = scmp.ne.s32.totalorder %s162, %s163
      %p175 = scmp.eq.s32.totalorder %s23, 3
      %p176 = por %p174, %p175
      %p178 = scmp.ne.s32.totalorder %s163, %s177
      %p179 = scmp.eq.s32.totalorder %s23, 0
      %p180 = por %p178, %p179
      %s182 = sadd.s32 %s181, 1
      %p185 = scmp.eq.s32.totalorder %s17, 3
      %p186 = scmp.ne.s32.totalorder %s181, %s183
      %p187 = scmp.eq.s32.totalorder %s17, 0
      %p188 = por %p186, %p187
      %p189 = scmp.ne.s32.totalorder %s181, %s183
      %p190 = scmp.eq.s32.totalorder %s22, 3
      %p191 = por %p189, %p190
      %p192 = scmp.ne.s32.totalorder %s183, %s184
      %p193 = scmp.eq.s32.totalorder %s22, 0
      %p194 = por %p192, %p193
      %p195 = scmp.ne.s32.totalorder %s183, %s184
      %p196 = scmp.eq.s32.totalorder %s23, 3
      %p197 = por %p195, %p196
      %p199 = scmp.ne.s32.totalorder %s184, %s198
      %p200 = scmp.eq.s32.totalorder %s23, 0
      %p201 = por %p199, %p200
      %s203 = sadd.s32 %s202, 1
      %p206 = scmp.eq.s32.totalorder %s17, 3
      %p207 = scmp.ne.s32.totalorder %s202, %s204
      %p208 = scmp.eq.s32.totalorder %s17, 0
      %p209 = por %p207, %p208
      %p210 = scmp.ne.s32.totalorder %s202, %s204
      %p211 = scmp.eq.s32.totalorder %s22, 3
      %p212 = por %p210, %p211
      %p213 = scmp.ne.s32.totalorder %s204, %s205
      %p214 = scmp.eq.s32.totalorder %s22, 0
      %p215 = por %p213, %p214
      %p216 = scmp.ne.s32.totalorder %s204, %s205
      %p217 = scmp.eq.s32.totalorder %s23, 3
      %p218 = por %p216, %p217
      %p220 = scmp.ne.s32.totalorder %s205, %s219
      %p221 = scmp.eq.s32.totalorder %s23, 0
      %p222 = por %p220, %p221
      %s224 = sadd.s32 %s223, 1
      %p227 = scmp.eq.s32.totalorder %s17, 3
      %p228 = scmp.ne.s32.totalorder %s223, %s225
      %p229 = scmp.eq.s32.totalorder %s17, 0
      %p230 = por %p228, %p229
      %p231 = scmp.ne.s32.totalorder %s223, %s225
      %p232 = scmp.eq.s32.totalorder %s22, 3
      %p233 = por %p231, %p232
      %p234 = scmp.ne.s32.totalorder %s225, %s226
      %p235 = scmp.eq.s32.totalorder %s22, 0
      %p236 = por %p234, %p235
      %p237 = scmp.ne.s32.totalorder %s225, %s226
      %p238 = scmp.eq.s32.totalorder %s23, 3
      %p239 = por %p237, %p238
      %p241 = scmp.ne.s32.totalorder %s226, %s240
      %p242 = scmp.eq.s32.totalorder %s23, 0
      %p243 = por %p241, %p242
      %s245 = sadd.s32 %s244, 1
      %p248 = scmp.eq.s32.totalorder %s17, 3
      %p249 = scmp.ne.s32.totalorder %s244, %s246
      %p250 = scmp.eq.s32.totalorder %s17, 0
      %p251 = por %p249, %p250
      %p252 = scmp.ne.s32.totalorder %s244, %s246
      %p253 = scmp.eq.s32.totalorder %s22, 3
      %p254 = por %p252, %p253
      %p255 = scmp.ne.s32.totalorder %s246, %s247
      %p256 = scmp.eq.s32.totalorder %s22, 0
      %p257 = por %p255, %p256
      %p258 = scmp.ne.s32.totalorder %s246, %s247
      %p259 = scmp.eq.s32.totalorder %s23, 3
      %p260 = por %p258, %p259
      %p262 = scmp.ne.s32.totalorder %s247, %s261
      %p263 = scmp.eq.s32.totalorder %s23, 0
      %p264 = por %p262, %p263
      %s266 = sadd.s32 %s265, 1
      %p269 = scmp.eq.s32.totalorder %s17, 3
      %p270 = scmp.ne.s32.totalorder %s265, %s267
      %p271 = scmp.eq.s32.totalorder %s17, 0
      %p272 = por %p270, %p271
      %p273 = scmp.ne.s32.totalorder %s265, %s267
      %p274 = scmp.eq.s32.totalorder %s22, 3
      %p275 = por %p273, %p274
      %p276 = scmp.ne.s32.totalorder %s267, %s268
      %p277 = scmp.eq.s32.totalorder %s22, 0
      %p278 = por %p276, %p277
      %p279 = scmp.ne.s32.totalorder %s267, %s268
      %p280 = scmp.eq.s32.totalorder %s23, 3
      %p281 = por %p279, %p280
      %p283 = scmp.ne.s32.totalorder %s268, %s282
      %p284 = scmp.eq.s32.totalorder %s23, 0
      %p285 = por %p283, %p284
      %s286 = ssub.s32 %s24, %s36
      %s287 = ssub.s32 %s25, %s32
      %s288 = sor.u32 %s286, %s287
      %p289 = scmp.eq.s32.totalorder %s288, 0
      %s291 = sadd.s32 %s290, 1
      %s292 = scalar_select %p289, %s290, %s291
      %p295 = pneg %p289
      %p296 = scmp.eq.s32.totalorder %s17, 3
      %p297 = por %p295, %p296
      %p298 = scmp.ne.s32.totalorder %s290, %s293
      %p299 = scmp.eq.s32.totalorder %s17, 0
      %p300 = por %p298, %p299
      %p301 = scmp.ne.s32.totalorder %s290, %s293
      %p302 = scmp.eq.s32.totalorder %s22, 3
      %p303 = por %p301, %p302
      %p304 = scmp.ne.s32.totalorder %s293, %s294
      %p305 = scmp.eq.s32.totalorder %s22, 0
      %p306 = por %p304, %p305
      %p307 = scmp.ne.s32.totalorder %s293, %s294
      %p308 = scmp.eq.s32.totalorder %s23, 3
      %p309 = por %p307, %p308
      %p311 = scmp.ne.s32.totalorder %s294, %s310
      %p312 = scmp.eq.s32.totalorder %s23, 0
      %p313 = por %p311, %p312
      %p314 = scmp.le.s32.totalorder 1, %s17
      %p315 = scmp.lt.s32.totalorder %s17, 5
      %p316 = pnand %p314, %p315
      %p317 = pneg %p316
      // Predicated region
      $region9: #{decoder_forward.1} parent=5 // pred_check
        _
      $region10: #{decoder_forward.1} parent=5 // pred_check_branch
        %319 = sbr.rel (%p316) target = $region12
      $region11: #{decoder_forward.1} parent=5 // pred_region
        %s320 = ssub.s32 %s17, 1
        // Predicated region
        $region13: #{decoder_forward.1} parent=11 // pred_check
          %p321 = pneg %p110
        $region14: #{decoder_forward.1} parent=11 // pred_check_branch
          %323 = sbr.rel (%p321) target = $region16
        $region15: #{decoder_forward.1} parent=11 // pred_region
          _
        $region16: #{decoder_forward.1} parent=11 // pred_fallthru
          _
        // Predicated region
        $region17: #{decoder_forward.1} parent=11 // pred_check
          %p324 = pneg %p131
        $region18: #{decoder_forward.1} parent=11 // pred_check_branch
          %326 = sbr.rel (%p324) target = $region20
        $region19: #{decoder_forward.1} parent=11 // pred_region
          _
        $region20: #{decoder_forward.1} parent=11 // pred_fallthru
          _
        // Predicated region
        $region21: #{decoder_forward.1} parent=11 // pred_check
          %p327 = pneg %p152
        $region22: #{decoder_forward.1} parent=11 // pred_check_branch
          %329 = sbr.rel (%p327) target = $region24
        $region23: #{decoder_forward.1} parent=11 // pred_region
          _
        $region24: #{decoder_forward.1} parent=11 // pred_fallthru
          _
        // Predicated region
        $region25: #{decoder_forward.1} parent=11 // pred_check
          %p330 = pneg %p173
        $region26: #{decoder_forward.1} parent=11 // pred_check_branch
          %332 = sbr.rel (%p330) target = $region28
        $region27: #{decoder_forward.1} parent=11 // pred_region
          _
        $region28: #{decoder_forward.1} parent=11 // pred_fallthru
          _
        // Predicated region
        $region29: #{decoder_forward.1} parent=11 // pred_check
          %p333 = pneg %p194
        $region30: #{decoder_forward.1} parent=11 // pred_check_branch
          %335 = sbr.rel (%p333) target = $region32
        $region31: #{decoder_forward.1} parent=11 // pred_region
          _
        $region32: #{decoder_forward.1} parent=11 // pred_fallthru
          _
        // Predicated region
        $region33: #{decoder_forward.1} parent=11 // pred_check
          %p336 = pneg %p215
        $region34: #{decoder_forward.1} parent=11 // pred_check_branch
          %338 = sbr.rel (%p336) target = $region36
        $region35: #{decoder_forward.1} parent=11 // pred_region
          _
        $region36: #{decoder_forward.1} parent=11 // pred_fallthru
          _
        // Predicated region
        $region37: #{decoder_forward.1} parent=11 // pred_check
          %p339 = pneg %p236
        $region38: #{decoder_forward.1} parent=11 // pred_check_branch
          %341 = sbr.rel (%p339) target = $region40
        $region39: #{decoder_forward.1} parent=11 // pred_region
          _
        $region40: #{decoder_forward.1} parent=11 // pred_fallthru
          _
        // Predicated region
        $region41: #{decoder_forward.1} parent=11 // pred_check
          %p342 = pneg %p257
        $region42: #{decoder_forward.1} parent=11 // pred_check_branch
          %344 = sbr.rel (%p342) target = $region44
        $region43: #{decoder_forward.1} parent=11 // pred_region
          _
        $region44: #{decoder_forward.1} parent=11 // pred_fallthru
          _
        // Predicated region
        $region45: #{decoder_forward.1} parent=11 // pred_check
          %p345 = pneg %p278
        $region46: #{decoder_forward.1} parent=11 // pred_check_branch
          %347 = sbr.rel (%p345) target = $region48
        $region47: #{decoder_forward.1} parent=11 // pred_region
          _
        $region48: #{decoder_forward.1} parent=11 // pred_fallthru
          _
      $region12: #{decoder_forward.1} parent=5 // pred_fallthru
        _
      %p348 = scmp.lt.s32.totalorder %s17, 4
      // Predicated region
      $region49: #{decoder_forward.1} parent=5 // pred_check
        %p349 = pneg %p348
      $region50: #{decoder_forward.1} parent=5 // pred_check_branch
        %351 = sbr.rel (%p349) target = $region52
      $region51: #{decoder_forward.1} parent=5 // pred_region
        // Predicated region
        $region53: #{decoder_forward.1} parent=51 // pred_check
          %p352 = pneg %p51
        $region54: #{decoder_forward.1} parent=51 // pred_check_branch
          %354 = sbr.rel (%p352) target = $region56
        $region55: #{decoder_forward.1} parent=51 // pred_region
          %s355 = smul.u32 8, %s25
          %s356 = ssub.s32 17, %s355
          %p357 = scmp.lt.s32.totalorder %s356, 8
          %s358 = scalar_select %p357, %s356, 8
          %s359 = smul.u32 128, %s358
          %s360 = smul.u32 %s359, 3
          %p361 = scmp.lt.s32.totalorder %s24, 1
          %s362 = scalar_select %p361, %s24, 1
          %p363 = scmp.lt.s32.totalorder %s355, 16
          %s364 = scalar_select %p363, %s355, 16
          %s365 = smul.addr %s364, 3
          %s366 = smul.addr %s362, 51
          %s367 = sadd.s32 %s365, %s366
          %s368 = smul.addr %s367, 8
          %s369 = scalar_lea.vmem %s0, %s368
          %s370 = smul.u32 8, %s25
          %s371 = ssub.s32 17, %s370
          %p372 = scmp.lt.s32.totalorder %s371, 8
          %s373 = scalar_select %p372, %s371, 8
          %s374 = smul.u32 128, %s373
          %s375 = smul.u32 %s374, 3
        $region56: #{decoder_forward.1} parent=51 // pred_fallthru
          _
        // Predicated region
        $region57: #{decoder_forward.1} parent=51 // pred_check
          %p376 = pneg %p83
        $region58: #{decoder_forward.1} parent=51 // pred_check_branch
          %378 = sbr.rel (%p376) target = $region60
        $region59: #{decoder_forward.1} parent=51 // pred_region
          %s379 = sadd.s32 %s25, 1
          %s380 = smul.u32 %s379, 8
          %p381 = scmp.lt.s32.totalorder %s24, 1
          %s382 = scalar_select %p381, %s24, 1
          %p383 = scmp.lt.s32.totalorder %s380, 16
          %s384 = scalar_select %p383, %s380, 16
          %s385 = smul.addr %s384, 3
          %s386 = smul.addr %s382, 51
          %s387 = sadd.s32 %s385, %s386
          %s388 = smul.addr %s387, 8
          %s389 = scalar_lea.vmem %s1, %s388
          %s390 = sadd.s32 %s25, 1
          %s391 = smul.u32 %s390, 8
        $region60: #{decoder_forward.1} parent=51 // pred_fallthru
          _
      $region52: #{decoder_forward.1} parent=5 // pred_fallthru
        _
      %p392 = scmp.le.s32.totalorder 1, %s17
      %p393 = scmp.lt.s32.totalorder %s17, 5
      %p394 = pnand %p392, %p393
      %p395 = pneg %p394
      // Predicated region
      $region61: #{decoder_forward.1} parent=5 // pred_check
        _
      $region62: #{decoder_forward.1} parent=5 // pred_check_branch
        %397 = sbr.rel (%p394) target = $region64
      $region63: #{decoder_forward.1} parent=5 // pred_region
        %s398 = ssub.s32 %s17, 1
        %s399 = smul.u32 8, %s27
        %s400 = ssub.s32 17, %s399
        %p401 = scmp.lt.s32.totalorder %s400, 8
        %s402 = scalar_select %p401, %s400, 8
        %s403 = smul.u32 128, %s402
        %s404 = smul.u32 %s403, 3
        %p405 = scmp.lt.s32.totalorder %s26, 1
        %s406 = scalar_select %p405, %s26, 1
        %p407 = scmp.lt.s32.totalorder %s399, 16
        %s408 = scalar_select %p407, %s399, 16
        %s409 = smul.addr %s408, 3
        %s410 = smul.addr %s406, 51
        %s411 = sadd.s32 %s409, %s410
        %s412 = smul.addr %s411, 8
        %s413 = scalar_lea.vmem %s0, %s412
        %p414 = pneg %p57
        %p415 = pneg %p54
        %s416 = sadd.s32 %s27, 1
        %s417 = smul.u32 %s416, 8
        %p418 = scmp.lt.s32.totalorder %s26, 1
        %s419 = scalar_select %p418, %s26, 1
        %p420 = scmp.lt.s32.totalorder %s417, 16
        %s421 = scalar_select %p420, %s417, 16
        %s422 = smul.addr %s421, 3
        %s423 = smul.addr %s419, 51
        %s424 = sadd.s32 %s422, %s423
        %s425 = smul.addr %s424, 8
        %s426 = scalar_lea.vmem %s1, %s425
        %p427 = pneg %p89
        %p428 = pneg %p86
        %p429 = pneg %p110
        %p430 = pneg %p107
        %p431 = pneg %p131
        %p432 = pneg %p128
        %p433 = pneg %p152
        %p434 = pneg %p149
        %p435 = pneg %p173
        %p436 = pneg %p170
        %p437 = pneg %p194
        %p438 = pneg %p191
        %p439 = pneg %p215
        %p440 = pneg %p212
        %p441 = pneg %p236
        %p442 = pneg %p233
        %p443 = pneg %p257
        %p444 = pneg %p254
        %p445 = pneg %p278
        %p446 = pneg %p275
        %p447 = pneg %p306
        %p448 = pneg %p303
        %s449 = sand.u32 %s293, 1
        %s450 = sand.u32 %s293, 1
        %s451 = smul.addr %s450, 512
        %s452 = scalar_lea.vmem [#allocation2], %s451
        %s453 = smul.u32 8, %s27
        %s454 = ssub.s32 17, %s453
        %p455 = scmp.lt.s32.totalorder %s454, 8
        %s456 = scalar_select %p455, %s454, 8
        %s457 = smul.u32 128, %s456
        %s458 = smul.u32 %s457, 3
        %p459 = scmp.lt.s32.totalorder %s26, 1
        %s460 = scalar_select %p459, %s26, 1
        %p461 = scmp.lt.s32.totalorder %s453, 16
        %s462 = scalar_select %p461, %s453, 16
        %s463 = smul.addr %s462, 3
        %s464 = smul.addr %s460, 51
        %s465 = sadd.s32 %s463, %s464
        %s466 = smul.addr %s465, 8
        %s467 = scalar_lea.vmem %s0, %s466
        %s468 = smul.u32 8, %s27
        %s469 = ssub.s32 17, %s468
        %p470 = scmp.lt.s32.totalorder %s469, 8
        %s471 = scalar_select %p470, %s469, 8
        %s472 = smul.u32 128, %s471
        %s473 = smul.u32 %s472, 3
        %s474 = sadd.s32 %s27, 1
        %s475 = smul.u32 %s474, 8
        %p476 = scmp.lt.s32.totalorder %s26, 1
        %s477 = scalar_select %p476, %s26, 1
        %p478 = scmp.lt.s32.totalorder %s475, 16
        %s479 = scalar_select %p478, %s475, 16
        %s480 = smul.addr %s479, 3
        %s481 = smul.addr %s477, 51
        %s482 = sadd.s32 %s480, %s481
        %s483 = smul.addr %s482, 8
        %s484 = scalar_lea.vmem %s1, %s483
        %s485 = sadd.s32 %s27, 1
        %s486 = smul.u32 %s485, 8
        %s487 = smul.u32 8, %s27
        %v488 = vld [vmem:[%s467] sm:$0xff]
        %v489 = vld [vmem:[%s467 + $0x8] sm:$0xff]
        %v490 = vld [vmem:[%s467 + $0x10] sm:$0xff]
        %v491 = vld [vmem:[%s467 + $0x18] sm:$0xff]
        %v492 = vld [vmem:[%s467 + $0x20] sm:$0xff]
        %v493 = vld [vmem:[%s467 + $0x28] sm:$0xff]
        %v494 = vld [vmem:[%s467 + $0x30] sm:$0xff]
        %v495 = vld [vmem:[%s467 + $0x38] sm:$0xff]
        %v496 = vld [vmem:[%s467 + $0x40] sm:$0xff]
        %v497 = vld [vmem:[%s467 + $0x48] sm:$0xff]
        %v498 = vld [vmem:[%s467 + $0x50] sm:$0xff]
        %v499 = vld [vmem:[%s467 + $0x58] sm:$0xff]
        %v500 = vld [vmem:[%s467 + $0x60] sm:$0xff]
        %v501 = vld [vmem:[%s467 + $0x68] sm:$0xff]
        %v502 = vld [vmem:[%s467 + $0x70] sm:$0xff]
        %v503 = vld [vmem:[%s467 + $0x78] sm:$0xff]
        %v504 = vld [vmem:[%s467 + $0x80] sm:$0xff]
        %v505 = vld [vmem:[%s467 + $0x88] sm:$0xff]
        %v506 = vld [vmem:[%s467 + $0x90] sm:$0xff]
        %v507 = vld [vmem:[%s467 + $0x98] sm:$0xff]
        %v508 = vld [vmem:[%s467 + $0xa0] sm:$0xff]
        %v509 = vld [vmem:[%s467 + $0xa8] sm:$0xff]
        %v510 = vld [vmem:[%s467 + $0xb0] sm:$0xff]
        %v511 = vld [vmem:[%s467 + $0xb8] sm:$0xff]
        %v512 = vld [vmem:[%s2] sm:$0xff]
        %v513 = vld [vmem:[%s2 + $0x8] sm:$0xff]
        %vm514 = vcmask 130048
        %v516 = vsel %vm514, %v488, 0
        %v519 = vsel %vm514, %v489, 0
        %v522 = vsel %vm514, %v490, 0
        %v525 = vsel %vm514, %v491, 0
        %v528 = vsel %vm514, %v492, 0
        %v531 = vsel %vm514, %v493, 0
        %v534 = vsel %vm514, %v494, 0
        %v537 = vsel %vm514, %v495, 0
        %v540 = vsel %vm514, %v496, 0
        %v543 = vsel %vm514, %v497, 0
        %v546 = vsel %vm514, %v498, 0
        %v549 = vsel %vm514, %v499, 0
        %v552 = vsel %vm514, %v500, 0
        %v555 = vsel %vm514, %v501, 0
        %v558 = vsel %vm514, %v502, 0
        %v561 = vsel %vm514, %v503, 0
        %v564 = vsel %vm514, %v504, 0
        %v567 = vsel %vm514, %v505, 0
        %v570 = vsel %vm514, %v506, 0
        %v573 = vsel %vm514, %v507, 0
        %v576 = vsel %vm514, %v508, 0
        %v579 = vsel %vm514, %v509, 0
        %v582 = vsel %vm514, %v510, 0
        %v585 = vsel %vm514, %v511, 0
        %587 = vmatprep.subr.mxu0 0.0
        %588 = vmatpush1.msra.mxu0 %v512
        %589 = vmatprep.subr.mxu0 0.0
        %590 = vmatpush1.msra.mxu0 %v513
        %591 = vmatprep.subr.mxu0 0.0
        %592 = vmatpush1.msra.mxu0 0.0
        %593 = vmatprep.subr.mxu0 0.0
        %594 = vmatpush1.msra.mxu0 0.0
        %595 = vmatprep.subr.mxu0 0.0
        %596 = vmatpush1.msra.mxu0 0.0
        %597 = vmatprep.subr.mxu0 0.0
        %598 = vmatpush1.msra.mxu0 0.0
        %599 = vmatprep.subr.mxu0 0.0
        %600 = vmatpush1.msra.mxu0 0.0
        %601 = vmatprep.subr.mxu0 0.0
        %602 = vmatpush1.msra.mxu0 0.0
        %603 = vmatprep.subr.mxu0 0.0
        %604 = vmatpush1.msra.mxu0 0.0
        %605 = vmatprep.subr.mxu0 0.0
        %606 = vmatpush1.msra.mxu0 0.0
        %607 = vmatprep.subr.mxu0 0.0
        %608 = vmatpush1.msra.mxu0 0.0
        %609 = vmatprep.subr.mxu0 0.0
        %610 = vmatpush1.msra.mxu0 0.0
        %611 = vmatprep.subr.mxu0 0.0
        %612 = vmatpush1.msra.mxu0 0.0
        %613 = vmatprep.subr.mxu0 0.0
        %614 = vmatpush1.msra.mxu0 0.0
        %615 = vmatprep.subr.mxu0 0.0
        %616 = vmatpush1.msra.mxu0 0.0
        %617 = vmatprep.subr.mxu0 0.0
        %618 = vmatpush1.msra.mxu0 0.0
        %619 = vmatprep.subr.mxu0 0.0
        %620 = vmatpush1.msra.mxu0 0.0
        %621 = vmatprep.subr.mxu0 0.0
        %622 = vmatpush1.msra.mxu0 0.0
        %623 = vmatprep.subr.mxu0 0.0
        %624 = vmatpush1.msra.mxu0 0.0
        %625 = vmatprep.subr.mxu0 0.0
        %626 = vmatpush1.msra.mxu0 0.0
        %627 = vmatprep.subr.mxu0 0.0
        %628 = vmatpush1.msra.mxu0 0.0
        %629 = vmatprep.subr.mxu0 0.0
        %630 = vmatpush1.msra.mxu0 0.0
        %631 = vmatprep.subr.mxu0 0.0
        %632 = vmatpush1.msra.mxu0 0.0
        %633 = vmatprep.subr.mxu0 0.0
        %634 = vmatpush1.msra.mxu0 0.0
        %635 = vmatprep.subr.mxu0 0.0
        %636 = vmatpush1.msra.mxu0 0.0
        %637 = vmatprep.subr.mxu0 0.0
        %638 = vmatpush1.msra.mxu0 0.0
        %639 = vmatprep.subr.mxu0 0.0
        %640 = vmatpush1.msra.mxu0 0.0
        %641 = vmatprep.subr.mxu0 0.0
        %642 = vmatpush1.msra.mxu0 0.0
        %643 = vmatprep.subr.mxu0 0.0
        %644 = vmatpush1.msra.mxu0 0.0
        %645 = vmatprep.subr.mxu0 0.0
        %646 = vmatpush1.msra.mxu0 0.0
        %647 = vmatprep.subr.mxu0 0.0
        %648 = vmatpush1.msra.mxu0 0.0
        %649 = vmatprep.subr.mxu0 0.0
        %650 = vmatpush1.msra.mxu0 0.0
        %651 = vmatprep.mubr.f32.mxu0 0.0
        %652 = vmatmul.mubr.f32.gmra.mrb[0].mxu0 %v516
        %v653 = vpop.f32.mrb[0].mxu0
        %v654 = vadd.f32 0.0, %v653
        %v655 = vpop.f32.mrb[0].mxu0
        %656 = vmatprep.mubr.f32.mxu0 0.0
        %657 = vmatmul.mubr.f32.gmra.mrb[0].mxu0 %v519
        %v658 = vpop.f32.mrb[0].mxu0
        %v659 = vadd.f32 0.0, %v658
        %v660 = vpop.f32.mrb[0].mxu0
        %661 = vmatprep.mubr.f32.mxu0 0.0
        %662 = vmatmul.mubr.f32.gmra.mrb[0].mxu0 %v522
        %v663 = vpop.f32.mrb[0].mxu0
        %v664 = vadd.f32 0.0, %v663
        %v665 = vpop.f32.mrb[0].mxu0
        %666 = vmatprep.mubr.f32.mxu0 0.0
        %667 = vmatmul.mubr.f32.gmra.mrb[0].mxu0 %v525
        %v668 = vpop.f32.mrb[0].mxu0
        %v669 = vadd.f32 0.0, %v668
        %v670 = vpop.f32.mrb[0].mxu0
        %671 = vmatprep.mubr.f32.mxu0 0.0
        %672 = vmatmul.mubr.f32.gmra.mrb[0].mxu0 %v528
        %v673 = vpop.f32.mrb[0].mxu0
        %v674 = vadd.f32 0.0, %v673
        %v675 = vpop.f32.mrb[0].mxu0
        %676 = vmatprep.mubr.f32.mxu0 0.0
        %677 = vmatmul.mubr.f32.gmra.mrb[0].mxu0 %v531
        %v678 = vpop.f32.mrb[0].mxu0
        %v679 = vadd.f32 0.0, %v678
        %v680 = vpop.f32.mrb[0].mxu0
        %681 = vmatprep.mubr.f32.mxu0 0.0
        %682 = vmatmul.mubr.f32.gmra.mrb[0].mxu0 %v534
        %v683 = vpop.f32.mrb[0].mxu0
        %v684 = vadd.f32 0.0, %v683
        %v685 = vpop.f32.mrb[0].mxu0
        %686 = vmatprep.mubr.f32.mxu0 0.0
        %687 = vmatmul.mubr.f32.gmra.mrb[0].mxu0 %v537
        %v688 = vpop.f32.mrb[0].mxu0
        %v689 = vadd.f32 0.0, %v688
        %v690 = vpop.f32.mrb[0].mxu0
        %691 = vmatprep.mubr.f32.mxu0 0.0
        %692 = vmatmul.mubr.f32.gmra.mrb[0].mxu0 %v540
        %v693 = vpop.f32.mrb[0].mxu0
        %v694 = vadd.f32 0.0, %v693
        %v695 = vpop.f32.mrb[0].mxu0
        %696 = vmatprep.mubr.f32.mxu0 0.0
        %697 = vmatmul.mubr.f32.gmra.mrb[0].mxu0 %v543
        %v698 = vpop.f32.mrb[0].mxu0
        %v699 = vadd.f32 0.0, %v698
        %v700 = vpop.f32.mrb[0].mxu0
        %701 = vmatprep.mubr.f32.mxu0 0.0
        %702 = vmatmul.mubr.f32.gmra.mrb[0].mxu0 %v546
        %v703 = vpop.f32.mrb[0].mxu0
        %v704 = vadd.f32 0.0, %v703
        %v705 = vpop.f32.mrb[0].mxu0
        %706 = vmatprep.mubr.f32.mxu0 0.0
        %707 = vmatmul.mubr.f32.gmra.mrb[0].mxu0 %v549
        %v708 = vpop.f32.mrb[0].mxu0
        %v709 = vadd.f32 0.0, %v708
        %v710 = vpop.f32.mrb[0].mxu0
        %711 = vmatprep.mubr.f32.mxu0 0.0
        %712 = vmatmul.mubr.f32.gmra.mrb[0].mxu0 %v552
        %v713 = vpop.f32.mrb[0].mxu0
        %v714 = vadd.f32 0.0, %v713
        %v715 = vpop.f32.mrb[0].mxu0
        %716 = vmatprep.mubr.f32.mxu0 0.0
        %717 = vmatmul.mubr.f32.gmra.mrb[0].mxu0 %v555
        %v718 = vpop.f32.mrb[0].mxu0
        %v719 = vadd.f32 0.0, %v718
        %v720 = vpop.f32.mrb[0].mxu0
        %721 = vmatprep.mubr.f32.mxu0 0.0
        %722 = vmatmul.mubr.f32.gmra.mrb[0].mxu0 %v558
        %v723 = vpop.f32.mrb[0].mxu0
        %v724 = vadd.f32 0.0, %v723
        %v725 = vpop.f32.mrb[0].mxu0
        %726 = vmatprep.mubr.f32.mxu0 0.0
        %727 = vmatmul.mubr.f32.gmra.mrb[0].mxu0 %v561
        %v728 = vpop.f32.mrb[0].mxu0
        %v729 = vadd.f32 0.0, %v728
        %v730 = vpop.f32.mrb[0].mxu0
        %731 = vmatprep.mubr.f32.mxu0 0.0
        %732 = vmatmul.mubr.f32.gmra.mrb[0].mxu0 %v564
        %v733 = vpop.f32.mrb[0].mxu0
        %v734 = vadd.f32 0.0, %v733
        %v735 = vpop.f32.mrb[0].mxu0
        %736 = vmatprep.mubr.f32.mxu0 0.0
        %737 = vmatmul.mubr.f32.gmra.mrb[0].mxu0 %v567
        %v738 = vpop.f32.mrb[0].mxu0
        %v739 = vadd.f32 0.0, %v738
        %v740 = vpop.f32.mrb[0].mxu0
        %741 = vmatprep.mubr.f32.mxu0 0.0
        %742 = vmatmul.mubr.f32.gmra.mrb[0].mxu0 %v570
        %v743 = vpop.f32.mrb[0].mxu0
        %v744 = vadd.f32 0.0, %v743
        %v745 = vpop.f32.mrb[0].mxu0
        %746 = vmatprep.mubr.f32.mxu0 0.0
        %747 = vmatmul.mubr.f32.gmra.mrb[0].mxu0 %v573
        %v748 = vpop.f32.mrb[0].mxu0
        %v749 = vadd.f32 0.0, %v748
        %v750 = vpop.f32.mrb[0].mxu0
        %751 = vmatprep.mubr.f32.mxu0 0.0
        %752 = vmatmul.mubr.f32.gmra.mrb[0].mxu0 %v576
        %v753 = vpop.f32.mrb[0].mxu0
        %v754 = vadd.f32 0.0, %v753
        %v755 = vpop.f32.mrb[0].mxu0
        %756 = vmatprep.mubr.f32.mxu0 0.0
        %757 = vmatmul.mubr.f32.gmra.mrb[0].mxu0 %v579
        %v758 = vpop.f32.mrb[0].mxu0
        %v759 = vadd.f32 0.0, %v758
        %v760 = vpop.f32.mrb[0].mxu0
        %761 = vmatprep.mubr.f32.mxu0 0.0
        %762 = vmatmul.mubr.f32.gmra.mrb[0].mxu0 %v582
        %v763 = vpop.f32.mrb[0].mxu0
        %v764 = vadd.f32 0.0, %v763
        %v765 = vpop.f32.mrb[0].mxu0
        %766 = vmatprep.mubr.f32.mxu0 0.0
        %767 = vmatmul.mubr.f32.gmra.mrb[0].mxu0 %v585
        %v768 = vpop.f32.mrb[0].mxu0
        %v769 = vadd.f32 0.0, %v768
        %v770 = vpop.f32.mrb[0].mxu0
        %771 = vdwg.mxu0
        %v772 = vld [vmem:[%s3] sm:$0x1]
        %v774 = vlaneseq
        %v775 = vshrl.u32 %v774, 7
        %v776 = vsub.s32 0, %v775
        %v777 = vrot.slane %v772, %v776
        %v779 = vmul.f32 %v654, %v777
        %v780 = vmul.f32 %v659, %v777
        %v781 = vmul.f32 %v664, %v777
        %v782 = vmul.f32 %v669, %v777
        %v783 = vmul.f32 %v674, %v777
        %v784 = vmul.f32 %v679, %v777
        %v785 = vmul.f32 %v684, %v777
        %v786 = vmul.f32 %v689, %v777
        %v787 = vmul.f32 %v694, %v777
        %v788 = vmul.f32 %v699, %v777
        %v789 = vmul.f32 %v704, %v777
        %v790 = vmul.f32 %v709, %v777
        %v791 = vmul.f32 %v714, %v777
        %v792 = vmul.f32 %v719, %v777
        %v793 = vmul.f32 %v724, %v777
        %v794 = vmul.f32 %v729, %v777
        %v795 = vmul.f32 %v734, %v777
        %v796 = vmul.f32 %v739, %v777
        %v797 = vmul.f32 %v744, %v777
        %v798 = vmul.f32 %v749, %v777
        %v799 = vmul.f32 %v754, %v777
        %v800 = vmul.f32 %v759, %v777
        %v801 = vmul.f32 %v764, %v777
        %v802 = vmul.f32 %v769, %v777
        %v803 = vld [vmem:[%s4] sm:$0x1]
        %v805 = vlaneseq
        %v806 = vshrl.u32 %v805, 7
        %v807 = vsub.s32 0, %v806
        %v808 = vrot.slane %v803, %v807
        %v810 = vadd.f32 %v779, %v808
        %v811 = vadd.f32 %v780, %v808
        %v812 = vadd.f32 %v781, %v808
        %v813 = vadd.f32 %v782, %v808
        %v814 = vadd.f32 %v783, %v808
        %v815 = vadd.f32 %v784, %v808
        %v816 = vadd.f32 %v785, %v808
        %v817 = vadd.f32 %v786, %v808
        %v818 = vadd.f32 %v787, %v808
        %v819 = vadd.f32 %v788, %v808
        %v820 = vadd.f32 %v789, %v808
        %v821 = vadd.f32 %v790, %v808
        %v822 = vadd.f32 %v791, %v808
        %v823 = vadd.f32 %v792, %v808
        %v824 = vadd.f32 %v793, %v808
        %v825 = vadd.f32 %v794, %v808
        %v826 = vadd.f32 %v795, %v808
        %v827 = vadd.f32 %v796, %v808
        %v828 = vadd.f32 %v797, %v808
        %v829 = vadd.f32 %v798, %v808
        %v830 = vadd.f32 %v799, %v808
        %v831 = vadd.f32 %v800, %v808
        %v832 = vadd.f32 %v801, %v808
        %v833 = vadd.f32 %v802, %v808
        %v834 = vmax.f32 %v810, 0.0
        %v835 = vmax.f32 %v811, 0.0
        %v836 = vmax.f32 %v812, 0.0
        %v837 = vmax.f32 %v813, 0.0
        %v838 = vmax.f32 %v814, 0.0
        %v839 = vmax.f32 %v815, 0.0
        %v840 = vmax.f32 %v816, 0.0
        %v841 = vmax.f32 %v817, 0.0
        %v842 = vmax.f32 %v818, 0.0
        %v843 = vmax.f32 %v819, 0.0
        %v844 = vmax.f32 %v820, 0.0
        %v845 = vmax.f32 %v821, 0.0
        %v846 = vmax.f32 %v822, 0.0
        %v847 = vmax.f32 %v823, 0.0
        %v848 = vmax.f32 %v824, 0.0
        %v849 = vmax.f32 %v825, 0.0
        %v850 = vmax.f32 %v826, 0.0
        %v851 = vmax.f32 %v827, 0.0
        %v852 = vmax.f32 %v828, 0.0
        %v853 = vmax.f32 %v829, 0.0
        %v854 = vmax.f32 %v830, 0.0
        %v855 = vmax.f32 %v831, 0.0
        %v856 = vmax.f32 %v832, 0.0
        %v857 = vmax.f32 %v833, 0.0
        %v858 = vld [vmem:[%s484] sm:$0xff]
        %v859 = vld [vmem:[%s484 + $0x8] sm:$0xff]
        %v860 = vld [vmem:[%s484 + $0x10] sm:$0xff]
        %v862 = vsel %vm514, %v858, 0
        %v865 = vsel %vm514, %v859, 0
        %v868 = vsel %vm514, %v860, 0
        %870 = vmatprep.subr.mxu0 0.0
        %871 = vmatpush1.msra.mxu0 %v512
        %872 = vmatprep.subr.mxu0 0.0
        %873 = vmatpush1.msra.mxu0 %v513
        %874 = vmatprep.subr.mxu0 0.0
        %875 = vmatpush1.msra.mxu0 0.0
        %876 = vmatprep.subr.mxu0 0.0
        %877 = vmatpush1.msra.mxu0 0.0
        %878 = vmatprep.subr.mxu0 0.0
        %879 = vmatpush1.msra.mxu0 0.0
        %880 = vmatprep.subr.mxu0 0.0
        %881 = vmatpush1.msra.mxu0 0.0
        %882 = vmatprep.subr.mxu0 0.0
        %883 = vmatpush1.msra.mxu0 0.0
        %884 = vmatprep.subr.mxu0 0.0
        %885 = vmatpush1.msra.mxu0 0.0
        %886 = vmatprep.subr.mxu0 0.0
        %887 = vmatpush1.msra.mxu0 0.0
        %888 = vmatprep.subr.mxu0 0.0
        %889 = vmatpush1.msra.mxu0 0.0
        %890 = vmatprep.subr.mxu0 0.0
        %891 = vmatpush1.msra.mxu0 0.0
        %892 = vmatprep.subr.mxu0 0.0
        %893 = vmatpush1.msra.mxu0 0.0
        %894 = vmatprep.subr.mxu0 0.0
        %895 = vmatpush1.msra.mxu0 0.0
        %896 = vmatprep.subr.mxu0 0.0
        %897 = vmatpush1.msra.mxu0 0.0
        %898 = vmatprep.subr.mxu0 0.0
        %899 = vmatpush1.msra.mxu0 0.0
        %900 = vmatprep.subr.mxu0 0.0
        %901 = vmatpush1.msra.mxu0 0.0
        %902 = vmatprep.subr.mxu0 0.0
        %903 = vmatpush1.msra.mxu0 0.0
        %904 = vmatprep.subr.mxu0 0.0
        %905 = vmatpush1.msra.mxu0 0.0
        %906 = vmatprep.subr.mxu0 0.0
        %907 = vmatpush1.msra.mxu0 0.0
        %908 = vmatprep.subr.mxu0 0.0
        %909 = vmatpush1.msra.mxu0 0.0
        %910 = vmatprep.subr.mxu0 0.0
        %911 = vmatpush1.msra.mxu0 0.0
        %912 = vmatprep.subr.mxu0 0.0
        %913 = vmatpush1.msra.mxu0 0.0
        %914 = vmatprep.subr.mxu0 0.0
        %915 = vmatpush1.msra.mxu0 0.0
        %916 = vmatprep.subr.mxu0 0.0
        %917 = vmatpush1.msra.mxu0 0.0
        %918 = vmatprep.subr.mxu0 0.0
        %919 = vmatpush1.msra.mxu0 0.0
        %920 = vmatprep.subr.mxu0 0.0
        %921 = vmatpush1.msra.mxu0 0.0
        %922 = vmatprep.subr.mxu0 0.0
        %923 = vmatpush1.msra.mxu0 0.0
        %924 = vmatprep.subr.mxu0 0.0
        %925 = vmatpush1.msra.mxu0 0.0
        %926 = vmatprep.subr.mxu0 0.0
        %927 = vmatpush1.msra.mxu0 0.0
        %928 = vmatprep.subr.mxu0 0.0
        %929 = vmatpush1.msra.mxu0 0.0
        %930 = vmatprep.subr.mxu0 0.0
        %931 = vmatpush1.msra.mxu0 0.0
        %932 = vmatprep.subr.mxu0 0.0
        %933 = vmatpush1.msra.mxu0 0.0
        %934 = vmatprep.mubr.f32.mxu0 0.0
        %935 = vmatmul.mubr.f32.gmra.mrb[0].mxu0 %v862
        %v936 = vpop.f32.mrb[0].mxu0
        %v937 = vadd.f32 0.0, %v936
        %v938 = vpop.f32.mrb[0].mxu0
        %939 = vmatprep.mubr.f32.mxu0 0.0
        %940 = vmatmul.mubr.f32.gmra.mrb[0].mxu0 %v865
        %v941 = vpop.f32.mrb[0].mxu0
        %v942 = vadd.f32 0.0, %v941
        %v943 = vpop.f32.mrb[0].mxu0
        %944 = vmatprep.mubr.f32.mxu0 0.0
        %945 = vmatmul.mubr.f32.gmra.mrb[0].mxu0 %v868
        %v946 = vpop.f32.mrb[0].mxu0
        %v947 = vadd.f32 0.0, %v946
        %v948 = vpop.f32.mrb[0].mxu0
        %949 = vdwg.mxu0
        %v950 = vmul.f32 %v937, %v777
        %v951 = vmul.f32 %v942, %v777
        %v952 = vmul.f32 %v947, %v777
        %v953 = vadd.f32 %v950, %v808
        %v954 = vadd.f32 %v951, %v808
        %v955 = vadd.f32 %v952, %v808
        %v956 = vmax.f32 %v953, 0.0
        %v957 = vmax.f32 %v954, 0.0
        %v958 = vmax.f32 %v955, 0.0
        %v959 = vlaneseq
        %v960 = vshrl.u32 %v959, 7
        %v961 = vadd.s32 %v960, 8
        %v962 = vadd.s32 %v960, 16
        %vm963 = vcmp.lt.s32.totalorder %v960, 16
        %vm964 = vcmp.lt.s32.totalorder %v961, 16
        %vm965 = vcmp.lt.s32.totalorder %v962, 16
        %v966 = vsel %vm963, 1, 0
        %v967 = vsel %vm964, 1, 0
        %v968 = vsel %vm965, 1, 0
        %vm969 = vcmp.eq.s32.totalorder %v966, 1
        %vm970 = vcmp.eq.s32.totalorder %v967, 1
        %vm971 = vcmp.eq.s32.totalorder %v968, 1
        %v972 = vsel %vm969, %v834, 0.0
        %v973 = vsel %vm970, %v835, 0.0
        %v974 = vsel %vm971, %v836, 0.0
        %v975 = vsel %vm969, %v837, 0.0
        %v976 = vsel %vm970, %v838, 0.0
        %v977 = vsel %vm971, %v839, 0.0
        %v978 = vsel %vm969, %v840, 0.0
        %v979 = vsel %vm970, %v841, 0.0
        %v980 = vsel %vm971, %v842, 0.0
        %v981 = vsel %vm969, %v843, 0.0
        %v982 = vsel %vm970, %v844, 0.0
        %v983 = vsel %vm971, %v845, 0.0
        %v984 = vsel %vm969, %v846, 0.0
        %v985 = vsel %vm970, %v847, 0.0
        %v986 = vsel %vm971, %v848, 0.0
        %v987 = vsel %vm969, %v849, 0.0
        %v988 = vsel %vm970, %v850, 0.0
        %v989 = vsel %vm971, %v851, 0.0
        %v990 = vsel %vm969, %v852, 0.0
        %v991 = vsel %vm970, %v853, 0.0
        %v992 = vsel %vm971, %v854, 0.0
        %v993 = vsel %vm969, %v855, 0.0
        %v994 = vsel %vm970, %v856, 0.0
        %v995 = vsel %vm971, %v857, 0.0
        %v996 = vsel %vm969, %v956, 0.0
        %v997 = vsel %vm970, %v957, 0.0
        %v998 = vsel %vm971, %v958, 0.0
        %p999 = scmp.ne.s32.totalorder %s27, 1
        %s1000 = scalar_select %p999, 1, 0
        %s1001 = scvt.s32.f32 %s1000
        %v1002 = vstv %s1001
        %v1003 = vmul.f32 %v996, %v1002
        %v1004 = vmul.f32 %v997, %v1002
        %v1005 = vmul.f32 %v998, %v1002
        %vm1030 = vcmask 1046528
        %v1031 = vrot.slane %v972, 1
        %v1032 = vrot.slane %v973, 1
        %v1033 = vsel %vm1030, %v1031, %v1032
        %v1034 = vrot.slane %v974, 1
        %v1035 = vsel %vm1030, %v1032, %v1034
        %v1036 = vrot.slane %v975, 1
        %v1037 = vrot.slane %v976, 1
        %v1038 = vsel %vm1030, %v1036, %v1037
        %v1039 = vrot.slane %v977, 1
        %v1040 = vsel %vm1030, %v1037, %v1039
        %v1041 = vrot.slane %v978, 1
        %v1042 = vrot.slane %v979, 1
        %v1043 = vsel %vm1030, %v1041, %v1042
        %v1044 = vrot.slane %v980, 1
        %v1045 = vsel %vm1030, %v1042, %v1044
        %v1046 = vrot.slane %v981, 1
        %v1047 = vrot.slane %v982, 1
        %v1048 = vsel %vm1030, %v1046, %v1047
        %v1049 = vrot.slane %v983, 1
        %v1050 = vsel %vm1030, %v1047, %v1049
        %v1051 = vrot.slane %v984, 1
        %v1052 = vrot.slane %v985, 1
        %v1053 = vsel %vm1030, %v1051, %v1052
        %v1054 = vrot.slane %v986, 1
        %v1055 = vsel %vm1030, %v1052, %v1054
        %v1056 = vrot.slane %v987, 1
        %v1057 = vrot.slane %v988, 1
        %v1058 = vsel %vm1030, %v1056, %v1057
        %v1059 = vrot.slane %v989, 1
        %v1060 = vsel %vm1030, %v1057, %v1059
        %v1061 = vrot.slane %v990, 1
        %v1062 = vrot.slane %v991, 1
        %v1063 = vsel %vm1030, %v1061, %v1062
        %v1064 = vrot.slane %v992, 1
        %v1065 = vsel %vm1030, %v1062, %v1064
        %v1066 = vrot.slane %v993, 1
        %v1067 = vrot.slane %v994, 1
        %v1068 = vsel %vm1030, %v1066, %v1067
        %v1069 = vrot.slane %v995, 1
        %v1070 = vsel %vm1030, %v1067, %v1069
        %v1074 = vrot.slane %v1003, 1
        %v1075 = vrot.slane %v1004, 1
        %v1076 = vsel %vm1030, %v1074, %v1075
        %v1077 = vrot.slane %v1005, 1
        %v1078 = vsel %vm1030, %v1075, %v1077
        %s1079 = scalar_lea.vmem %s5, 16
        %v1080 = vld [vmem:[%s1079] sm:$0xf]
        %vm1081 = vcmask 31744
        %v1082 = vsel %vm1081, %v972, 0
        %v1084 = vsel %vm1081, %v973, 0
        %v1086 = vsel %vm1081, %v975, 0
        %v1088 = vsel %vm1081, %v976, 0
        %v1090 = vsel %vm1081, %v978, 0
        %v1092 = vsel %vm1081, %v979, 0
        %v1094 = vsel %vm1081, %v981, 0
        %v1096 = vsel %vm1081, %v982, 0
        %v1098 = vsel %vm1081, %v984, 0
        %v1100 = vsel %vm1081, %v985, 0
        %v1102 = vsel %vm1081, %v987, 0
        %v1104 = vsel %vm1081, %v988, 0
        %v1106 = vsel %vm1081, %v990, 0
        %v1108 = vsel %vm1081, %v991, 0
        %v1110 = vsel %vm1081, %v993, 0
        %v1112 = vsel %vm1081, %v994, 0
        %vm1114 = vcmask 1043456
        %v1116 = vsel %vm1114, %v1080, 0
        %1118 = vmatprep.subr.mxu0 0.0
        %1119 = vmatpush1.msra.mxu0 %v1116
        %1120 = vmatprep.subr.mxu0 0.0
        %1121 = vmatpush1.msra.mxu0 0.0
        %1122 = vmatprep.subr.mxu0 0.0
        %1123 = vmatpush1.msra.mxu0 0.0
        %1124 = vmatprep.subr.mxu0 0.0
        %1125 = vmatpush1.msra.mxu0 0.0
        %1126 = vmatprep.subr.mxu0 0.0
        %1127 = vmatpush1.msra.mxu0 0.0
        %1128 = vmatprep.subr.mxu0 0.0
        %1129 = vmatpush1.msra.mxu0 0.0
        %1130 = vmatprep.subr.mxu0 0.0
        %1131 = vmatpush1.msra.mxu0 0.0
        %1132 = vmatprep.subr.mxu0 0.0
        %1133 = vmatpush1.msra.mxu0 0.0
        %1134 = vmatprep.subr.mxu0 0.0
        %1135 = vmatpush1.msra.mxu0 0.0
        %1136 = vmatprep.subr.mxu0 0.0
        %1137 = vmatpush1.msra.mxu0 0.0
        %1138 = vmatprep.subr.mxu0 0.0
        %1139 = vmatpush1.msra.mxu0 0.0
        %1140 = vmatprep.subr.mxu0 0.0
        %1141 = vmatpush1.msra.mxu0 0.0
        %1142 = vmatprep.subr.mxu0 0.0
        %1143 = vmatpush1.msra.mxu0 0.0
        %1144 = vmatprep.subr.mxu0 0.0
        %1145 = vmatpush1.msra.mxu0 0.0
        %1146 = vmatprep.subr.mxu0 0.0
        %1147 = vmatpush1.msra.mxu0 0.0
        %1148 = vmatprep.subr.mxu0 0.0
        %1149 = vmatpush1.msra.mxu0 0.0
        %1150 = vmatprep.subr.mxu0 0.0
        %1151 = vmatpush1.msra.mxu0 0.0
        %1152 = vmatprep.subr.mxu0 0.0
        %1153 = vmatpush1.msra.mxu0 0.0
        %1154 = vmatprep.subr.mxu0 0.0
        %1155 = vmatpush1.msra.mxu0 0.0
        %1156 = vmatprep.subr.mxu0 0.0
        %1157 = vmatpush1.msra.mxu0 0.0
        %1158 = vmatprep.subr.mxu0 0.0
        %1159 = vmatpush1.msra.mxu0 0.0
        %1160 = vmatprep.subr.mxu0 0.0
        %1161 = vmatpush1.msra.mxu0 0.0
        %1162 = vmatprep.subr.mxu0 0.0
        %1163 = vmatpush1.msra.mxu0 0.0
        %1164 = vmatprep.subr.mxu0 0.0
        %1165 = vmatpush1.msra.mxu0 0.0
        %1166 = vmatprep.subr.mxu0 0.0
        %1167 = vmatpush1.msra.mxu0 0.0
        %1168 = vmatprep.subr.mxu0 0.0
        %1169 = vmatpush1.msra.mxu0 0.0
        %1170 = vmatprep.subr.mxu0 0.0
        %1171 = vmatpush1.msra.mxu0 0.0
        %1172 = vmatprep.subr.mxu0 0.0
        %1173 = vmatpush1.msra.mxu0 0.0
        %1174 = vmatprep.subr.mxu0 0.0
        %1175 = vmatpush1.msra.mxu0 0.0
        %1176 = vmatprep.subr.mxu0 0.0
        %1177 = vmatpush1.msra.mxu0 0.0
        %1178 = vmatprep.subr.mxu0 0.0
        %1179 = vmatpush1.msra.mxu0 0.0
        %1180 = vmatprep.subr.mxu0 0.0
        %1181 = vmatpush1.msra.mxu0 0.0
        %1182 = vmatprep.mubr.f32.mxu0 0.0
        %1183 = vmatmul.mubr.f32.gmra.mrb[0].mxu0 %v1082
        %v1184 = vpop.f32.mrb[0].mxu0
        %v1185 = vadd.f32 0.0, %v1184
        %v1186 = vpop.f32.mrb[0].mxu0
        %1187 = vmatprep.mubr.f32.mxu0 0.0
        %1188 = vmatmul.mubr.f32.gmra.mrb[0].mxu0 %v1084
        %v1189 = vpop.f32.mrb[0].mxu0
        %v1190 = vadd.f32 0.0, %v1189
        %v1191 = vpop.f32.mrb[0].mxu0
        %1192 = vmatprep.mubr.f32.mxu0 0.0
        %1193 = vmatmul.mubr.f32.gmra.mrb[0].mxu0 %v1086
        %v1194 = vpop.f32.mrb[0].mxu0
        %v1195 = vadd.f32 0.0, %v1194
        %v1196 = vpop.f32.mrb[0].mxu0
        %1197 = vmatprep.mubr.f32.mxu0 0.0
        %1198 = vmatmul.mubr.f32.gmra.mrb[0].mxu0 %v1088
        %v1199 = vpop.f32.mrb[0].mxu0
        %v1200 = vadd.f32 0.0, %v1199
        %v1201 = vpop.f32.mrb[0].mxu0
        %1202 = vmatprep.mubr.f32.mxu0 0.0
        %1203 = vmatmul.mubr.f32.gmra.mrb[0].mxu0 %v1090
        %v1204 = vpop.f32.mrb[0].mxu0
        %v1205 = vadd.f32 0.0, %v1204
        %v1206 = vpop.f32.mrb[0].mxu0
        %1207 = vmatprep.mubr.f32.mxu0 0.0
        %1208 = vmatmul.mubr.f32.gmra.mrb[0].mxu0 %v1092
        %v1209 = vpop.f32.mrb[0].mxu0
        %v1210 = vadd.f32 0.0, %v1209
        %v1211 = vpop.f32.mrb[0].mxu0
        %1212 = vmatprep.mubr.f32.mxu0 0.0
        %1213 = vmatmul.mubr.f32.gmra.mrb[0].mxu0 %v1094
        %v1214 = vpop.f32.mrb[0].mxu0
        %v1215 = vadd.f32 0.0, %v1214
        %v1216 = vpop.f32.mrb[0].mxu0
        %1217 = vmatprep.mubr.f32.mxu0 0.0
        %1218 = vmatmul.mubr.f32.gmra.mrb[0].mxu0 %v1096
        %v1219 = vpop.f32.mrb[0].mxu0
        %v1220 = vadd.f32 0.0, %v1219
        %v1221 = vpop.f32.mrb[0].mxu0
        %1222 = vmatprep.mubr.f32.mxu0 0.0
        %1223 = vmatmul.mubr.f32.gmra.mrb[0].mxu0 %v1098
        %v1224 = vpop.f32.mrb[0].mxu0
        %v1225 = vadd.f32 0.0, %v1224
        %v1226 = vpop.f32.mrb[0].mxu0
        %1227 = vmatprep.mubr.f32.mxu0 0.0
        %1228 = vmatmul.mubr.f32.gmra.mrb[0].mxu0 %v1100
        %v1229 = vpop.f32.mrb[0].mxu0
        %v1230 = vadd.f32 0.0, %v1229
        %v1231 = vpop.f32.mrb[0].mxu0
        %1232 = vmatprep.mubr.f32.mxu0 0.0
        %1233 = vmatmul.mubr.f32.gmra.mrb[0].mxu0 %v1102
        %v1234 = vpop.f32.mrb[0].mxu0
        %v1235 = vadd.f32 0.0, %v1234
        %v1236 = vpop.f32.mrb[0].mxu0
        %1237 = vmatprep.mubr.f32.mxu0 0.0
        %1238 = vmatmul.mubr.f32.gmra.mrb[0].mxu0 %v1104
        %v1239 = vpop.f32.mrb[0].mxu0
        %v1240 = vadd.f32 0.0, %v1239
        %v1241 = vpop.f32.mrb[0].mxu0
        %1242 = vmatprep.mubr.f32.mxu0 0.0
        %1243 = vmatmul.mubr.f32.gmra.mrb[0].mxu0 %v1106
        %v1244 = vpop.f32.mrb[0].mxu0
        %v1245 = vadd.f32 0.0, %v1244
        %v1246 = vpop.f32.mrb[0].mxu0
        %1247 = vmatprep.mubr.f32.mxu0 0.0
        %1248 = vmatmul.mubr.f32.gmra.mrb[0].mxu0 %v1108
        %v1249 = vpop.f32.mrb[0].mxu0
        %v1250 = vadd.f32 0.0, %v1249
        %v1251 = vpop.f32.mrb[0].mxu0
        %1252 = vmatprep.mubr.f32.mxu0 0.0
        %1253 = vmatmul.mubr.f32.gmra.mrb[0].mxu0 %v1110
        %v1254 = vpop.f32.mrb[0].mxu0
        %v1255 = vadd.f32 0.0, %v1254
        %v1256 = vpop.f32.mrb[0].mxu0
        %1257 = vmatprep.mubr.f32.mxu0 0.0
        %1258 = vmatmul.mubr.f32.gmra.mrb[0].mxu0 %v1112
        %v1259 = vpop.f32.mrb[0].mxu0
        %v1260 = vadd.f32 0.0, %v1259
        %v1261 = vpop.f32.mrb[0].mxu0
        %1262 = vdwg.mxu0
        %s1263 = scalar_lea.vmem %s5, 20
        %v1264 = vld [vmem:[%s1263] sm:$0xf]
        %s1265 = scalar_lea.vmem %s5, 12
        %v1266 = vld [vmem:[%s1265] sm:$0xf]
        %v1267 = vsel %vm1081, %v1033, 0
        %v1269 = vsel %vm1081, %v1035, 0
        %v1271 = vsel %vm1081, %v1038, 0
        %v1273 = vsel %vm1081, %v1040, 0
        %v1275 = vsel %vm1081, %v1043, 0
        %v1277 = vsel %vm1081, %v1045, 0
        %v1279 = vsel %vm1081, %v1048, 0
        %v1281 = vsel %vm1081, %v1050, 0
        %v1283 = vsel %vm1081, %v1053, 0
        %v1285 = vsel %vm1081, %v1055, 0
        %v1287 = vsel %vm1081, %v1058, 0
        %v1289 = vsel %vm1081, %v1060, 0
        %v1291 = vsel %vm1081, %v1063, 0
        %v1293 = vsel %vm1081, %v1065, 0
        %v1295 = vsel %vm1081, %v1068, 0
        %v1297 = vsel %vm1081, %v1070, 0
        %v1300 = vsel %vm1114, %v1266, 0
        %1302 = vmatprep.subr.mxu0 0.0
        %1303 = vmatpush1.msra.mxu0 %v1300
        %1304 = vmatprep.subr.mxu0 0.0
        %1305 = vmatpush1.msra.mxu0 0.0
        %1306 = vmatprep.subr.mxu0 0.0
        %1307 = vmatpush1.msra.mxu0 0.0
        %1308 = vmatprep.subr.mxu0 0.0
        %1309 = vmatpush1.msra.mxu0 0.0
        %1310 = vmatprep.subr.mxu0 0.0
        %1311 = vmatpush1.msra.mxu0 0.0
        %1312 = vmatprep.subr.mxu0 0.0
        %1313 = vmatpush1.msra.mxu0 0.0
        %1314 = vmatprep.subr.mxu0 0.0
        %1315 = vmatpush1.msra.mxu0 0.0
        %1316 = vmatprep.subr.mxu0 0.0
        %1317 = vmatpush1.msra.mxu0 0.0
        %1318 = vmatprep.subr.mxu0 0.0
        %1319 = vmatpush1.msra.mxu0 0.0
        %1320 = vmatprep.subr.mxu0 0.0
        %1321 = vmatpush1.msra.mxu0 0.0
        %1322 = vmatprep.subr.mxu0 0.0
        %1323 = vmatpush1.msra.mxu0 0.0
        %1324 = vmatprep.subr.mxu0 0.0
        %1325 = vmatpush1.msra.mxu0 0.0
        %1326 = vmatprep.subr.mxu0 0.0
        %1327 = vmatpush1.msra.mxu0 0.0
        %1328 = vmatprep.subr.mxu0 0.0
        %1329 = vmatpush1.msra.mxu0 0.0
        %1330 = vmatprep.subr.mxu0 0.0
        %1331 = vmatpush1.msra.mxu0 0.0
        %1332 = vmatprep.subr.mxu0 0.0
        %1333 = vmatpush1.msra.mxu0 0.0
        %1334 = vmatprep.subr.mxu0 0.0
        %1335 = vmatpush1.msra.mxu0 0.0
        %1336 = vmatprep.subr.mxu0 0.0
        %1337 = vmatpush1.msra.mxu0 0.0
        %1338 = vmatprep.subr.mxu0 0.0
        %1339 = vmatpush1.msra.mxu0 0.0
        %1340 = vmatprep.subr.mxu0 0.0
        %1341 = vmatpush1.msra.mxu0 0.0
        %1342 = vmatprep.subr.mxu0 0.0
        %1343 = vmatpush1.msra.mxu0 0.0
        %1344 = vmatprep.subr.mxu0 0.0
        %1345 = vmatpush1.msra.mxu0 0.0
        %1346 = vmatprep.subr.mxu0 0.0
        %1347 = vmatpush1.msra.mxu0 0.0
        %1348 = vmatprep.subr.mxu0 0.0
        %1349 = vmatpush1.msra.mxu0 0.0
        %1350 = vmatprep.subr.mxu0 0.0
        %1351 = vmatpush1.msra.mxu0 0.0
        %1352 = vmatprep.subr.mxu0 0.0
        %1353 = vmatpush1.msra.mxu0 0.0
        %1354 = vmatprep.subr.mxu0 0.0
        %1355 = vmatpush1.msra.mxu0 0.0
        %1356 = vmatprep.subr.mxu0 0.0
        %1357 = vmatpush1.msra.mxu0 0.0
        %1358 = vmatprep.subr.mxu0 0.0
        %1359 = vmatpush1.msra.mxu0 0.0
        %1360 = vmatprep.subr.mxu0 0.0
        %1361 = vmatpush1.msra.mxu0 0.0
        %1362 = vmatprep.subr.mxu0 0.0
        %1363 = vmatpush1.msra.mxu0 0.0
        %1364 = vmatprep.subr.mxu0 0.0
        %1365 = vmatpush1.msra.mxu0 0.0
        %1366 = vmatprep.mubr.f32.mxu0 0.0
        %1367 = vmatmul.mubr.f32.gmra.mrb[0].mxu0 %v1267
        %v1368 = vpop.f32.mrb[0].mxu0
        %v1369 = vadd.f32 0.0, %v1368
        %v1370 = vpop.f32.mrb[0].mxu0
        %1371 = vmatprep.mubr.f32.mxu0 0.0
        %1372 = vmatmul.mubr.f32.gmra.mrb[0].mxu0 %v1269
        %v1373 = vpop.f32.mrb[0].mxu0
        %v1374 = vadd.f32 0.0, %v1373
        %v1375 = vpop.f32.mrb[0].mxu0
        %1376 = vmatprep.mubr.f32.mxu0 0.0
        %1377 = vmatmul.mubr.f32.gmra.mrb[0].mxu0 %v1271
        %v1378 = vpop.f32.mrb[0].mxu0
        %v1379 = vadd.f32 0.0, %v1378
        %v1380 = vpop.f32.mrb[0].mxu0
        %1381 = vmatprep.mubr.f32.mxu0 0.0
        %1382 = vmatmul.mubr.f32.gmra.mrb[0].mxu0 %v1273
        %v1383 = vpop.f32.mrb[0].mxu0
        %v1384 = vadd.f32 0.0, %v1383
        %v1385 = vpop.f32.mrb[0].mxu0
        %1386 = vmatprep.mubr.f32.mxu0 0.0
        %1387 = vmatmul.mubr.f32.gmra.mrb[0].mxu0 %v1275
        %v1388 = vpop.f32.mrb[0].mxu0
        %v1389 = vadd.f32 0.0, %v1388
        %v1390 = vpop.f32.mrb[0].mxu0
        %1391 = vmatprep.mubr.f32.mxu0 0.0
        %1392 = vmatmul.mubr.f32.gmra.mrb[0].mxu0 %v1277
        %v1393 = vpop.f32.mrb[0].mxu0
        %v1394 = vadd.f32 0.0, %v1393
        %v1395 = vpop.f32.mrb[0].mxu0
        %1396 = vmatprep.mubr.f32.mxu0 0.0
        %1397 = vmatmul.mubr.f32.gmra.mrb[0].mxu0 %v1279
        %v1398 = vpop.f32.mrb[0].mxu0
        %v1399 = vadd.f32 0.0, %v1398
        %v1400 = vpop.f32.mrb[0].mxu0
        %1401 = vmatprep.mubr.f32.mxu0 0.0
        %1402 = vmatmul.mubr.f32.gmra.mrb[0].mxu0 %v1281
        %v1403 = vpop.f32.mrb[0].mxu0
        %v1404 = vadd.f32 0.0, %v1403
        %v1405 = vpop.f32.mrb[0].mxu0
        %1406 = vmatprep.mubr.f32.mxu0 0.0
        %1407 = vmatmul.mubr.f32.gmra.mrb[0].mxu0 %v1283
        %v1408 = vpop.f32.mrb[0].mxu0
        %v1409 = vadd.f32 0.0, %v1408
        %v1410 = vpop.f32.mrb[0].mxu0
        %1411 = vmatprep.mubr.f32.mxu0 0.0
        %1412 = vmatmul.mubr.f32.gmra.mrb[0].mxu0 %v1285
        %v1413 = vpop.f32.mrb[0].mxu0
        %v1414 = vadd.f32 0.0, %v1413
        %v1415 = vpop.f32.mrb[0].mxu0
        %1416 = vmatprep.mubr.f32.mxu0 0.0
        %1417 = vmatmul.mubr.f32.gmra.mrb[0].mxu0 %v1287
        %v1418 = vpop.f32.mrb[0].mxu0
        %v1419 = vadd.f32 0.0, %v1418
        %v1420 = vpop.f32.mrb[0].mxu0
        %1421 = vmatprep.mubr.f32.mxu0 0.0
        %1422 = vmatmul.mubr.f32.gmra.mrb[0].mxu0 %v1289
        %v1423 = vpop.f32.mrb[0].mxu0
        %v1424 = vadd.f32 0.0, %v1423
        %v1425 = vpop.f32.mrb[0].mxu0
        %1426 = vmatprep.mubr.f32.mxu0 0.0
        %1427 = vmatmul.mubr.f32.gmra.mrb[0].mxu0 %v1291
        %v1428 = vpop.f32.mrb[0].mxu0
        %v1429 = vadd.f32 0.0, %v1428
        %v1430 = vpop.f32.mrb[0].mxu0
        %1431 = vmatprep.mubr.f32.mxu0 0.0
        %1432 = vmatmul.mubr.f32.gmra.mrb[0].mxu0 %v1293
        %v1433 = vpop.f32.mrb[0].mxu0
        %v1434 = vadd.f32 0.0, %v1433
        %v1435 = vpop.f32.mrb[0].mxu0
        %1436 = vmatprep.mubr.f32.mxu0 0.0
        %1437 = vmatmul.mubr.f32.gmra.mrb[0].mxu0 %v1295
        %v1438 = vpop.f32.mrb[0].mxu0
        %v1439 = vadd.f32 0.0, %v1438
        %v1440 = vpop.f32.mrb[0].mxu0
        %1441 = vmatprep.mubr.f32.mxu0 0.0
        %1442 = vmatmul.mubr.f32.gmra.mrb[0].mxu0 %v1297
        %v1443 = vpop.f32.mrb[0].mxu0
        %v1444 = vadd.f32 0.0, %v1443
        %v1445 = vpop.f32.mrb[0].mxu0
        %1446 = vdwg.mxu0
        %v1448 = vsel %vm1114, %v1264, 0
        %1450 = vmatprep.subr.mxu0 0.0
        %1451 = vmatpush1.msra.mxu0 %v1448
        %1452 = vmatprep.subr.mxu0 0.0
        %1453 = vmatpush1.msra.mxu0 0.0
        %1454 = vmatprep.subr.mxu0 0.0
        %1455 = vmatpush1.msra.mxu0 0.0
        %1456 = vmatprep.subr.mxu0 0.0
        %1457 = vmatpush1.msra.mxu0 0.0
        %1458 = vmatprep.subr.mxu0 0.0
        %1459 = vmatpush1.msra.mxu0 0.0
        %1460 = vmatprep.subr.mxu0 0.0
        %1461 = vmatpush1.msra.mxu0 0.0
        %1462 = vmatprep.subr.mxu0 0.0
        %1463 = vmatpush1.msra.mxu0 0.0
        %1464 = vmatprep.subr.mxu0 0.0
        %1465 = vmatpush1.msra.mxu0 0.0
        %1466 = vmatprep.subr.mxu0 0.0
        %1467 = vmatpush1.msra.mxu0 0.0
        %1468 = vmatprep.subr.mxu0 0.0
        %1469 = vmatpush1.msra.mxu0 0.0
        %1470 = vmatprep.subr.mxu0 0.0
        %1471 = vmatpush1.msra.mxu0 0.0
        %1472 = vmatprep.subr.mxu0 0.0
        %1473 = vmatpush1.msra.mxu0 0.0
        %1474 = vmatprep.subr.mxu0 0.0
        %1475 = vmatpush1.msra.mxu0 0.0
        %1476 = vmatprep.subr.mxu0 0.0
        %1477 = vmatpush1.msra.mxu0 0.0
        %1478 = vmatprep.subr.mxu0 0.0
        %1479 = vmatpush1.msra.mxu0 0.0
        %1480 = vmatprep.subr.mxu0 0.0
        %1481 = vmatpush1.msra.mxu0 0.0
        %1482 = vmatprep.subr.mxu0 0.0
        %1483 = vmatpush1.msra.mxu0 0.0
        %1484 = vmatprep.subr.mxu0 0.0
        %1485 = vmatpush1.msra.mxu0 0.0
        %1486 = vmatprep.subr.mxu0 0.0
        %1487 = vmatpush1.msra.mxu0 0.0
        %1488 = vmatprep.subr.mxu0 0.0
        %1489 = vmatpush1.msra.mxu0 0.0
        %1490 = vmatprep.subr.mxu0 0.0
        %1491 = vmatpush1.msra.mxu0 0.0
        %1492 = vmatprep.subr.mxu0 0.0
        %1493 = vmatpush1.msra.mxu0 0.0
        %1494 = vmatprep.subr.mxu0 0.0
        %1495 = vmatpush1.msra.mxu0 0.0
        %1496 = vmatprep.subr.mxu0 0.0
        %1497 = vmatpush1.msra.mxu0 0.0
        %1498 = vmatprep.subr.mxu0 0.0
        %1499 = vmatpush1.msra.mxu0 0.0
        %1500 = vmatprep.subr.mxu0 0.0
        %1501 = vmatpush1.msra.mxu0 0.0
        %1502 = vmatprep.subr.mxu0 0.0
        %1503 = vmatpush1.msra.mxu0 0.0
        %1504 = vmatprep.subr.mxu0 0.0
        %1505 = vmatpush1.msra.mxu0 0.0
        %1506 = vmatprep.subr.mxu0 0.0
        %1507 = vmatpush1.msra.mxu0 0.0
        %1508 = vmatprep.subr.mxu0 0.0
        %1509 = vmatpush1.msra.mxu0 0.0
        %1510 = vmatprep.subr.mxu0 0.0
        %1511 = vmatpush1.msra.mxu0 0.0
        %1512 = vmatprep.subr.mxu0 0.0
        %1513 = vmatpush1.msra.mxu0 0.0
        %1514 = vmatprep.mubr.f32.mxu0 0.0
        %1515 = vmatmul.mubr.f32.gmra.mrb[0].mxu0 %v1082
        %v1516 = vpop.f32.mrb[0].mxu0
        %v1517 = vadd.f32 %v1369, %v1516
        %v1518 = vpop.f32.mrb[0].mxu0
        %1519 = vmatprep.mubr.f32.mxu0 0.0
        %1520 = vmatmul.mubr.f32.gmra.mrb[0].mxu0 %v1084
        %v1521 = vpop.f32.mrb[0].mxu0
        %v1522 = vadd.f32 %v1374, %v1521
        %v1523 = vpop.f32.mrb[0].mxu0
        %1524 = vmatprep.mubr.f32.mxu0 0.0
        %1525 = vmatmul.mubr.f32.gmra.mrb[0].mxu0 %v1086
        %v1526 = vpop.f32.mrb[0].mxu0
        %v1527 = vadd.f32 %v1379, %v1526
        %v1528 = vpop.f32.mrb[0].mxu0
        %1529 = vmatprep.mubr.f32.mxu0 0.0
        %1530 = vmatmul.mubr.f32.gmra.mrb[0].mxu0 %v1088
        %v1531 = vpop.f32.mrb[0].mxu0
        %v1532 = vadd.f32 %v1384, %v1531
        %v1533 = vpop.f32.mrb[0].mxu0
        %1534 = vmatprep.mubr.f32.mxu0 0.0
        %1535 = vmatmul.mubr.f32.gmra.mrb[0].mxu0 %v1090
        %v1536 = vpop.f32.mrb[0].mxu0
        %v1537 = vadd.f32 %v1389, %v1536
        %v1538 = vpop.f32.mrb[0].mxu0
        %1539 = vmatprep.mubr.f32.mxu0 0.0
        %1540 = vmatmul.mubr.f32.gmra.mrb[0].mxu0 %v1092
        %v1541 = vpop.f32.mrb[0].mxu0
        %v1542 = vadd.f32 %v1394, %v1541
        %v1543 = vpop.f32.mrb[0].mxu0
        %1544 = vmatprep.mubr.f32.mxu0 0.0
        %1545 = vmatmul.mubr.f32.gmra.mrb[0].mxu0 %v1094
        %v1546 = vpop.f32.mrb[0].mxu0
        %v1547 = vadd.f32 %v1399, %v1546
        %v1548 = vpop.f32.mrb[0].mxu0
        %1549 = vmatprep.mubr.f32.mxu0 0.0
        %1550 = vmatmul.mubr.f32.gmra.mrb[0].mxu0 %v1096
        %v1551 = vpop.f32.mrb[0].mxu0
        %v1552 = vadd.f32 %v1404, %v1551
        %v1553 = vpop.f32.mrb[0].mxu0
        %1554 = vmatprep.mubr.f32.mxu0 0.0
        %1555 = vmatmul.mubr.f32.gmra.mrb[0].mxu0 %v1098
        %v1556 = vpop.f32.mrb[0].mxu0
        %v1557 = vadd.f32 %v1409, %v1556
        %v1558 = vpop.f32.mrb[0].mxu0
        %1559 = vmatprep.mubr.f32.mxu0 0.0
        %1560 = vmatmul.mubr.f32.gmra.mrb[0].mxu0 %v1100
        %v1561 = vpop.f32.mrb[0].mxu0
        %v1562 = vadd.f32 %v1414, %v1561
        %v1563 = vpop.f32.mrb[0].mxu0
        %1564 = vmatprep.mubr.f32.mxu0 0.0
        %1565 = vmatmul.mubr.f32.gmra.mrb[0].mxu0 %v1102
        %v1566 = vpop.f32.mrb[0].mxu0
        %v1567 = vadd.f32 %v1419, %v1566
        %v1568 = vpop.f32.mrb[0].mxu0
        %1569 = vmatprep.mubr.f32.mxu0 0.0
        %1570 = vmatmul.mubr.f32.gmra.mrb[0].mxu0 %v1104
        %v1571 = vpop.f32.mrb[0].mxu0
        %v1572 = vadd.f32 %v1424, %v1571
        %v1573 = vpop.f32.mrb[0].mxu0
        %1574 = vmatprep.mubr.f32.mxu0 0.0
        %1575 = vmatmul.mubr.f32.gmra.mrb[0].mxu0 %v1106
        %v1576 = vpop.f32.mrb[0].mxu0
        %v1577 = vadd.f32 %v1429, %v1576
        %v1578 = vpop.f32.mrb[0].mxu0
        %1579 = vmatprep.mubr.f32.mxu0 0.0
        %1580 = vmatmul.mubr.f32.gmra.mrb[0].mxu0 %v1108
        %v1581 = vpop.f32.mrb[0].mxu0
        %v1582 = vadd.f32 %v1434, %v1581
        %v1583 = vpop.f32.mrb[0].mxu0
        %1584 = vmatprep.mubr.f32.mxu0 0.0
        %1585 = vmatmul.mubr.f32.gmra.mrb[0].mxu0 %v1110
        %v1586 = vpop.f32.mrb[0].mxu0
        %v1587 = vadd.f32 %v1439, %v1586
        %v1588 = vpop.f32.mrb[0].mxu0
        %1589 = vmatprep.mubr.f32.mxu0 0.0
        %1590 = vmatmul.mubr.f32.gmra.mrb[0].mxu0 %v1112
        %v1591 = vpop.f32.mrb[0].mxu0
        %v1592 = vadd.f32 %v1444, %v1591
        %v1593 = vpop.f32.mrb[0].mxu0
        %1594 = vdwg.mxu0
        %s1595 = scalar_lea.vmem %s5, 28
        %v1596 = vld [vmem:[%s1595] sm:$0xf]
        %s1597 = scalar_lea.vmem %s5, 4
        %v1598 = vld [vmem:[%s1597] sm:$0xf]
        %v1599 = vsel %vm1081, %v1003, 0
        %v1601 = vsel %vm1081, %v1004, 0
        %v1604 = vsel %vm1114, %v1598, 0
        %1606 = vmatprep.subr.mxu0 0.0
        %1607 = vmatpush1.msra.mxu0 %v1604
        %1608 = vmatprep.subr.mxu0 0.0
        %1609 = vmatpush1.msra.mxu0 0.0
        %1610 = vmatprep.subr.mxu0 0.0
        %1611 = vmatpush1.msra.mxu0 0.0
        %1612 = vmatprep.subr.mxu0 0.0
        %1613 = vmatpush1.msra.mxu0 0.0
        %1614 = vmatprep.subr.mxu0 0.0
        %1615 = vmatpush1.msra.mxu0 0.0
        %1616 = vmatprep.subr.mxu0 0.0
        %1617 = vmatpush1.msra.mxu0 0.0
        %1618 = vmatprep.subr.mxu0 0.0
        %1619 = vmatpush1.msra.mxu0 0.0
        %1620 = vmatprep.subr.mxu0 0.0
        %1621 = vmatpush1.msra.mxu0 0.0
        %1622 = vmatprep.subr.mxu0 0.0
        %1623 = vmatpush1.msra.mxu0 0.0
        %1624 = vmatprep.subr.mxu0 0.0
        %1625 = vmatpush1.msra.mxu0 0.0
        %1626 = vmatprep.subr.mxu0 0.0
        %1627 = vmatpush1.msra.mxu0 0.0
        %1628 = vmatprep.subr.mxu0 0.0
        %1629 = vmatpush1.msra.mxu0 0.0
        %1630 = vmatprep.subr.mxu0 0.0
        %1631 = vmatpush1.msra.mxu0 0.0
        %1632 = vmatprep.subr.mxu0 0.0
        %1633 = vmatpush1.msra.mxu0 0.0
        %1634 = vmatprep.subr.mxu0 0.0
        %1635 = vmatpush1.msra.mxu0 0.0
        %1636 = vmatprep.subr.mxu0 0.0
        %1637 = vmatpush1.msra.mxu0 0.0
        %1638 = vmatprep.subr.mxu0 0.0
        %1639 = vmatpush1.msra.mxu0 0.0
        %1640 = vmatprep.subr.mxu0 0.0
        %1641 = vmatpush1.msra.mxu0 0.0
        %1642 = vmatprep.subr.mxu0 0.0
        %1643 = vmatpush1.msra.mxu0 0.0
        %1644 = vmatprep.subr.mxu0 0.0
        %1645 = vmatpush1.msra.mxu0 0.0
        %1646 = vmatprep.subr.mxu0 0.0
        %1647 = vmatpush1.msra.mxu0 0.0
        %1648 = vmatprep.subr.mxu0 0.0
        %1649 = vmatpush1.msra.mxu0 0.0
        %1650 = vmatprep.subr.mxu0 0.0
        %1651 = vmatpush1.msra.mxu0 0.0
        %1652 = vmatprep.subr.mxu0 0.0
        %1653 = vmatpush1.msra.mxu0 0.0
        %1654 = vmatprep.subr.mxu0 0.0
        %1655 = vmatpush1.msra.mxu0 0.0
        %1656 = vmatprep.subr.mxu0 0.0
        %1657 = vmatpush1.msra.mxu0 0.0
        %1658 = vmatprep.subr.mxu0 0.0
        %1659 = vmatpush1.msra.mxu0 0.0
        %1660 = vmatprep.subr.mxu0 0.0
        %1661 = vmatpush1.msra.mxu0 0.0
        %1662 = vmatprep.subr.mxu0 0.0
        %1663 = vmatpush1.msra.mxu0 0.0
        %1664 = vmatprep.subr.mxu0 0.0
        %1665 = vmatpush1.msra.mxu0 0.0
        %1666 = vmatprep.subr.mxu0 0.0
        %1667 = vmatpush1.msra.mxu0 0.0
        %1668 = vmatprep.subr.mxu0 0.0
        %1669 = vmatpush1.msra.mxu0 0.0
        %1670 = vmatprep.mubr.f32.mxu0 0.0
        %1671 = vmatmul.mubr.f32.gmra.mrb[0].mxu0 %v1086
        %v1672 = vpop.f32.mrb[0].mxu0
        %v1673 = vadd.f32 0.0, %v1672
        %v1674 = vpop.f32.mrb[0].mxu0
        %1675 = vmatprep.mubr.f32.mxu0 0.0
        %1676 = vmatmul.mubr.f32.gmra.mrb[0].mxu0 %v1088
        %v1677 = vpop.f32.mrb[0].mxu0
        %v1678 = vadd.f32 0.0, %v1677
        %v1679 = vpop.f32.mrb[0].mxu0
        %1680 = vmatprep.mubr.f32.mxu0 0.0
        %1681 = vmatmul.mubr.f32.gmra.mrb[0].mxu0 %v1090
        %v1682 = vpop.f32.mrb[0].mxu0
        %v1683 = vadd.f32 0.0, %v1682
        %v1684 = vpop.f32.mrb[0].mxu0
        %1685 = vmatprep.mubr.f32.mxu0 0.0
        %1686 = vmatmul.mubr.f32.gmra.mrb[0].mxu0 %v1092
        %v1687 = vpop.f32.mrb[0].mxu0
        %v1688 = vadd.f32 0.0, %v1687
        %v1689 = vpop.f32.mrb[0].mxu0
        %1690 = vmatprep.mubr.f32.mxu0 0.0
        %1691 = vmatmul.mubr.f32.gmra.mrb[0].mxu0 %v1094
        %v1692 = vpop.f32.mrb[0].mxu0
        %v1693 = vadd.f32 0.0, %v1692
        %v1694 = vpop.f32.mrb[0].mxu0
        %1695 = vmatprep.mubr.f32.mxu0 0.0
        %1696 = vmatmul.mubr.f32.gmra.mrb[0].mxu0 %v1096
        %v1697 = vpop.f32.mrb[0].mxu0
        %v1698 = vadd.f32 0.0, %v1697
        %v1699 = vpop.f32.mrb[0].mxu0
        %1700 = vmatprep.mubr.f32.mxu0 0.0
        %1701 = vmatmul.mubr.f32.gmra.mrb[0].mxu0 %v1098
        %v1702 = vpop.f32.mrb[0].mxu0
        %v1703 = vadd.f32 0.0, %v1702
        %v1704 = vpop.f32.mrb[0].mxu0
        %1705 = vmatprep.mubr.f32.mxu0 0.0
        %1706 = vmatmul.mubr.f32.gmra.mrb[0].mxu0 %v1100
        %v1707 = vpop.f32.mrb[0].mxu0
        %v1708 = vadd.f32 0.0, %v1707
        %v1709 = vpop.f32.mrb[0].mxu0
        %1710 = vmatprep.mubr.f32.mxu0 0.0
        %1711 = vmatmul.mubr.f32.gmra.mrb[0].mxu0 %v1102
        %v1712 = vpop.f32.mrb[0].mxu0
        %v1713 = vadd.f32 0.0, %v1712
        %v1714 = vpop.f32.mrb[0].mxu0
        %1715 = vmatprep.mubr.f32.mxu0 0.0
        %1716 = vmatmul.mubr.f32.gmra.mrb[0].mxu0 %v1104
        %v1717 = vpop.f32.mrb[0].mxu0
        %v1718 = vadd.f32 0.0, %v1717
        %v1719 = vpop.f32.mrb[0].mxu0
        %1720 = vmatprep.mubr.f32.mxu0 0.0
        %1721 = vmatmul.mubr.f32.gmra.mrb[0].mxu0 %v1106
        %v1722 = vpop.f32.mrb[0].mxu0
        %v1723 = vadd.f32 0.0, %v1722
        %v1724 = vpop.f32.mrb[0].mxu0
        %1725 = vmatprep.mubr.f32.mxu0 0.0
        %1726 = vmatmul.mubr.f32.gmra.mrb[0].mxu0 %v1108
        %v1727 = vpop.f32.mrb[0].mxu0
        %v1728 = vadd.f32 0.0, %v1727
        %v1729 = vpop.f32.mrb[0].mxu0
        %1730 = vmatprep.mubr.f32.mxu0 0.0
        %1731 = vmatmul.mubr.f32.gmra.mrb[0].mxu0 %v1110
        %v1732 = vpop.f32.mrb[0].mxu0
        %v1733 = vadd.f32 0.0, %v1732
        %v1734 = vpop.f32.mrb[0].mxu0
        %1735 = vmatprep.mubr.f32.mxu0 0.0
        %1736 = vmatmul.mubr.f32.gmra.mrb[0].mxu0 %v1112
        %v1737 = vpop.f32.mrb[0].mxu0
        %v1738 = vadd.f32 0.0, %v1737
        %v1739 = vpop.f32.mrb[0].mxu0
        %1740 = vmatprep.mubr.f32.mxu0 0.0
        %1741 = vmatmul.mubr.f32.gmra.mrb[0].mxu0 %v1599
        %v1742 = vpop.f32.mrb[0].mxu0
        %v1743 = vadd.f32 0.0, %v1742
        %v1744 = vpop.f32.mrb[0].mxu0
        %1745 = vmatprep.mubr.f32.mxu0 0.0
        %1746 = vmatmul.mubr.f32.gmra.mrb[0].mxu0 %v1601
        %v1747 = vpop.f32.mrb[0].mxu0
        %v1748 = vadd.f32 0.0, %v1747
        %v1749 = vpop.f32.mrb[0].mxu0
        %1750 = vdwg.mxu0
        %v1752 = vsel %vm1114, %v1596, 0
        %1754 = vmatprep.subr.mxu0 0.0
        %1755 = vmatpush1.msra.mxu0 %v1752
        %1756 = vmatprep.subr.mxu0 0.0
        %1757 = vmatpush1.msra.mxu0 0.0
        %1758 = vmatprep.subr.mxu0 0.0
        %1759 = vmatpush1.msra.mxu0 0.0
        %1760 = vmatprep.subr.mxu0 0.0
        %1761 = vmatpush1.msra.mxu0 0.0
        %1762 = vmatprep.subr.mxu0 0.0
        %1763 = vmatpush1.msra.mxu0 0.0
        %1764 = vmatprep.subr.mxu0 0.0
        %1765 = vmatpush1.msra.mxu0 0.0
        %1766 = vmatprep.subr.mxu0 0.0
        %1767 = vmatpush1.msra.mxu0 0.0
        %1768 = vmatprep.subr.mxu0 0.0
        %1769 = vmatpush1.msra.mxu0 0.0
        %1770 = vmatprep.subr.mxu0 0.0
        %1771 = vmatpush1.msra.mxu0 0.0
        %1772 = vmatprep.subr.mxu0 0.0
        %1773 = vmatpush1.msra.mxu0 0.0
        %1774 = vmatprep.subr.mxu0 0.0
        %1775 = vmatpush1.msra.mxu0 0.0
        %1776 = vmatprep.subr.mxu0 0.0
        %1777 = vmatpush1.msra.mxu0 0.0
        %1778 = vmatprep.subr.mxu0 0.0
        %1779 = vmatpush1.msra.mxu0 0.0
        %1780 = vmatprep.subr.mxu0 0.0
        %1781 = vmatpush1.msra.mxu0 0.0
        %1782 = vmatprep.subr.mxu0 0.0
        %1783 = vmatpush1.msra.mxu0 0.0
        %1784 = vmatprep.subr.mxu0 0.0
        %1785 = vmatpush1.msra.mxu0 0.0
        %1786 = vmatprep.subr.mxu0 0.0
        %1787 = vmatpush1.msra.mxu0 0.0
        %1788 = vmatprep.subr.mxu0 0.0
        %1789 = vmatpush1.msra.mxu0 0.0
        %1790 = vmatprep.subr.mxu0 0.0
        %1791 = vmatpush1.msra.mxu0 0.0
        %1792 = vmatprep.subr.mxu0 0.0
        %1793 = vmatpush1.msra.mxu0 0.0
        %1794 = vmatprep.subr.mxu0 0.0
        %1795 = vmatpush1.msra.mxu0 0.0
        %1796 = vmatprep.subr.mxu0 0.0
        %1797 = vmatpush1.msra.mxu0 0.0
        %1798 = vmatprep.subr.mxu0 0.0
        %1799 = vmatpush1.msra.mxu0 0.0
        %1800 = vmatprep.subr.mxu0 0.0
        %1801 = vmatpush1.msra.mxu0 0.0
        %1802 = vmatprep.subr.mxu0 0.0
        %1803 = vmatpush1.msra.mxu0 0.0
        %1804 = vmatprep.subr.mxu0 0.0
        %1805 = vmatpush1.msra.mxu0 0.0
        %1806 = vmatprep.subr.mxu0 0.0
        %1807 = vmatpush1.msra.mxu0 0.0
        %1808 = vmatprep.subr.mxu0 0.0
        %1809 = vmatpush1.msra.mxu0 0.0
        %1810 = vmatprep.subr.mxu0 0.0
        %1811 = vmatpush1.msra.mxu0 0.0
        %1812 = vmatprep.subr.mxu0 0.0
        %1813 = vmatpush1.msra.mxu0 0.0
        %1814 = vmatprep.subr.mxu0 0.0
        %1815 = vmatpush1.msra.mxu0 0.0
        %1816 = vmatprep.subr.mxu0 0.0
        %1817 = vmatpush1.msra.mxu0 0.0
        %1818 = vmatprep.mubr.f32.mxu0 0.0
        %1819 = vmatmul.mubr.f32.gmra.mrb[0].mxu0 %v1082
        %v1820 = vpop.f32.mrb[0].mxu0
        %v1821 = vadd.f32 %v1673, %v1820
        %v1822 = vpop.f32.mrb[0].mxu0
        %1823 = vmatprep.mubr.f32.mxu0 0.0
        %1824 = vmatmul.mubr.f32.gmra.mrb[0].mxu0 %v1084
        %v1825 = vpop.f32.mrb[0].mxu0
        %v1826 = vadd.f32 %v1678, %v1825
        %v1827 = vpop.f32.mrb[0].mxu0
        %1828 = vmatprep.mubr.f32.mxu0 0.0
        %1829 = vmatmul.mubr.f32.gmra.mrb[0].mxu0 %v1086
        %v1830 = vpop.f32.mrb[0].mxu0
        %v1831 = vadd.f32 %v1683, %v1830
        %v1832 = vpop.f32.mrb[0].mxu0
        %1833 = vmatprep.mubr.f32.mxu0 0.0
        %1834 = vmatmul.mubr.f32.gmra.mrb[0].mxu0 %v1088
        %v1835 = vpop.f32.mrb[0].mxu0
        %v1836 = vadd.f32 %v1688, %v1835
        %v1837 = vpop.f32.mrb[0].mxu0
        %1838 = vmatprep.mubr.f32.mxu0 0.0
        %1839 = vmatmul.mubr.f32.gmra.mrb[0].mxu0 %v1090
        %v1840 = vpop.f32.mrb[0].mxu0
        %v1841 = vadd.f32 %v1693, %v1840
        %v1842 = vpop.f32.mrb[0].mxu0
        %1843 = vmatprep.mubr.f32.mxu0 0.0
        %1844 = vmatmul.mubr.f32.gmra.mrb[0].mxu0 %v1092
        %v1845 = vpop.f32.mrb[0].mxu0
        %v1846 = vadd.f32 %v1698, %v1845
        %v1847 = vpop.f32.mrb[0].mxu0
        %1848 = vmatprep.mubr.f32.mxu0 0.0
        %1849 = vmatmul.mubr.f32.gmra.mrb[0].mxu0 %v1094
        %v1850 = vpop.f32.mrb[0].mxu0
        %v1851 = vadd.f32 %v1703, %v1850
        %v1852 = vpop.f32.mrb[0].mxu0
        %1853 = vmatprep.mubr.f32.mxu0 0.0
        %1854 = vmatmul.mubr.f32.gmra.mrb[0].mxu0 %v1096
        %v1855 = vpop.f32.mrb[0].mxu0
        %v1856 = vadd.f32 %v1708, %v1855
        %v1857 = vpop.f32.mrb[0].mxu0
        %1858 = vmatprep.mubr.f32.mxu0 0.0
        %1859 = vmatmul.mubr.f32.gmra.mrb[0].mxu0 %v1098
        %v1860 = vpop.f32.mrb[0].mxu0
        %v1861 = vadd.f32 %v1713, %v1860
        %v1862 = vpop.f32.mrb[0].mxu0
        %1863 = vmatprep.mubr.f32.mxu0 0.0
        %1864 = vmatmul.mubr.f32.gmra.mrb[0].mxu0 %v1100
        %v1865 = vpop.f32.mrb[0].mxu0
        %v1866 = vadd.f32 %v1718, %v1865
        %v1867 = vpop.f32.mrb[0].mxu0
        %1868 = vmatprep.mubr.f32.mxu0 0.0
        %1869 = vmatmul.mubr.f32.gmra.mrb[0].mxu0 %v1102
        %v1870 = vpop.f32.mrb[0].mxu0
        %v1871 = vadd.f32 %v1723, %v1870
        %v1872 = vpop.f32.mrb[0].mxu0
        %1873 = vmatprep.mubr.f32.mxu0 0.0
        %1874 = vmatmul.mubr.f32.gmra.mrb[0].mxu0 %v1104
        %v1875 = vpop.f32.mrb[0].mxu0
        %v1876 = vadd.f32 %v1728, %v1875
        %v1877 = vpop.f32.mrb[0].mxu0
        %1878 = vmatprep.mubr.f32.mxu0 0.0
        %1879 = vmatmul.mubr.f32.gmra.mrb[0].mxu0 %v1106
        %v1880 = vpop.f32.mrb[0].mxu0
        %v1881 = vadd.f32 %v1733, %v1880
        %v1882 = vpop.f32.mrb[0].mxu0
        %1883 = vmatprep.mubr.f32.mxu0 0.0
        %1884 = vmatmul.mubr.f32.gmra.mrb[0].mxu0 %v1108
        %v1885 = vpop.f32.mrb[0].mxu0
        %v1886 = vadd.f32 %v1738, %v1885
        %v1887 = vpop.f32.mrb[0].mxu0
        %1888 = vmatprep.mubr.f32.mxu0 0.0
        %1889 = vmatmul.mubr.f32.gmra.mrb[0].mxu0 %v1110
        %v1890 = vpop.f32.mrb[0].mxu0
        %v1891 = vadd.f32 %v1743, %v1890
        %v1892 = vpop.f32.mrb[0].mxu0
        %1893 = vmatprep.mubr.f32.mxu0 0.0
        %1894 = vmatmul.mubr.f32.gmra.mrb[0].mxu0 %v1112
        %v1895 = vpop.f32.mrb[0].mxu0
        %v1896 = vadd.f32 %v1748, %v1895
        %v1897 = vpop.f32.mrb[0].mxu0
        %1898 = vdwg.mxu0
        %s1899 = scalar_lea.vmem %s5, 32
        %v1900 = vld [vmem:[%s1899] sm:$0xf]
        %s1901 = scalar_lea.vmem %s5, 24
        %v1902 = vld [vmem:[%s1901] sm:$0xf]
        %v1904 = vsel %vm1114, %v1902, 0
        %1906 = vmatprep.subr.mxu0 0.0
        %1907 = vmatpush1.msra.mxu0 %v1904
        %1908 = vmatprep.subr.mxu0 0.0
        %1909 = vmatpush1.msra.mxu0 0.0
        %1910 = vmatprep.subr.mxu0 0.0
        %1911 = vmatpush1.msra.mxu0 0.0
        %1912 = vmatprep.subr.mxu0 0.0
        %1913 = vmatpush1.msra.mxu0 0.0
        %1914 = vmatprep.subr.mxu0 0.0
        %1915 = vmatpush1.msra.mxu0 0.0
        %1916 = vmatprep.subr.mxu0 0.0
        %1917 = vmatpush1.msra.mxu0 0.0
        %1918 = vmatprep.subr.mxu0 0.0
        %1919 = vmatpush1.msra.mxu0 0.0
        %1920 = vmatprep.subr.mxu0 0.0
        %1921 = vmatpush1.msra.mxu0 0.0
        %1922 = vmatprep.subr.mxu0 0.0
        %1923 = vmatpush1.msra.mxu0 0.0
        %1924 = vmatprep.subr.mxu0 0.0
        %1925 = vmatpush1.msra.mxu0 0.0
        %1926 = vmatprep.subr.mxu0 0.0
        %1927 = vmatpush1.msra.mxu0 0.0
        %1928 = vmatprep.subr.mxu0 0.0
        %1929 = vmatpush1.msra.mxu0 0.0
        %1930 = vmatprep.subr.mxu0 0.0
        %1931 = vmatpush1.msra.mxu0 0.0
        %1932 = vmatprep.subr.mxu0 0.0
        %1933 = vmatpush1.msra.mxu0 0.0
        %1934 = vmatprep.subr.mxu0 0.0
        %1935 = vmatpush1.msra.mxu0 0.0
        %1936 = vmatprep.subr.mxu0 0.0
        %1937 = vmatpush1.msra.mxu0 0.0
        %1938 = vmatprep.subr.mxu0 0.0
        %1939 = vmatpush1.msra.mxu0 0.0
        %1940 = vmatprep.subr.mxu0 0.0
        %1941 = vmatpush1.msra.mxu0 0.0
        %1942 = vmatprep.subr.mxu0 0.0
        %1943 = vmatpush1.msra.mxu0 0.0
        %1944 = vmatprep.subr.mxu0 0.0
        %1945 = vmatpush1.msra.mxu0 0.0
        %1946 = vmatprep.subr.mxu0 0.0
        %1947 = vmatpush1.msra.mxu0 0.0
        %1948 = vmatprep.subr.mxu0 0.0
        %1949 = vmatpush1.msra.mxu0 0.0
        %1950 = vmatprep.subr.mxu0 0.0
        %1951 = vmatpush1.msra.mxu0 0.0
        %1952 = vmatprep.subr.mxu0 0.0
        %1953 = vmatpush1.msra.mxu0 0.0
        %1954 = vmatprep.subr.mxu0 0.0
        %1955 = vmatpush1.msra.mxu0 0.0
        %1956 = vmatprep.subr.mxu0 0.0
        %1957 = vmatpush1.msra.mxu0 0.0
        %1958 = vmatprep.subr.mxu0 0.0
        %1959 = vmatpush1.msra.mxu0 0.0
        %1960 = vmatprep.subr.mxu0 0.0
        %1961 = vmatpush1.msra.mxu0 0.0
        %1962 = vmatprep.subr.mxu0 0.0
        %1963 = vmatpush1.msra.mxu0 0.0
        %1964 = vmatprep.subr.mxu0 0.0
        %1965 = vmatpush1.msra.mxu0 0.0
        %1966 = vmatprep.subr.mxu0 0.0
        %1967 = vmatpush1.msra.mxu0 0.0
        %1968 = vmatprep.subr.mxu0 0.0
        %1969 = vmatpush1.msra.mxu0 0.0
        %1970 = vmatprep.mubr.f32.mxu0 0.0
        %1971 = vmatmul.mubr.f32.gmra.mrb[0].mxu0 %v1267
        %v1972 = vpop.f32.mrb[0].mxu0
        %v1973 = vadd.f32 0.0, %v1972
        %v1974 = vpop.f32.mrb[0].mxu0
        %1975 = vmatprep.mubr.f32.mxu0 0.0
        %1976 = vmatmul.mubr.f32.gmra.mrb[0].mxu0 %v1269
        %v1977 = vpop.f32.mrb[0].mxu0
        %v1978 = vadd.f32 0.0, %v1977
        %v1979 = vpop.f32.mrb[0].mxu0
        %1980 = vmatprep.mubr.f32.mxu0 0.0
        %1981 = vmatmul.mubr.f32.gmra.mrb[0].mxu0 %v1271
        %v1982 = vpop.f32.mrb[0].mxu0
        %v1983 = vadd.f32 0.0, %v1982
        %v1984 = vpop.f32.mrb[0].mxu0
        %1985 = vmatprep.mubr.f32.mxu0 0.0
        %1986 = vmatmul.mubr.f32.gmra.mrb[0].mxu0 %v1273
        %v1987 = vpop.f32.mrb[0].mxu0
        %v1988 = vadd.f32 0.0, %v1987
        %v1989 = vpop.f32.mrb[0].mxu0
        %1990 = vmatprep.mubr.f32.mxu0 0.0
        %1991 = vmatmul.mubr.f32.gmra.mrb[0].mxu0 %v1275
        %v1992 = vpop.f32.mrb[0].mxu0
        %v1993 = vadd.f32 0.0, %v1992
        %v1994 = vpop.f32.mrb[0].mxu0
        %1995 = vmatprep.mubr.f32.mxu0 0.0
        %1996 = vmatmul.mubr.f32.gmra.mrb[0].mxu0 %v1277
        %v1997 = vpop.f32.mrb[0].mxu0
        %v1998 = vadd.f32 0.0, %v1997
        %v1999 = vpop.f32.mrb[0].mxu0
        %2000 = vmatprep.mubr.f32.mxu0 0.0
        %2001 = vmatmul.mubr.f32.gmra.mrb[0].mxu0 %v1279
        %v2002 = vpop.f32.mrb[0].mxu0
        %v2003 = vadd.f32 0.0, %v2002
        %v2004 = vpop.f32.mrb[0].mxu0
        %2005 = vmatprep.mubr.f32.mxu0 0.0
        %2006 = vmatmul.mubr.f32.gmra.mrb[0].mxu0 %v1281
        %v2007 = vpop.f32.mrb[0].mxu0
        %v2008 = vadd.f32 0.0, %v2007
        %v2009 = vpop.f32.mrb[0].mxu0
        %2010 = vmatprep.mubr.f32.mxu0 0.0
        %2011 = vmatmul.mubr.f32.gmra.mrb[0].mxu0 %v1283
        %v2012 = vpop.f32.mrb[0].mxu0
        %v2013 = vadd.f32 0.0, %v2012
        %v2014 = vpop.f32.mrb[0].mxu0
        %2015 = vmatprep.mubr.f32.mxu0 0.0
        %2016 = vmatmul.mubr.f32.gmra.mrb[0].mxu0 %v1285
        %v2017 = vpop.f32.mrb[0].mxu0
        %v2018 = vadd.f32 0.0, %v2017
        %v2019 = vpop.f32.mrb[0].mxu0
        %2020 = vmatprep.mubr.f32.mxu0 0.0
        %2021 = vmatmul.mubr.f32.gmra.mrb[0].mxu0 %v1287
        %v2022 = vpop.f32.mrb[0].mxu0
        %v2023 = vadd.f32 0.0, %v2022
        %v2024 = vpop.f32.mrb[0].mxu0
        %2025 = vmatprep.mubr.f32.mxu0 0.0
        %2026 = vmatmul.mubr.f32.gmra.mrb[0].mxu0 %v1289
        %v2027 = vpop.f32.mrb[0].mxu0
        %v2028 = vadd.f32 0.0, %v2027
        %v2029 = vpop.f32.mrb[0].mxu0
        %2030 = vmatprep.mubr.f32.mxu0 0.0
        %2031 = vmatmul.mubr.f32.gmra.mrb[0].mxu0 %v1291
        %v2032 = vpop.f32.mrb[0].mxu0
        %v2033 = vadd.f32 0.0, %v2032
        %v2034 = vpop.f32.mrb[0].mxu0
        %2035 = vmatprep.mubr.f32.mxu0 0.0
        %2036 = vmatmul.mubr.f32.gmra.mrb[0].mxu0 %v1293
        %v2037 = vpop.f32.mrb[0].mxu0
        %v2038 = vadd.f32 0.0, %v2037
        %v2039 = vpop.f32.mrb[0].mxu0
        %2040 = vmatprep.mubr.f32.mxu0 0.0
        %2041 = vmatmul.mubr.f32.gmra.mrb[0].mxu0 %v1295
        %v2042 = vpop.f32.mrb[0].mxu0
        %v2043 = vadd.f32 0.0, %v2042
        %v2044 = vpop.f32.mrb[0].mxu0
        %2045 = vmatprep.mubr.f32.mxu0 0.0
        %2046 = vmatmul.mubr.f32.gmra.mrb[0].mxu0 %v1297
        %v2047 = vpop.f32.mrb[0].mxu0
        %v2048 = vadd.f32 0.0, %v2047
        %v2049 = vpop.f32.mrb[0].mxu0
        %2050 = vdwg.mxu0
        %v2052 = vsel %vm1114, %v1900, 0
        %2054 = vmatprep.subr.mxu0 0.0
        %2055 = vmatpush1.msra.mxu0 %v2052
        %2056 = vmatprep.subr.mxu0 0.0
        %2057 = vmatpush1.msra.mxu0 0.0
        %2058 = vmatprep.subr.mxu0 0.0
        %2059 = vmatpush1.msra.mxu0 0.0
        %2060 = vmatprep.subr.mxu0 0.0
        %2061 = vmatpush1.msra.mxu0 0.0
        %2062 = vmatprep.subr.mxu0 0.0
        %2063 = vmatpush1.msra.mxu0 0.0
        %2064 = vmatprep.subr.mxu0 0.0
        %2065 = vmatpush1.msra.mxu0 0.0
        %2066 = vmatprep.subr.mxu0 0.0
        %2067 = vmatpush1.msra.mxu0 0.0
        %2068 = vmatprep.subr.mxu0 0.0
        %2069 = vmatpush1.msra.mxu0 0.0
        %2070 = vmatprep.subr.mxu0 0.0
        %2071 = vmatpush1.msra.mxu0 0.0
        %2072 = vmatprep.subr.mxu0 0.0
        %2073 = vmatpush1.msra.mxu0 0.0
        %2074 = vmatprep.subr.mxu0 0.0
        %2075 = vmatpush1.msra.mxu0 0.0
        %2076 = vmatprep.subr.mxu0 0.0
        %2077 = vmatpush1.msra.mxu0 0.0
        %2078 = vmatprep.subr.mxu0 0.0
        %2079 = vmatpush1.msra.mxu0 0.0
        %2080 = vmatprep.subr.mxu0 0.0
        %2081 = vmatpush1.msra.mxu0 0.0
        %2082 = vmatprep.subr.mxu0 0.0
        %2083 = vmatpush1.msra.mxu0 0.0
        %2084 = vmatprep.subr.mxu0 0.0
        %2085 = vmatpush1.msra.mxu0 0.0
        %2086 = vmatprep.subr.mxu0 0.0
        %2087 = vmatpush1.msra.mxu0 0.0
        %2088 = vmatprep.subr.mxu0 0.0
        %2089 = vmatpush1.msra.mxu0 0.0
        %2090 = vmatprep.subr.mxu0 0.0
        %2091 = vmatpush1.msra.mxu0 0.0
        %2092 = vmatprep.subr.mxu0 0.0
        %2093 = vmatpush1.msra.mxu0 0.0
        %2094 = vmatprep.subr.mxu0 0.0
        %2095 = vmatpush1.msra.mxu0 0.0
        %2096 = vmatprep.subr.mxu0 0.0
        %2097 = vmatpush1.msra.mxu0 0.0
        %2098 = vmatprep.subr.mxu0 0.0
        %2099 = vmatpush1.msra.mxu0 0.0
        %2100 = vmatprep.subr.mxu0 0.0
        %2101 = vmatpush1.msra.mxu0 0.0
        %2102 = vmatprep.subr.mxu0 0.0
        %2103 = vmatpush1.msra.mxu0 0.0
        %2104 = vmatprep.subr.mxu0 0.0
        %2105 = vmatpush1.msra.mxu0 0.0
        %2106 = vmatprep.subr.mxu0 0.0
        %2107 = vmatpush1.msra.mxu0 0.0
        %2108 = vmatprep.subr.mxu0 0.0
        %2109 = vmatpush1.msra.mxu0 0.0
        %2110 = vmatprep.subr.mxu0 0.0
        %2111 = vmatpush1.msra.mxu0 0.0
        %2112 = vmatprep.subr.mxu0 0.0
        %2113 = vmatpush1.msra.mxu0 0.0
        %2114 = vmatprep.subr.mxu0 0.0
        %2115 = vmatpush1.msra.mxu0 0.0
        %2116 = vmatprep.subr.mxu0 0.0
        %2117 = vmatpush1.msra.mxu0 0.0
        %2118 = vmatprep.mubr.f32.mxu0 0.0
        %2119 = vmatmul.mubr.f32.gmra.mrb[0].mxu0 %v1082
        %v2120 = vpop.f32.mrb[0].mxu0
        %v2121 = vadd.f32 %v1973, %v2120
        %v2122 = vpop.f32.mrb[0].mxu0
        %2123 = vmatprep.mubr.f32.mxu0 0.0
        %2124 = vmatmul.mubr.f32.gmra.mrb[0].mxu0 %v1084
        %v2125 = vpop.f32.mrb[0].mxu0
        %v2126 = vadd.f32 %v1978, %v2125
        %v2127 = vpop.f32.mrb[0].mxu0
        %2128 = vmatprep.mubr.f32.mxu0 0.0
        %2129 = vmatmul.mubr.f32.gmra.mrb[0].mxu0 %v1086
        %v2130 = vpop.f32.mrb[0].mxu0
        %v2131 = vadd.f32 %v1983, %v2130
        %v2132 = vpop.f32.mrb[0].mxu0
        %2133 = vmatprep.mubr.f32.mxu0 0.0
        %2134 = vmatmul.mubr.f32.gmra.mrb[0].mxu0 %v1088
        %v2135 = vpop.f32.mrb[0].mxu0
        %v2136 = vadd.f32 %v1988, %v2135
        %v2137 = vpop.f32.mrb[0].mxu0
        %2138 = vmatprep.mubr.f32.mxu0 0.0
        %2139 = vmatmul.mubr.f32.gmra.mrb[0].mxu0 %v1090
        %v2140 = vpop.f32.mrb[0].mxu0
        %v2141 = vadd.f32 %v1993, %v2140
        %v2142 = vpop.f32.mrb[0].mxu0
        %2143 = vmatprep.mubr.f32.mxu0 0.0
        %2144 = vmatmul.mubr.f32.gmra.mrb[0].mxu0 %v1092
        %v2145 = vpop.f32.mrb[0].mxu0
        %v2146 = vadd.f32 %v1998, %v2145
        %v2147 = vpop.f32.mrb[0].mxu0
        %2148 = vmatprep.mubr.f32.mxu0 0.0
        %2149 = vmatmul.mubr.f32.gmra.mrb[0].mxu0 %v1094
        %v2150 = vpop.f32.mrb[0].mxu0
        %v2151 = vadd.f32 %v2003, %v2150
        %v2152 = vpop.f32.mrb[0].mxu0
        %2153 = vmatprep.mubr.f32.mxu0 0.0
        %2154 = vmatmul.mubr.f32.gmra.mrb[0].mxu0 %v1096
        %v2155 = vpop.f32.mrb[0].mxu0
        %v2156 = vadd.f32 %v2008, %v2155
        %v2157 = vpop.f32.mrb[0].mxu0
        %2158 = vmatprep.mubr.f32.mxu0 0.0
        %2159 = vmatmul.mubr.f32.gmra.mrb[0].mxu0 %v1098
        %v2160 = vpop.f32.mrb[0].mxu0
        %v2161 = vadd.f32 %v2013, %v2160
        %v2162 = vpop.f32.mrb[0].mxu0
        %2163 = vmatprep.mubr.f32.mxu0 0.0
        %2164 = vmatmul.mubr.f32.gmra.mrb[0].mxu0 %v1100
        %v2165 = vpop.f32.mrb[0].mxu0
        %v2166 = vadd.f32 %v2018, %v2165
        %v2167 = vpop.f32.mrb[0].mxu0
        %2168 = vmatprep.mubr.f32.mxu0 0.0
        %2169 = vmatmul.mubr.f32.gmra.mrb[0].mxu0 %v1102
        %v2170 = vpop.f32.mrb[0].mxu0
        %v2171 = vadd.f32 %v2023, %v2170
        %v2172 = vpop.f32.mrb[0].mxu0
        %2173 = vmatprep.mubr.f32.mxu0 0.0
        %2174 = vmatmul.mubr.f32.gmra.mrb[0].mxu0 %v1104
        %v2175 = vpop.f32.mrb[0].mxu0
        %v2176 = vadd.f32 %v2028, %v2175
        %v2177 = vpop.f32.mrb[0].mxu0
        %2178 = vmatprep.mubr.f32.mxu0 0.0
        %2179 = vmatmul.mubr.f32.gmra.mrb[0].mxu0 %v1106
        %v2180 = vpop.f32.mrb[0].mxu0
        %v2181 = vadd.f32 %v2033, %v2180
        %v2182 = vpop.f32.mrb[0].mxu0
        %2183 = vmatprep.mubr.f32.mxu0 0.0
        %2184 = vmatmul.mubr.f32.gmra.mrb[0].mxu0 %v1108
        %v2185 = vpop.f32.mrb[0].mxu0
        %v2186 = vadd.f32 %v2038, %v2185
        %v2187 = vpop.f32.mrb[0].mxu0
        %2188 = vmatprep.mubr.f32.mxu0 0.0
        %2189 = vmatmul.mubr.f32.gmra.mrb[0].mxu0 %v1110
        %v2190 = vpop.f32.mrb[0].mxu0
        %v2191 = vadd.f32 %v2043, %v2190
        %v2192 = vpop.f32.mrb[0].mxu0
        %2193 = vmatprep.mubr.f32.mxu0 0.0
        %2194 = vmatmul.mubr.f32.gmra.mrb[0].mxu0 %v1112
        %v2195 = vpop.f32.mrb[0].mxu0
        %v2196 = vadd.f32 %v2048, %v2195
        %v2197 = vpop.f32.mrb[0].mxu0
        %2198 = vdwg.mxu0
        %s2199 = scalar_lea.vmem %s5, 8
        %v2200 = vld [vmem:[%s2199] sm:$0xf]
        %v2202 = vsel %vm1114, %v2200, 0
        %2204 = vmatprep.subr.mxu0 0.0
        %2205 = vmatpush1.msra.mxu0 %v2202
        %2206 = vmatprep.subr.mxu0 0.0
        %2207 = vmatpush1.msra.mxu0 0.0
        %2208 = vmatprep.subr.mxu0 0.0
        %2209 = vmatpush1.msra.mxu0 0.0
        %2210 = vmatprep.subr.mxu0 0.0
        %2211 = vmatpush1.msra.mxu0 0.0
        %2212 = vmatprep.subr.mxu0 0.0
        %2213 = vmatpush1.msra.mxu0 0.0
        %2214 = vmatprep.subr.mxu0 0.0
        %2215 = vmatpush1.msra.mxu0 0.0
        %2216 = vmatprep.subr.mxu0 0.0
        %2217 = vmatpush1.msra.mxu0 0.0
        %2218 = vmatprep.subr.mxu0 0.0
        %2219 = vmatpush1.msra.mxu0 0.0
        %2220 = vmatprep.subr.mxu0 0.0
        %2221 = vmatpush1.msra.mxu0 0.0
        %2222 = vmatprep.subr.mxu0 0.0
        %2223 = vmatpush1.msra.mxu0 0.0
        %2224 = vmatprep.subr.mxu0 0.0
        %2225 = vmatpush1.msra.mxu0 0.0
        %2226 = vmatprep.subr.mxu0 0.0
        %2227 = vmatpush1.msra.mxu0 0.0
        %2228 = vmatprep.subr.mxu0 0.0
        %2229 = vmatpush1.msra.mxu0 0.0
        %2230 = vmatprep.subr.mxu0 0.0
        %2231 = vmatpush1.msra.mxu0 0.0
        %2232 = vmatprep.subr.mxu0 0.0
        %2233 = vmatpush1.msra.mxu0 0.0
        %2234 = vmatprep.subr.mxu0 0.0
        %2235 = vmatpush1.msra.mxu0 0.0
        %2236 = vmatprep.subr.mxu0 0.0
        %2237 = vmatpush1.msra.mxu0 0.0
        %2238 = vmatprep.subr.mxu0 0.0
        %2239 = vmatpush1.msra.mxu0 0.0
        %2240 = vmatprep.subr.mxu0 0.0
        %2241 = vmatpush1.msra.mxu0 0.0
        %2242 = vmatprep.subr.mxu0 0.0
        %2243 = vmatpush1.msra.mxu0 0.0
        %2244 = vmatprep.subr.mxu0 0.0
        %2245 = vmatpush1.msra.mxu0 0.0
        %2246 = vmatprep.subr.mxu0 0.0
        %2247 = vmatpush1.msra.mxu0 0.0
        %2248 = vmatprep.subr.mxu0 0.0
        %2249 = vmatpush1.msra.mxu0 0.0
        %2250 = vmatprep.subr.mxu0 0.0
        %2251 = vmatpush1.msra.mxu0 0.0
        %2252 = vmatprep.subr.mxu0 0.0
        %2253 = vmatpush1.msra.mxu0 0.0
        %2254 = vmatprep.subr.mxu0 0.0
        %2255 = vmatpush1.msra.mxu0 0.0
        %2256 = vmatprep.subr.mxu0 0.0
        %2257 = vmatpush1.msra.mxu0 0.0
        %2258 = vmatprep.subr.mxu0 0.0
        %2259 = vmatpush1.msra.mxu0 0.0
        %2260 = vmatprep.subr.mxu0 0.0
        %2261 = vmatpush1.msra.mxu0 0.0
        %2262 = vmatprep.subr.mxu0 0.0
        %2263 = vmatpush1.msra.mxu0 0.0
        %2264 = vmatprep.subr.mxu0 0.0
        %2265 = vmatpush1.msra.mxu0 0.0
        %2266 = vmatprep.subr.mxu0 0.0
        %2267 = vmatpush1.msra.mxu0 0.0
        %2268 = vmatprep.mubr.f32.mxu0 0.0
        %2269 = vmatmul.mubr.f32.gmra.mrb[0].mxu0 %v1086
        %v2270 = vpop.f32.mrb[0].mxu0
        %v2271 = vadd.f32 0.0, %v2270
        %v2272 = vpop.f32.mrb[0].mxu0
        %2273 = vmatprep.mubr.f32.mxu0 0.0
        %2274 = vmatmul.mubr.f32.gmra.mrb[0].mxu0 %v1088
        %v2275 = vpop.f32.mrb[0].mxu0
        %v2276 = vadd.f32 0.0, %v2275
        %v2277 = vpop.f32.mrb[0].mxu0
        %2278 = vmatprep.mubr.f32.mxu0 0.0
        %2279 = vmatmul.mubr.f32.gmra.mrb[0].mxu0 %v1090
        %v2280 = vpop.f32.mrb[0].mxu0
        %v2281 = vadd.f32 0.0, %v2280
        %v2282 = vpop.f32.mrb[0].mxu0
        %2283 = vmatprep.mubr.f32.mxu0 0.0
        %2284 = vmatmul.mubr.f32.gmra.mrb[0].mxu0 %v1092
        %v2285 = vpop.f32.mrb[0].mxu0
        %v2286 = vadd.f32 0.0, %v2285
        %v2287 = vpop.f32.mrb[0].mxu0
        %2288 = vmatprep.mubr.f32.mxu0 0.0
        %2289 = vmatmul.mubr.f32.gmra.mrb[0].mxu0 %v1094
        %v2290 = vpop.f32.mrb[0].mxu0
        %v2291 = vadd.f32 0.0, %v2290
        %v2292 = vpop.f32.mrb[0].mxu0
        %2293 = vmatprep.mubr.f32.mxu0 0.0
        %2294 = vmatmul.mubr.f32.gmra.mrb[0].mxu0 %v1096
        %v2295 = vpop.f32.mrb[0].mxu0
        %v2296 = vadd.f32 0.0, %v2295
        %v2297 = vpop.f32.mrb[0].mxu0
        %2298 = vmatprep.mubr.f32.mxu0 0.0
        %2299 = vmatmul.mubr.f32.gmra.mrb[0].mxu0 %v1098
        %v2300 = vpop.f32.mrb[0].mxu0
        %v2301 = vadd.f32 0.0, %v2300
        %v2302 = vpop.f32.mrb[0].mxu0
        %2303 = vmatprep.mubr.f32.mxu0 0.0
        %2304 = vmatmul.mubr.f32.gmra.mrb[0].mxu0 %v1100
        %v2305 = vpop.f32.mrb[0].mxu0
        %v2306 = vadd.f32 0.0, %v2305
        %v2307 = vpop.f32.mrb[0].mxu0
        %2308 = vmatprep.mubr.f32.mxu0 0.0
        %2309 = vmatmul.mubr.f32.gmra.mrb[0].mxu0 %v1102
        %v2310 = vpop.f32.mrb[0].mxu0
        %v2311 = vadd.f32 0.0, %v2310
        %v2312 = vpop.f32.mrb[0].mxu0
        %2313 = vmatprep.mubr.f32.mxu0 0.0
        %2314 = vmatmul.mubr.f32.gmra.mrb[0].mxu0 %v1104
        %v2315 = vpop.f32.mrb[0].mxu0
        %v2316 = vadd.f32 0.0, %v2315
        %v2317 = vpop.f32.mrb[0].mxu0
        %2318 = vmatprep.mubr.f32.mxu0 0.0
        %2319 = vmatmul.mubr.f32.gmra.mrb[0].mxu0 %v1106
        %v2320 = vpop.f32.mrb[0].mxu0
        %v2321 = vadd.f32 0.0, %v2320
        %v2322 = vpop.f32.mrb[0].mxu0
        %2323 = vmatprep.mubr.f32.mxu0 0.0
        %2324 = vmatmul.mubr.f32.gmra.mrb[0].mxu0 %v1108
        %v2325 = vpop.f32.mrb[0].mxu0
        %v2326 = vadd.f32 0.0, %v2325
        %v2327 = vpop.f32.mrb[0].mxu0
        %2328 = vmatprep.mubr.f32.mxu0 0.0
        %2329 = vmatmul.mubr.f32.gmra.mrb[0].mxu0 %v1110
        %v2330 = vpop.f32.mrb[0].mxu0
        %v2331 = vadd.f32 0.0, %v2330
        %v2332 = vpop.f32.mrb[0].mxu0
        %2333 = vmatprep.mubr.f32.mxu0 0.0
        %2334 = vmatmul.mubr.f32.gmra.mrb[0].mxu0 %v1112
        %v2335 = vpop.f32.mrb[0].mxu0
        %v2336 = vadd.f32 0.0, %v2335
        %v2337 = vpop.f32.mrb[0].mxu0
        %2338 = vmatprep.mubr.f32.mxu0 0.0
        %2339 = vmatmul.mubr.f32.gmra.mrb[0].mxu0 %v1599
        %v2340 = vpop.f32.mrb[0].mxu0
        %v2341 = vadd.f32 0.0, %v2340
        %v2342 = vpop.f32.mrb[0].mxu0
        %2343 = vmatprep.mubr.f32.mxu0 0.0
        %2344 = vmatmul.mubr.f32.gmra.mrb[0].mxu0 %v1601
        %v2345 = vpop.f32.mrb[0].mxu0
        %v2346 = vadd.f32 0.0, %v2345
        %v2347 = vpop.f32.mrb[0].mxu0
        %2348 = vdwg.mxu0
        %v2349 = vadd.f32 %v2121, %v2271
        %v2350 = vadd.f32 %v2126, %v2276
        %v2351 = vadd.f32 %v2131, %v2281
        %v2352 = vadd.f32 %v2136, %v2286
        %v2353 = vadd.f32 %v2141, %v2291
        %v2354 = vadd.f32 %v2146, %v2296
        %v2355 = vadd.f32 %v2151, %v2301
        %v2356 = vadd.f32 %v2156, %v2306
        %v2357 = vadd.f32 %v2161, %v2311
        %v2358 = vadd.f32 %v2166, %v2316
        %v2359 = vadd.f32 %v2171, %v2321
        %v2360 = vadd.f32 %v2176, %v2326
        %v2361 = vadd.f32 %v2181, %v2331
        %v2362 = vadd.f32 %v2186, %v2336
        %v2363 = vadd.f32 %v2191, %v2341
        %v2364 = vadd.f32 %v2196, %v2346
        %v2365 = vld [vmem:[%s5] sm:$0xf]
        %v2366 = vsel %vm1081, %v1076, 0
        %v2368 = vsel %vm1081, %v1078, 0
        %v2371 = vsel %vm1114, %v2365, 0
        %2373 = vmatprep.subr.mxu0 0.0
        %2374 = vmatpush1.msra.mxu0 %v2371
        %2375 = vmatprep.subr.mxu0 0.0
        %2376 = vmatpush1.msra.mxu0 0.0
        %2377 = vmatprep.subr.mxu0 0.0
        %2378 = vmatpush1.msra.mxu0 0.0
        %2379 = vmatprep.subr.mxu0 0.0
        %2380 = vmatpush1.msra.mxu0 0.0
        %2381 = vmatprep.subr.mxu0 0.0
        %2382 = vmatpush1.msra.mxu0 0.0
        %2383 = vmatprep.subr.mxu0 0.0
        %2384 = vmatpush1.msra.mxu0 0.0
        %2385 = vmatprep.subr.mxu0 0.0
        %2386 = vmatpush1.msra.mxu0 0.0
        %2387 = vmatprep.subr.mxu0 0.0
        %2388 = vmatpush1.msra.mxu0 0.0
        %2389 = vmatprep.subr.mxu0 0.0
        %2390 = vmatpush1.msra.mxu0 0.0
        %2391 = vmatprep.subr.mxu0 0.0
        %2392 = vmatpush1.msra.mxu0 0.0
        %2393 = vmatprep.subr.mxu0 0.0
        %2394 = vmatpush1.msra.mxu0 0.0
        %2395 = vmatprep.subr.mxu0 0.0
        %2396 = vmatpush1.msra.mxu0 0.0
        %2397 = vmatprep.subr.mxu0 0.0
        %2398 = vmatpush1.msra.mxu0 0.0
        %2399 = vmatprep.subr.mxu0 0.0
        %2400 = vmatpush1.msra.mxu0 0.0
        %2401 = vmatprep.subr.mxu0 0.0
        %2402 = vmatpush1.msra.mxu0 0.0
        %2403 = vmatprep.subr.mxu0 0.0
        %2404 = vmatpush1.msra.mxu0 0.0
        %2405 = vmatprep.subr.mxu0 0.0
        %2406 = vmatpush1.msra.mxu0 0.0
        %2407 = vmatprep.subr.mxu0 0.0
        %2408 = vmatpush1.msra.mxu0 0.0
        %2409 = vmatprep.subr.mxu0 0.0
        %2410 = vmatpush1.msra.mxu0 0.0
        %2411 = vmatprep.subr.mxu0 0.0
        %2412 = vmatpush1.msra.mxu0 0.0
        %2413 = vmatprep.subr.mxu0 0.0
        %2414 = vmatpush1.msra.mxu0 0.0
        %2415 = vmatprep.subr.mxu0 0.0
        %2416 = vmatpush1.msra.mxu0 0.0
        %2417 = vmatprep.subr.mxu0 0.0
        %2418 = vmatpush1.msra.mxu0 0.0
        %2419 = vmatprep.subr.mxu0 0.0
        %2420 = vmatpush1.msra.mxu0 0.0
        %2421 = vmatprep.subr.mxu0 0.0
        %2422 = vmatpush1.msra.mxu0 0.0
        %2423 = vmatprep.subr.mxu0 0.0
        %2424 = vmatpush1.msra.mxu0 0.0
        %2425 = vmatprep.subr.mxu0 0.0
        %2426 = vmatpush1.msra.mxu0 0.0
        %2427 = vmatprep.subr.mxu0 0.0
        %2428 = vmatpush1.msra.mxu0 0.0
        %2429 = vmatprep.subr.mxu0 0.0
        %2430 = vmatpush1.msra.mxu0 0.0
        %2431 = vmatprep.subr.mxu0 0.0
        %2432 = vmatpush1.msra.mxu0 0.0
        %2433 = vmatprep.subr.mxu0 0.0
        %2434 = vmatpush1.msra.mxu0 0.0
        %2435 = vmatprep.subr.mxu0 0.0
        %2436 = vmatpush1.msra.mxu0 0.0
        %2437 = vmatprep.mubr.f32.mxu0 0.0
        %2438 = vmatmul.mubr.f32.gmra.mrb[0].mxu0 %v1271
        %v2439 = vpop.f32.mrb[0].mxu0
        %v2440 = vadd.f32 0.0, %v2439
        %v2441 = vpop.f32.mrb[0].mxu0
        %2442 = vmatprep.mubr.f32.mxu0 0.0
        %2443 = vmatmul.mubr.f32.gmra.mrb[0].mxu0 %v1273
        %v2444 = vpop.f32.mrb[0].mxu0
        %v2445 = vadd.f32 0.0, %v2444
        %v2446 = vpop.f32.mrb[0].mxu0
        %2447 = vmatprep.mubr.f32.mxu0 0.0
        %2448 = vmatmul.mubr.f32.gmra.mrb[0].mxu0 %v1275
        %v2449 = vpop.f32.mrb[0].mxu0
        %v2450 = vadd.f32 0.0, %v2449
        %v2451 = vpop.f32.mrb[0].mxu0
        %2452 = vmatprep.mubr.f32.mxu0 0.0
        %2453 = vmatmul.mubr.f32.gmra.mrb[0].mxu0 %v1277
        %v2454 = vpop.f32.mrb[0].mxu0
        %v2455 = vadd.f32 0.0, %v2454
        %v2456 = vpop.f32.mrb[0].mxu0
        %2457 = vmatprep.mubr.f32.mxu0 0.0
        %2458 = vmatmul.mubr.f32.gmra.mrb[0].mxu0 %v1279
        %v2459 = vpop.f32.mrb[0].mxu0
        %v2460 = vadd.f32 0.0, %v2459
        %v2461 = vpop.f32.mrb[0].mxu0
        %2462 = vmatprep.mubr.f32.mxu0 0.0
        %2463 = vmatmul.mubr.f32.gmra.mrb[0].mxu0 %v1281
        %v2464 = vpop.f32.mrb[0].mxu0
        %v2465 = vadd.f32 0.0, %v2464
        %v2466 = vpop.f32.mrb[0].mxu0
        %2467 = vmatprep.mubr.f32.mxu0 0.0
        %2468 = vmatmul.mubr.f32.gmra.mrb[0].mxu0 %v1283
        %v2469 = vpop.f32.mrb[0].mxu0
        %v2470 = vadd.f32 0.0, %v2469
        %v2471 = vpop.f32.mrb[0].mxu0
        %2472 = vmatprep.mubr.f32.mxu0 0.0
        %2473 = vmatmul.mubr.f32.gmra.mrb[0].mxu0 %v1285
        %v2474 = vpop.f32.mrb[0].mxu0
        %v2475 = vadd.f32 0.0, %v2474
        %v2476 = vpop.f32.mrb[0].mxu0
        %2477 = vmatprep.mubr.f32.mxu0 0.0
        %2478 = vmatmul.mubr.f32.gmra.mrb[0].mxu0 %v1287
        %v2479 = vpop.f32.mrb[0].mxu0
        %v2480 = vadd.f32 0.0, %v2479
        %v2481 = vpop.f32.mrb[0].mxu0
        %2482 = vmatprep.mubr.f32.mxu0 0.0
        %2483 = vmatmul.mubr.f32.gmra.mrb[0].mxu0 %v1289
        %v2484 = vpop.f32.mrb[0].mxu0
        %v2485 = vadd.f32 0.0, %v2484
        %v2486 = vpop.f32.mrb[0].mxu0
        %2487 = vmatprep.mubr.f32.mxu0 0.0
        %2488 = vmatmul.mubr.f32.gmra.mrb[0].mxu0 %v1291
        %v2489 = vpop.f32.mrb[0].mxu0
        %v2490 = vadd.f32 0.0, %v2489
        %v2491 = vpop.f32.mrb[0].mxu0
        %2492 = vmatprep.mubr.f32.mxu0 0.0
        %2493 = vmatmul.mubr.f32.gmra.mrb[0].mxu0 %v1293
        %v2494 = vpop.f32.mrb[0].mxu0
        %v2495 = vadd.f32 0.0, %v2494
        %v2496 = vpop.f32.mrb[0].mxu0
        %2497 = vmatprep.mubr.f32.mxu0 0.0
        %2498 = vmatmul.mubr.f32.gmra.mrb[0].mxu0 %v1295
        %v2499 = vpop.f32.mrb[0].mxu0
        %v2500 = vadd.f32 0.0, %v2499
        %v2501 = vpop.f32.mrb[0].mxu0
        %2502 = vmatprep.mubr.f32.mxu0 0.0
        %2503 = vmatmul.mubr.f32.gmra.mrb[0].mxu0 %v1297
        %v2504 = vpop.f32.mrb[0].mxu0
        %v2505 = vadd.f32 0.0, %v2504
        %v2506 = vpop.f32.mrb[0].mxu0
        %2507 = vmatprep.mubr.f32.mxu0 0.0
        %2508 = vmatmul.mubr.f32.gmra.mrb[0].mxu0 %v2366
        %v2509 = vpop.f32.mrb[0].mxu0
        %v2510 = vadd.f32 0.0, %v2509
        %v2511 = vpop.f32.mrb[0].mxu0
        %2512 = vmatprep.mubr.f32.mxu0 0.0
        %2513 = vmatmul.mubr.f32.gmra.mrb[0].mxu0 %v2368
        %v2514 = vpop.f32.mrb[0].mxu0
        %v2515 = vadd.f32 0.0, %v2514
        %v2516 = vpop.f32.mrb[0].mxu0
        %2517 = vdwg.mxu0
        %v2518 = vadd.f32 %v2349, %v2440
        %v2519 = vadd.f32 %v2350, %v2445
        %v2520 = vadd.f32 %v2351, %v2450
        %v2521 = vadd.f32 %v2352, %v2455
        %v2522 = vadd.f32 %v2353, %v2460
        %v2523 = vadd.f32 %v2354, %v2465
        %v2524 = vadd.f32 %v2355, %v2470
        %v2525 = vadd.f32 %v2356, %v2475
        %v2526 = vadd.f32 %v2357, %v2480
        %v2527 = vadd.f32 %v2358, %v2485
        %v2528 = vadd.f32 %v2359, %v2490
        %v2529 = vadd.f32 %v2360, %v2495
        %v2530 = vadd.f32 %v2361, %v2500
        %v2531 = vadd.f32 %v2362, %v2505
        %v2532 = vadd.f32 %v2363, %v2510
        %v2533 = vadd.f32 %v2364, %v2515
        %v2534 = vld [vmem:[%s6] sm:$0x1]
        %v2536 = vlaneseq
        %v2537 = vshrl.u32 %v2536, 7
        %v2538 = vsub.s32 0, %v2537
        %v2539 = vrot.slane %v2534, %v2538
        %v2541 = vmul.f32 %v1185, %v2539
        %v2542 = vmul.f32 %v1190, %v2539
        %v2543 = vmul.f32 %v1195, %v2539
        %v2544 = vmul.f32 %v1200, %v2539
        %v2545 = vmul.f32 %v1205, %v2539
        %v2546 = vmul.f32 %v1210, %v2539
        %v2547 = vmul.f32 %v1215, %v2539
        %v2548 = vmul.f32 %v1220, %v2539
        %v2549 = vmul.f32 %v1225, %v2539
        %v2550 = vmul.f32 %v1230, %v2539
        %v2551 = vmul.f32 %v1235, %v2539
        %v2552 = vmul.f32 %v1240, %v2539
        %v2553 = vmul.f32 %v1245, %v2539
        %v2554 = vmul.f32 %v1250, %v2539
        %v2555 = vmul.f32 %v1255, %v2539
        %v2556 = vmul.f32 %v1260, %v2539
        %v2557 = vld [vmem:[%s7] sm:$0x1]
        %v2559 = vlaneseq
        %v2560 = vshrl.u32 %v2559, 7
        %v2561 = vsub.s32 0, %v2560
        %v2562 = vrot.slane %v2557, %v2561
        %v2564 = vadd.f32 %v2541, %v2562
        %v2565 = vadd.f32 %v2542, %v2562
        %v2566 = vadd.f32 %v2543, %v2562
        %v2567 = vadd.f32 %v2544, %v2562
        %v2568 = vadd.f32 %v2545, %v2562
        %v2569 = vadd.f32 %v2546, %v2562
        %v2570 = vadd.f32 %v2547, %v2562
        %v2571 = vadd.f32 %v2548, %v2562
        %v2572 = vadd.f32 %v2549, %v2562
        %v2573 = vadd.f32 %v2550, %v2562
        %v2574 = vadd.f32 %v2551, %v2562
        %v2575 = vadd.f32 %v2552, %v2562
        %v2576 = vadd.f32 %v2553, %v2562
        %v2577 = vadd.f32 %v2554, %v2562
        %v2578 = vadd.f32 %v2555, %v2562
        %v2579 = vadd.f32 %v2556, %v2562
        %v2580 = vmax.f32 %v2564, 0.0
        %v2581 = vmax.f32 %v2565, 0.0
        %v2582 = vmax.f32 %v2566, 0.0
        %v2583 = vmax.f32 %v2567, 0.0
        %v2584 = vmax.f32 %v2568, 0.0
        %v2585 = vmax.f32 %v2569, 0.0
        %v2586 = vmax.f32 %v2570, 0.0
        %v2587 = vmax.f32 %v2571, 0.0
        %v2588 = vmax.f32 %v2572, 0.0
        %v2589 = vmax.f32 %v2573, 0.0
        %v2590 = vmax.f32 %v2574, 0.0
        %v2591 = vmax.f32 %v2575, 0.0
        %v2592 = vmax.f32 %v2576, 0.0
        %v2593 = vmax.f32 %v2577, 0.0
        %v2594 = vmax.f32 %v2578, 0.0
        %v2595 = vmax.f32 %v2579, 0.0
        %v2596 = vld [vmem:[%s8] sm:$0xf]
        %v2598 = vsel %vm1081, %v2580, 0
        %v2601 = vsel %vm1081, %v2581, 0
        %v2604 = vsel %vm1081, %v2582, 0
        %v2607 = vsel %vm1081, %v2583, 0
        %v2610 = vsel %vm1081, %v2584, 0
        %v2613 = vsel %vm1081, %v2585, 0
        %v2616 = vsel %vm1081, %v2586, 0
        %v2619 = vsel %vm1081, %v2587, 0
        %v2622 = vsel %vm1081, %v2588, 0
        %v2625 = vsel %vm1081, %v2589, 0
        %v2628 = vsel %vm1081, %v2590, 0
        %v2631 = vsel %vm1081, %v2591, 0
        %v2634 = vsel %vm1081, %v2592, 0
        %v2637 = vsel %vm1081, %v2593, 0
        %v2640 = vsel %vm1081, %v2594, 0
        %v2643 = vsel %vm1081, %v2595, 0
        %v2646 = vsel %vm1114, %v2596, 0
        %2648 = vmatprep.subr.mxu0 0.0
        %2649 = vmatpush1.msra.mxu0 %v2646
        %2650 = vmatprep.subr.mxu0 0.0
        %2651 = vmatpush1.msra.mxu0 0.0
        %2652 = vmatprep.subr.mxu0 0.0
        %2653 = vmatpush1.msra.mxu0 0.0
        %2654 = vmatprep.subr.mxu0 0.0
        %2655 = vmatpush1.msra.mxu0 0.0
        %2656 = vmatprep.subr.mxu0 0.0
        %2657 = vmatpush1.msra.mxu0 0.0
        %2658 = vmatprep.subr.mxu0 0.0
        %2659 = vmatpush1.msra.mxu0 0.0
        %2660 = vmatprep.subr.mxu0 0.0
        %2661 = vmatpush1.msra.mxu0 0.0
        %2662 = vmatprep.subr.mxu0 0.0
        %2663 = vmatpush1.msra.mxu0 0.0
        %2664 = vmatprep.subr.mxu0 0.0
        %2665 = vmatpush1.msra.mxu0 0.0
        %2666 = vmatprep.subr.mxu0 0.0
        %2667 = vmatpush1.msra.mxu0 0.0
        %2668 = vmatprep.subr.mxu0 0.0
        %2669 = vmatpush1.msra.mxu0 0.0
        %2670 = vmatprep.subr.mxu0 0.0
        %2671 = vmatpush1.msra.mxu0 0.0
        %2672 = vmatprep.subr.mxu0 0.0
        %2673 = vmatpush1.msra.mxu0 0.0
        %2674 = vmatprep.subr.mxu0 0.0
        %2675 = vmatpush1.msra.mxu0 0.0
        %2676 = vmatprep.subr.mxu0 0.0
        %2677 = vmatpush1.msra.mxu0 0.0
        %2678 = vmatprep.subr.mxu0 0.0
        %2679 = vmatpush1.msra.mxu0 0.0
        %2680 = vmatprep.subr.mxu0 0.0
        %2681 = vmatpush1.msra.mxu0 0.0
        %2682 = vmatprep.subr.mxu0 0.0
        %2683 = vmatpush1.msra.mxu0 0.0
        %2684 = vmatprep.subr.mxu0 0.0
        %2685 = vmatpush1.msra.mxu0 0.0
        %2686 = vmatprep.subr.mxu0 0.0
        %2687 = vmatpush1.msra.mxu0 0.0
        %2688 = vmatprep.subr.mxu0 0.0
        %2689 = vmatpush1.msra.mxu0 0.0
        %2690 = vmatprep.subr.mxu0 0.0
        %2691 = vmatpush1.msra.mxu0 0.0
        %2692 = vmatprep.subr.mxu0 0.0
        %2693 = vmatpush1.msra.mxu0 0.0
        %2694 = vmatprep.subr.mxu0 0.0
        %2695 = vmatpush1.msra.mxu0 0.0
        %2696 = vmatprep.subr.mxu0 0.0
        %2697 = vmatpush1.msra.mxu0 0.0
        %2698 = vmatprep.subr.mxu0 0.0
        %2699 = vmatpush1.msra.mxu0 0.0
        %2700 = vmatprep.subr.mxu0 0.0
        %2701 = vmatpush1.msra.mxu0 0.0
        %2702 = vmatprep.subr.mxu0 0.0
        %2703 = vmatpush1.msra.mxu0 0.0
        %2704 = vmatprep.subr.mxu0 0.0
        %2705 = vmatpush1.msra.mxu0 0.0
        %2706 = vmatprep.subr.mxu0 0.0
        %2707 = vmatpush1.msra.mxu0 0.0
        %2708 = vmatprep.subr.mxu0 0.0
        %2709 = vmatpush1.msra.mxu0 0.0
        %2710 = vmatprep.subr.mxu0 0.0
        %2711 = vmatpush1.msra.mxu0 0.0
        %2712 = vmatprep.mubr.f32.mxu0 0.0
        %2713 = vmatmul.mubr.f32.gmra.mrb[0].mxu0 %v2598
        %v2714 = vpop.f32.mrb[0].mxu0
        %v2715 = vadd.f32 0.0, %v2714
        %v2716 = vpop.f32.mrb[0].mxu0
        %2717 = vmatprep.mubr.f32.mxu0 0.0
        %2718 = vmatmul.mubr.f32.gmra.mrb[0].mxu0 %v2601
        %v2719 = vpop.f32.mrb[0].mxu0
        %v2720 = vadd.f32 0.0, %v2719
        %v2721 = vpop.f32.mrb[0].mxu0
        %2722 = vmatprep.mubr.f32.mxu0 0.0
        %2723 = vmatmul.mubr.f32.gmra.mrb[0].mxu0 %v2604
        %v2724 = vpop.f32.mrb[0].mxu0
        %v2725 = vadd.f32 0.0, %v2724
        %v2726 = vpop.f32.mrb[0].mxu0
        %2727 = vmatprep.mubr.f32.mxu0 0.0
        %2728 = vmatmul.mubr.f32.gmra.mrb[0].mxu0 %v2607
        %v2729 = vpop.f32.mrb[0].mxu0
        %v2730 = vadd.f32 0.0, %v2729
        %v2731 = vpop.f32.mrb[0].mxu0
        %2732 = vmatprep.mubr.f32.mxu0 0.0
        %2733 = vmatmul.mubr.f32.gmra.mrb[0].mxu0 %v2610
        %v2734 = vpop.f32.mrb[0].mxu0
        %v2735 = vadd.f32 0.0, %v2734
        %v2736 = vpop.f32.mrb[0].mxu0
        %2737 = vmatprep.mubr.f32.mxu0 0.0
        %2738 = vmatmul.mubr.f32.gmra.mrb[0].mxu0 %v2613
        %v2739 = vpop.f32.mrb[0].mxu0
        %v2740 = vadd.f32 0.0, %v2739
        %v2741 = vpop.f32.mrb[0].mxu0
        %2742 = vmatprep.mubr.f32.mxu0 0.0
        %2743 = vmatmul.mubr.f32.gmra.mrb[0].mxu0 %v2616
        %v2744 = vpop.f32.mrb[0].mxu0
        %v2745 = vadd.f32 0.0, %v2744
        %v2746 = vpop.f32.mrb[0].mxu0
        %2747 = vmatprep.mubr.f32.mxu0 0.0
        %2748 = vmatmul.mubr.f32.gmra.mrb[0].mxu0 %v2619
        %v2749 = vpop.f32.mrb[0].mxu0
        %v2750 = vadd.f32 0.0, %v2749
        %v2751 = vpop.f32.mrb[0].mxu0
        %2752 = vmatprep.mubr.f32.mxu0 0.0
        %2753 = vmatmul.mubr.f32.gmra.mrb[0].mxu0 %v2622
        %v2754 = vpop.f32.mrb[0].mxu0
        %v2755 = vadd.f32 0.0, %v2754
        %v2756 = vpop.f32.mrb[0].mxu0
        %2757 = vmatprep.mubr.f32.mxu0 0.0
        %2758 = vmatmul.mubr.f32.gmra.mrb[0].mxu0 %v2625
        %v2759 = vpop.f32.mrb[0].mxu0
        %v2760 = vadd.f32 0.0, %v2759
        %v2761 = vpop.f32.mrb[0].mxu0
        %2762 = vmatprep.mubr.f32.mxu0 0.0
        %2763 = vmatmul.mubr.f32.gmra.mrb[0].mxu0 %v2628
        %v2764 = vpop.f32.mrb[0].mxu0
        %v2765 = vadd.f32 0.0, %v2764
        %v2766 = vpop.f32.mrb[0].mxu0
        %2767 = vmatprep.mubr.f32.mxu0 0.0
        %2768 = vmatmul.mubr.f32.gmra.mrb[0].mxu0 %v2631
        %v2769 = vpop.f32.mrb[0].mxu0
        %v2770 = vadd.f32 0.0, %v2769
        %v2771 = vpop.f32.mrb[0].mxu0
        %2772 = vmatprep.mubr.f32.mxu0 0.0
        %2773 = vmatmul.mubr.f32.gmra.mrb[0].mxu0 %v2634
        %v2774 = vpop.f32.mrb[0].mxu0
        %v2775 = vadd.f32 0.0, %v2774
        %v2776 = vpop.f32.mrb[0].mxu0
        %2777 = vmatprep.mubr.f32.mxu0 0.0
        %2778 = vmatmul.mubr.f32.gmra.mrb[0].mxu0 %v2637
        %v2779 = vpop.f32.mrb[0].mxu0
        %v2780 = vadd.f32 0.0, %v2779
        %v2781 = vpop.f32.mrb[0].mxu0
        %2782 = vmatprep.mubr.f32.mxu0 0.0
        %2783 = vmatmul.mubr.f32.gmra.mrb[0].mxu0 %v2640
        %v2784 = vpop.f32.mrb[0].mxu0
        %v2785 = vadd.f32 0.0, %v2784
        %v2786 = vpop.f32.mrb[0].mxu0
        %2787 = vmatprep.mubr.f32.mxu0 0.0
        %2788 = vmatmul.mubr.f32.gmra.mrb[0].mxu0 %v2643
        %v2789 = vpop.f32.mrb[0].mxu0
        %v2790 = vadd.f32 0.0, %v2789
        %v2791 = vpop.f32.mrb[0].mxu0
        %2792 = vdwg.mxu0
        %v2793 = vld [vmem:[%s9] sm:$0x1]
        %v2795 = vlaneseq
        %v2796 = vshrl.u32 %v2795, 7
        %v2797 = vsub.s32 0, %v2796
        %v2798 = vrot.slane %v2793, %v2797
        %v2800 = vmul.f32 %v2715, %v2798
        %v2801 = vmul.f32 %v2720, %v2798
        %v2802 = vmul.f32 %v2725, %v2798
        %v2803 = vmul.f32 %v2730, %v2798
        %v2804 = vmul.f32 %v2735, %v2798
        %v2805 = vmul.f32 %v2740, %v2798
        %v2806 = vmul.f32 %v2745, %v2798
        %v2807 = vmul.f32 %v2750, %v2798
        %v2808 = vmul.f32 %v2755, %v2798
        %v2809 = vmul.f32 %v2760, %v2798
        %v2810 = vmul.f32 %v2765, %v2798
        %v2811 = vmul.f32 %v2770, %v2798
        %v2812 = vmul.f32 %v2775, %v2798
        %v2813 = vmul.f32 %v2780, %v2798
        %v2814 = vmul.f32 %v2785, %v2798
        %v2815 = vmul.f32 %v2790, %v2798
        %v2816 = vld [vmem:[%s10] sm:$0x1]
        %v2818 = vlaneseq
        %v2819 = vshrl.u32 %v2818, 7
        %v2820 = vsub.s32 0, %v2819
        %v2821 = vrot.slane %v2816, %v2820
        %v2823 = vadd.f32 %v2800, %v2821
        %v2824 = vadd.f32 %v2801, %v2821
        %v2825 = vadd.f32 %v2802, %v2821
        %v2826 = vadd.f32 %v2803, %v2821
        %v2827 = vadd.f32 %v2804, %v2821
        %v2828 = vadd.f32 %v2805, %v2821
        %v2829 = vadd.f32 %v2806, %v2821
        %v2830 = vadd.f32 %v2807, %v2821
        %v2831 = vadd.f32 %v2808, %v2821
        %v2832 = vadd.f32 %v2809, %v2821
        %v2833 = vadd.f32 %v2810, %v2821
        %v2834 = vadd.f32 %v2811, %v2821
        %v2835 = vadd.f32 %v2812, %v2821
        %v2836 = vadd.f32 %v2813, %v2821
        %v2837 = vadd.f32 %v2814, %v2821
        %v2838 = vadd.f32 %v2815, %v2821
        %v2839 = vmax.f32 %v2823, 0.0
        %v2840 = vmax.f32 %v2824, 0.0
        %v2841 = vmax.f32 %v2825, 0.0
        %v2842 = vmax.f32 %v2826, 0.0
        %v2843 = vmax.f32 %v2827, 0.0
        %v2844 = vmax.f32 %v2828, 0.0
        %v2845 = vmax.f32 %v2829, 0.0
        %v2846 = vmax.f32 %v2830, 0.0
        %v2847 = vmax.f32 %v2831, 0.0
        %v2848 = vmax.f32 %v2832, 0.0
        %v2849 = vmax.f32 %v2833, 0.0
        %v2850 = vmax.f32 %v2834, 0.0
        %v2851 = vmax.f32 %v2835, 0.0
        %v2852 = vmax.f32 %v2836, 0.0
        %v2853 = vmax.f32 %v2837, 0.0
        %v2854 = vmax.f32 %v2838, 0.0
        %vm2855 = vcmask 64512
        %2856 = vst.msk [vmem:[%s452] sm:$0xff] %vm2855, %v2839
        %2857 = vst.msk [vmem:[%s452 + $0x8] sm:$0xff] %vm2855, %v2840
        %2858 = vst.msk [vmem:[%s452 + $0x10] sm:$0xff] %vm2855, %v2841
        %2859 = vst.msk [vmem:[%s452 + $0x18] sm:$0xff] %vm2855, %v2842
        %2860 = vst.msk [vmem:[%s452 + $0x20] sm:$0xff] %vm2855, %v2843
        %2861 = vst.msk [vmem:[%s452 + $0x28] sm:$0xff] %vm2855, %v2844
        %2862 = vst.msk [vmem:[%s452 + $0x30] sm:$0xff] %vm2855, %v2845
        %2863 = vst.msk [vmem:[%s452 + $0x38] sm:$0xff] %vm2855, %v2846
        %2864 = vst.msk [vmem:[%s452 + $0x40] sm:$0xff] %vm2855, %v2847
        %2865 = vst.msk [vmem:[%s452 + $0x48] sm:$0xff] %vm2855, %v2848
        %2866 = vst.msk [vmem:[%s452 + $0x50] sm:$0xff] %vm2855, %v2849
        %2867 = vst.msk [vmem:[%s452 + $0x58] sm:$0xff] %vm2855, %v2850
        %2868 = vst.msk [vmem:[%s452 + $0x60] sm:$0xff] %vm2855, %v2851
        %2869 = vst.msk [vmem:[%s452 + $0x68] sm:$0xff] %vm2855, %v2852
        %2870 = vst.msk [vmem:[%s452 + $0x70] sm:$0xff] %vm2855, %v2853
        %2871 = vst.msk [vmem:[%s452 + $0x78] sm:$0xff] %vm2855, %v2854
        %v2872 = vld [vmem:[%s6] sm:$0x1]
        %v2874 = vlaneseq
        %v2875 = vshrl.u32 %v2874, 7
        %v2876 = vsub.s32 0, %v2875
        %v2877 = vrot.slane %v2872, %v2876
        %v2879 = vmul.f32 %v1517, %v2877
        %v2880 = vmul.f32 %v1522, %v2877
        %v2881 = vmul.f32 %v1527, %v2877
        %v2882 = vmul.f32 %v1532, %v2877
        %v2883 = vmul.f32 %v1537, %v2877
        %v2884 = vmul.f32 %v1542, %v2877
        %v2885 = vmul.f32 %v1547, %v2877
        %v2886 = vmul.f32 %v1552, %v2877
        %v2887 = vmul.f32 %v1557, %v2877
        %v2888 = vmul.f32 %v1562, %v2877
        %v2889 = vmul.f32 %v1567, %v2877
        %v2890 = vmul.f32 %v1572, %v2877
        %v2891 = vmul.f32 %v1577, %v2877
        %v2892 = vmul.f32 %v1582, %v2877
        %v2893 = vmul.f32 %v1587, %v2877
        %v2894 = vmul.f32 %v1592, %v2877
        %v2895 = vld [vmem:[%s7] sm:$0x1]
        %v2897 = vlaneseq
        %v2898 = vshrl.u32 %v2897, 7
        %v2899 = vsub.s32 0, %v2898
        %v2900 = vrot.slane %v2895, %v2899
        %v2902 = vadd.f32 %v2879, %v2900
        %v2903 = vadd.f32 %v2880, %v2900
        %v2904 = vadd.f32 %v2881, %v2900
        %v2905 = vadd.f32 %v2882, %v2900
        %v2906 = vadd.f32 %v2883, %v2900
        %v2907 = vadd.f32 %v2884, %v2900
        %v2908 = vadd.f32 %v2885, %v2900
        %v2909 = vadd.f32 %v2886, %v2900
        %v2910 = vadd.f32 %v2887, %v2900
        %v2911 = vadd.f32 %v2888, %v2900
        %v2912 = vadd.f32 %v2889, %v2900
        %v2913 = vadd.f32 %v2890, %v2900
        %v2914 = vadd.f32 %v2891, %v2900
        %v2915 = vadd.f32 %v2892, %v2900
        %v2916 = vadd.f32 %v2893, %v2900
        %v2917 = vadd.f32 %v2894, %v2900
        %v2918 = vmax.f32 %v2902, 0.0
        %v2919 = vmax.f32 %v2903, 0.0
        %v2920 = vmax.f32 %v2904, 0.0
        %v2921 = vmax.f32 %v2905, 0.0
        %v2922 = vmax.f32 %v2906, 0.0
        %v2923 = vmax.f32 %v2907, 0.0
        %v2924 = vmax.f32 %v2908, 0.0
        %v2925 = vmax.f32 %v2909, 0.0
        %v2926 = vmax.f32 %v2910, 0.0
        %v2927 = vmax.f32 %v2911, 0.0
        %v2928 = vmax.f32 %v2912, 0.0
        %v2929 = vmax.f32 %v2913, 0.0
        %v2930 = vmax.f32 %v2914, 0.0
        %v2931 = vmax.f32 %v2915, 0.0
        %v2932 = vmax.f32 %v2916, 0.0
        %v2933 = vmax.f32 %v2917, 0.0
        %v2934 = vld [vmem:[%s8] sm:$0xf]
        %v2936 = vsel %vm1081, %v2918, 0
        %v2939 = vsel %vm1081, %v2919, 0
        %v2942 = vsel %vm1081, %v2920, 0
        %v2945 = vsel %vm1081, %v2921, 0
        %v2948 = vsel %vm1081, %v2922, 0
        %v2951 = vsel %vm1081, %v2923, 0
        %v2954 = vsel %vm1081, %v2924, 0
        %v2957 = vsel %vm1081, %v2925, 0
        %v2960 = vsel %vm1081, %v2926, 0
        %v2963 = vsel %vm1081, %v2927, 0
        %v2966 = vsel %vm1081, %v2928, 0
        %v2969 = vsel %vm1081, %v2929, 0
        %v2972 = vsel %vm1081, %v2930, 0
        %v2975 = vsel %vm1081, %v2931, 0
        %v2978 = vsel %vm1081, %v2932, 0
        %v2981 = vsel %vm1081, %v2933, 0
        %v2984 = vsel %vm1114, %v2934, 0
        %2986 = vmatprep.subr.mxu0 0.0
        %2987 = vmatpush1.msra.mxu0 %v2984
        %2988 = vmatprep.subr.mxu0 0.0
        %2989 = vmatpush1.msra.mxu0 0.0
        %2990 = vmatprep.subr.mxu0 0.0
        %2991 = vmatpush1.msra.mxu0 0.0
        %2992 = vmatprep.subr.mxu0 0.0
        %2993 = vmatpush1.msra.mxu0 0.0
        %2994 = vmatprep.subr.mxu0 0.0
        %2995 = vmatpush1.msra.mxu0 0.0
        %2996 = vmatprep.subr.mxu0 0.0
        %2997 = vmatpush1.msra.mxu0 0.0
        %2998 = vmatprep.subr.mxu0 0.0
        %2999 = vmatpush1.msra.mxu0 0.0
        %3000 = vmatprep.subr.mxu0 0.0
        %3001 = vmatpush1.msra.mxu0 0.0
        %3002 = vmatprep.subr.mxu0 0.0
        %3003 = vmatpush1.msra.mxu0 0.0
        %3004 = vmatprep.subr.mxu0 0.0
        %3005 = vmatpush1.msra.mxu0 0.0
        %3006 = vmatprep.subr.mxu0 0.0
        %3007 = vmatpush1.msra.mxu0 0.0
        %3008 = vmatprep.subr.mxu0 0.0
        %3009 = vmatpush1.msra.mxu0 0.0
        %3010 = vmatprep.subr.mxu0 0.0
        %3011 = vmatpush1.msra.mxu0 0.0
        %3012 = vmatprep.subr.mxu0 0.0
        %3013 = vmatpush1.msra.mxu0 0.0
        %3014 = vmatprep.subr.mxu0 0.0
        %3015 = vmatpush1.msra.mxu0 0.0
        %3016 = vmatprep.subr.mxu0 0.0
        %3017 = vmatpush1.msra.mxu0 0.0
        %3018 = vmatprep.subr.mxu0 0.0
        %3019 = vmatpush1.msra.mxu0 0.0
        %3020 = vmatprep.subr.mxu0 0.0
        %3021 = vmatpush1.msra.mxu0 0.0
        %3022 = vmatprep.subr.mxu0 0.0
        %3023 = vmatpush1.msra.mxu0 0.0
        %3024 = vmatprep.subr.mxu0 0.0
        %3025 = vmatpush1.msra.mxu0 0.0
        %3026 = vmatprep.subr.mxu0 0.0
        %3027 = vmatpush1.msra.mxu0 0.0
        %3028 = vmatprep.subr.mxu0 0.0
        %3029 = vmatpush1.msra.mxu0 0.0
        %3030 = vmatprep.subr.mxu0 0.0
        %3031 = vmatpush1.msra.mxu0 0.0
        %3032 = vmatprep.subr.mxu0 0.0
        %3033 = vmatpush1.msra.mxu0 0.0
        %3034 = vmatprep.subr.mxu0 0.0
        %3035 = vmatpush1.msra.mxu0 0.0
        %3036 = vmatprep.subr.mxu0 0.0
        %3037 = vmatpush1.msra.mxu0 0.0
        %3038 = vmatprep.subr.mxu0 0.0
        %3039 = vmatpush1.msra.mxu0 0.0
        %3040 = vmatprep.subr.mxu0 0.0
        %3041 = vmatpush1.msra.mxu0 0.0
        %3042 = vmatprep.subr.mxu0 0.0
        %3043 = vmatpush1.msra.mxu0 0.0
        %3044 = vmatprep.subr.mxu0 0.0
        %3045 = vmatpush1.msra.mxu0 0.0
        %3046 = vmatprep.subr.mxu0 0.0
        %3047 = vmatpush1.msra.mxu0 0.0
        %3048 = vmatprep.subr.mxu0 0.0
        %3049 = vmatpush1.msra.mxu0 0.0
        %3050 = vmatprep.mubr.f32.mxu0 0.0
        %3051 = vmatmul.mubr.f32.gmra.mrb[0].mxu0 %v2936
        %v3052 = vpop.f32.mrb[0].mxu0
        %v3053 = vadd.f32 0.0, %v3052
        %v3054 = vpop.f32.mrb[0].mxu0
        %3055 = vmatprep.mubr.f32.mxu0 0.0
        %3056 = vmatmul.mubr.f32.gmra.mrb[0].mxu0 %v2939
        %v3057 = vpop.f32.mrb[0].mxu0
        %v3058 = vadd.f32 0.0, %v3057
        %v3059 = vpop.f32.mrb[0].mxu0
        %3060 = vmatprep.mubr.f32.mxu0 0.0
        %3061 = vmatmul.mubr.f32.gmra.mrb[0].mxu0 %v2942
        %v3062 = vpop.f32.mrb[0].mxu0
        %v3063 = vadd.f32 0.0, %v3062
        %v3064 = vpop.f32.mrb[0].mxu0
        %3065 = vmatprep.mubr.f32.mxu0 0.0
        %3066 = vmatmul.mubr.f32.gmra.mrb[0].mxu0 %v2945
        %v3067 = vpop.f32.mrb[0].mxu0
        %v3068 = vadd.f32 0.0, %v3067
        %v3069 = vpop.f32.mrb[0].mxu0
        %3070 = vmatprep.mubr.f32.mxu0 0.0
        %3071 = vmatmul.mubr.f32.gmra.mrb[0].mxu0 %v2948
        %v3072 = vpop.f32.mrb[0].mxu0
        %v3073 = vadd.f32 0.0, %v3072
        %v3074 = vpop.f32.mrb[0].mxu0
        %3075 = vmatprep.mubr.f32.mxu0 0.0
        %3076 = vmatmul.mubr.f32.gmra.mrb[0].mxu0 %v2951
        %v3077 = vpop.f32.mrb[0].mxu0
        %v3078 = vadd.f32 0.0, %v3077
        %v3079 = vpop.f32.mrb[0].mxu0
        %3080 = vmatprep.mubr.f32.mxu0 0.0
        %3081 = vmatmul.mubr.f32.gmra.mrb[0].mxu0 %v2954
        %v3082 = vpop.f32.mrb[0].mxu0
        %v3083 = vadd.f32 0.0, %v3082
        %v3084 = vpop.f32.mrb[0].mxu0
        %3085 = vmatprep.mubr.f32.mxu0 0.0
        %3086 = vmatmul.mubr.f32.gmra.mrb[0].mxu0 %v2957
        %v3087 = vpop.f32.mrb[0].mxu0
        %v3088 = vadd.f32 0.0, %v3087
        %v3089 = vpop.f32.mrb[0].mxu0
        %3090 = vmatprep.mubr.f32.mxu0 0.0
        %3091 = vmatmul.mubr.f32.gmra.mrb[0].mxu0 %v2960
        %v3092 = vpop.f32.mrb[0].mxu0
        %v3093 = vadd.f32 0.0, %v3092
        %v3094 = vpop.f32.mrb[0].mxu0
        %3095 = vmatprep.mubr.f32.mxu0 0.0
        %3096 = vmatmul.mubr.f32.gmra.mrb[0].mxu0 %v2963
        %v3097 = vpop.f32.mrb[0].mxu0
        %v3098 = vadd.f32 0.0, %v3097
        %v3099 = vpop.f32.mrb[0].mxu0
        %3100 = vmatprep.mubr.f32.mxu0 0.0
        %3101 = vmatmul.mubr.f32.gmra.mrb[0].mxu0 %v2966
        %v3102 = vpop.f32.mrb[0].mxu0
        %v3103 = vadd.f32 0.0, %v3102
        %v3104 = vpop.f32.mrb[0].mxu0
        %3105 = vmatprep.mubr.f32.mxu0 0.0
        %3106 = vmatmul.mubr.f32.gmra.mrb[0].mxu0 %v2969
        %v3107 = vpop.f32.mrb[0].mxu0
        %v3108 = vadd.f32 0.0, %v3107
        %v3109 = vpop.f32.mrb[0].mxu0
        %3110 = vmatprep.mubr.f32.mxu0 0.0
        %3111 = vmatmul.mubr.f32.gmra.mrb[0].mxu0 %v2972
        %v3112 = vpop.f32.mrb[0].mxu0
        %v3113 = vadd.f32 0.0, %v3112
        %v3114 = vpop.f32.mrb[0].mxu0
        %3115 = vmatprep.mubr.f32.mxu0 0.0
        %3116 = vmatmul.mubr.f32.gmra.mrb[0].mxu0 %v2975
        %v3117 = vpop.f32.mrb[0].mxu0
        %v3118 = vadd.f32 0.0, %v3117
        %v3119 = vpop.f32.mrb[0].mxu0
        %3120 = vmatprep.mubr.f32.mxu0 0.0
        %3121 = vmatmul.mubr.f32.gmra.mrb[0].mxu0 %v2978
        %v3122 = vpop.f32.mrb[0].mxu0
        %v3123 = vadd.f32 0.0, %v3122
        %v3124 = vpop.f32.mrb[0].mxu0
        %3125 = vmatprep.mubr.f32.mxu0 0.0
        %3126 = vmatmul.mubr.f32.gmra.mrb[0].mxu0 %v2981
        %v3127 = vpop.f32.mrb[0].mxu0
        %v3128 = vadd.f32 0.0, %v3127
        %v3129 = vpop.f32.mrb[0].mxu0
        %3130 = vdwg.mxu0
        %v3131 = vld [vmem:[%s9] sm:$0x1]
        %v3133 = vlaneseq
        %v3134 = vshrl.u32 %v3133, 7
        %v3135 = vsub.s32 0, %v3134
        %v3136 = vrot.slane %v3131, %v3135
        %v3138 = vmul.f32 %v3053, %v3136
        %v3139 = vmul.f32 %v3058, %v3136
        %v3140 = vmul.f32 %v3063, %v3136
        %v3141 = vmul.f32 %v3068, %v3136
        %v3142 = vmul.f32 %v3073, %v3136
        %v3143 = vmul.f32 %v3078, %v3136
        %v3144 = vmul.f32 %v3083, %v3136
        %v3145 = vmul.f32 %v3088, %v3136
        %v3146 = vmul.f32 %v3093, %v3136
        %v3147 = vmul.f32 %v3098, %v3136
        %v3148 = vmul.f32 %v3103, %v3136
        %v3149 = vmul.f32 %v3108, %v3136
        %v3150 = vmul.f32 %v3113, %v3136
        %v3151 = vmul.f32 %v3118, %v3136
        %v3152 = vmul.f32 %v3123, %v3136
        %v3153 = vmul.f32 %v3128, %v3136
        %v3154 = vld [vmem:[%s10] sm:$0x1]
        %v3156 = vlaneseq
        %v3157 = vshrl.u32 %v3156, 7
        %v3158 = vsub.s32 0, %v3157
        %v3159 = vrot.slane %v3154, %v3158
        %v3161 = vadd.f32 %v3138, %v3159
        %v3162 = vadd.f32 %v3139, %v3159
        %v3163 = vadd.f32 %v3140, %v3159
        %v3164 = vadd.f32 %v3141, %v3159
        %v3165 = vadd.f32 %v3142, %v3159
        %v3166 = vadd.f32 %v3143, %v3159
        %v3167 = vadd.f32 %v3144, %v3159
        %v3168 = vadd.f32 %v3145, %v3159
        %v3169 = vadd.f32 %v3146, %v3159
        %v3170 = vadd.f32 %v3147, %v3159
        %v3171 = vadd.f32 %v3148, %v3159
        %v3172 = vadd.f32 %v3149, %v3159
        %v3173 = vadd.f32 %v3150, %v3159
        %v3174 = vadd.f32 %v3151, %v3159
        %v3175 = vadd.f32 %v3152, %v3159
        %v3176 = vadd.f32 %v3153, %v3159
        %v3177 = vmax.f32 %v3161, 0.0
        %v3178 = vmax.f32 %v3162, 0.0
        %v3179 = vmax.f32 %v3163, 0.0
        %v3180 = vmax.f32 %v3164, 0.0
        %v3181 = vmax.f32 %v3165, 0.0
        %v3182 = vmax.f32 %v3166, 0.0
        %v3183 = vmax.f32 %v3167, 0.0
        %v3184 = vmax.f32 %v3168, 0.0
        %v3185 = vmax.f32 %v3169, 0.0
        %v3186 = vmax.f32 %v3170, 0.0
        %v3187 = vmax.f32 %v3171, 0.0
        %v3188 = vmax.f32 %v3172, 0.0
        %v3189 = vmax.f32 %v3173, 0.0
        %v3190 = vmax.f32 %v3174, 0.0
        %v3191 = vmax.f32 %v3175, 0.0
        %v3192 = vmax.f32 %v3176, 0.0
        %s3193 = scalar_lea.vmem %s452, 128 [#allocation2]
        %3194 = vst.msk [vmem:[%s3193] sm:$0xff] %vm2855, %v3177
        %3195 = vst.msk [vmem:[%s3193 + $0x8] sm:$0xff] %vm2855, %v3178
        %3196 = vst.msk [vmem:[%s3193 + $0x10] sm:$0xff] %vm2855, %v3179
        %3197 = vst.msk [vmem:[%s3193 + $0x18] sm:$0xff] %vm2855, %v3180
        %3198 = vst.msk [vmem:[%s3193 + $0x20] sm:$0xff] %vm2855, %v3181
        %3199 = vst.msk [vmem:[%s3193 + $0x28] sm:$0xff] %vm2855, %v3182
        %3200 = vst.msk [vmem:[%s3193 + $0x30] sm:$0xff] %vm2855, %v3183
        %3201 = vst.msk [vmem:[%s3193 + $0x38] sm:$0xff] %vm2855, %v3184
        %3202 = vst.msk [vmem:[%s3193 + $0x40] sm:$0xff] %vm2855, %v3185
        %3203 = vst.msk [vmem:[%s3193 + $0x48] sm:$0xff] %vm2855, %v3186
        %3204 = vst.msk [vmem:[%s3193 + $0x50] sm:$0xff] %vm2855, %v3187
        %3205 = vst.msk [vmem:[%s3193 + $0x58] sm:$0xff] %vm2855, %v3188
        %3206 = vst.msk [vmem:[%s3193 + $0x60] sm:$0xff] %vm2855, %v3189
        %3207 = vst.msk [vmem:[%s3193 + $0x68] sm:$0xff] %vm2855, %v3190
        %3208 = vst.msk [vmem:[%s3193 + $0x70] sm:$0xff] %vm2855, %v3191
        %3209 = vst.msk [vmem:[%s3193 + $0x78] sm:$0xff] %vm2855, %v3192
        %v3210 = vld [vmem:[%s6] sm:$0x1]
        %v3212 = vlaneseq
        %v3213 = vshrl.u32 %v3212, 7
        %v3214 = vsub.s32 0, %v3213
        %v3215 = vrot.slane %v3210, %v3214
        %v3217 = vmul.f32 %v1821, %v3215
        %v3218 = vmul.f32 %v1826, %v3215
        %v3219 = vmul.f32 %v1831, %v3215
        %v3220 = vmul.f32 %v1836, %v3215
        %v3221 = vmul.f32 %v1841, %v3215
        %v3222 = vmul.f32 %v1846, %v3215
        %v3223 = vmul.f32 %v1851, %v3215
        %v3224 = vmul.f32 %v1856, %v3215
        %v3225 = vmul.f32 %v1861, %v3215
        %v3226 = vmul.f32 %v1866, %v3215
        %v3227 = vmul.f32 %v1871, %v3215
        %v3228 = vmul.f32 %v1876, %v3215
        %v3229 = vmul.f32 %v1881, %v3215
        %v3230 = vmul.f32 %v1886, %v3215
        %v3231 = vmul.f32 %v1891, %v3215
        %v3232 = vmul.f32 %v1896, %v3215
        %v3233 = vld [vmem:[%s7] sm:$0x1]
        %v3235 = vlaneseq
        %v3236 = vshrl.u32 %v3235, 7
        %v3237 = vsub.s32 0, %v3236
        %v3238 = vrot.slane %v3233, %v3237
        %v3240 = vadd.f32 %v3217, %v3238
        %v3241 = vadd.f32 %v3218, %v3238
        %v3242 = vadd.f32 %v3219, %v3238
        %v3243 = vadd.f32 %v3220, %v3238
        %v3244 = vadd.f32 %v3221, %v3238
        %v3245 = vadd.f32 %v3222, %v3238
        %v3246 = vadd.f32 %v3223, %v3238
        %v3247 = vadd.f32 %v3224, %v3238
        %v3248 = vadd.f32 %v3225, %v3238
        %v3249 = vadd.f32 %v3226, %v3238
        %v3250 = vadd.f32 %v3227, %v3238
        %v3251 = vadd.f32 %v3228, %v3238
        %v3252 = vadd.f32 %v3229, %v3238
        %v3253 = vadd.f32 %v3230, %v3238
        %v3254 = vadd.f32 %v3231, %v3238
        %v3255 = vadd.f32 %v3232, %v3238
        %v3256 = vmax.f32 %v3240, 0.0
        %v3257 = vmax.f32 %v3241, 0.0
        %v3258 = vmax.f32 %v3242, 0.0
        %v3259 = vmax.f32 %v3243, 0.0
        %v3260 = vmax.f32 %v3244, 0.0
        %v3261 = vmax.f32 %v3245, 0.0
        %v3262 = vmax.f32 %v3246, 0.0
        %v3263 = vmax.f32 %v3247, 0.0
        %v3264 = vmax.f32 %v3248, 0.0
        %v3265 = vmax.f32 %v3249, 0.0
        %v3266 = vmax.f32 %v3250, 0.0
        %v3267 = vmax.f32 %v3251, 0.0
        %v3268 = vmax.f32 %v3252, 0.0
        %v3269 = vmax.f32 %v3253, 0.0
        %v3270 = vmax.f32 %v3254, 0.0
        %v3271 = vmax.f32 %v3255, 0.0
        %v3272 = vld [vmem:[%s8] sm:$0xf]
        %v3274 = vsel %vm1081, %v3256, 0
        %v3277 = vsel %vm1081, %v3257, 0
        %v3280 = vsel %vm1081, %v3258, 0
        %v3283 = vsel %vm1081, %v3259, 0
        %v3286 = vsel %vm1081, %v3260, 0
        %v3289 = vsel %vm1081, %v3261, 0
        %v3292 = vsel %vm1081, %v3262, 0
        %v3295 = vsel %vm1081, %v3263, 0
        %v3298 = vsel %vm1081, %v3264, 0
        %v3301 = vsel %vm1081, %v3265, 0
        %v3304 = vsel %vm1081, %v3266, 0
        %v3307 = vsel %vm1081, %v3267, 0
        %v3310 = vsel %vm1081, %v3268, 0
        %v3313 = vsel %vm1081, %v3269, 0
        %v3316 = vsel %vm1081, %v3270, 0
        %v3319 = vsel %vm1081, %v3271, 0
        %v3322 = vsel %vm1114, %v3272, 0
        %3324 = vmatprep.subr.mxu0 0.0
        %3325 = vmatpush1.msra.mxu0 %v3322
        %3326 = vmatprep.subr.mxu0 0.0
        %3327 = vmatpush1.msra.mxu0 0.0
        %3328 = vmatprep.subr.mxu0 0.0
        %3329 = vmatpush1.msra.mxu0 0.0
        %3330 = vmatprep.subr.mxu0 0.0
        %3331 = vmatpush1.msra.mxu0 0.0
        %3332 = vmatprep.subr.mxu0 0.0
        %3333 = vmatpush1.msra.mxu0 0.0
        %3334 = vmatprep.subr.mxu0 0.0
        %3335 = vmatpush1.msra.mxu0 0.0
        %3336 = vmatprep.subr.mxu0 0.0
        %3337 = vmatpush1.msra.mxu0 0.0
        %3338 = vmatprep.subr.mxu0 0.0
        %3339 = vmatpush1.msra.mxu0 0.0
        %3340 = vmatprep.subr.mxu0 0.0
        %3341 = vmatpush1.msra.mxu0 0.0
        %3342 = vmatprep.subr.mxu0 0.0
        %3343 = vmatpush1.msra.mxu0 0.0
        %3344 = vmatprep.subr.mxu0 0.0
        %3345 = vmatpush1.msra.mxu0 0.0
        %3346 = vmatprep.subr.mxu0 0.0
        %3347 = vmatpush1.msra.mxu0 0.0
        %3348 = vmatprep.subr.mxu0 0.0
        %3349 = vmatpush1.msra.mxu0 0.0
        %3350 = vmatprep.subr.mxu0 0.0
        %3351 = vmatpush1.msra.mxu0 0.0
        %3352 = vmatprep.subr.mxu0 0.0
        %3353 = vmatpush1.msra.mxu0 0.0
        %3354 = vmatprep.subr.mxu0 0.0
        %3355 = vmatpush1.msra.mxu0 0.0
        %3356 = vmatprep.subr.mxu0 0.0
        %3357 = vmatpush1.msra.mxu0 0.0
        %3358 = vmatprep.subr.mxu0 0.0
        %3359 = vmatpush1.msra.mxu0 0.0
        %3360 = vmatprep.subr.mxu0 0.0
        %3361 = vmatpush1.msra.mxu0 0.0
        %3362 = vmatprep.subr.mxu0 0.0
        %3363 = vmatpush1.msra.mxu0 0.0
        %3364 = vmatprep.subr.mxu0 0.0
        %3365 = vmatpush1.msra.mxu0 0.0
        %3366 = vmatprep.subr.mxu0 0.0
        %3367 = vmatpush1.msra.mxu0 0.0
        %3368 = vmatprep.subr.mxu0 0.0
        %3369 = vmatpush1.msra.mxu0 0.0
        %3370 = vmatprep.subr.mxu0 0.0
        %3371 = vmatpush1.msra.mxu0 0.0
        %3372 = vmatprep.subr.mxu0 0.0
        %3373 = vmatpush1.msra.mxu0 0.0
        %3374 = vmatprep.subr.mxu0 0.0
        %3375 = vmatpush1.msra.mxu0 0.0
        %3376 = vmatprep.subr.mxu0 0.0
        %3377 = vmatpush1.msra.mxu0 0.0
        %3378 = vmatprep.subr.mxu0 0.0
        %3379 = vmatpush1.msra.mxu0 0.0
        %3380 = vmatprep.subr.mxu0 0.0
        %3381 = vmatpush1.msra.mxu0 0.0
        %3382 = vmatprep.subr.mxu0 0.0
        %3383 = vmatpush1.msra.mxu0 0.0
        %3384 = vmatprep.subr.mxu0 0.0
        %3385 = vmatpush1.msra.mxu0 0.0
        %3386 = vmatprep.subr.mxu0 0.0
        %3387 = vmatpush1.msra.mxu0 0.0
        %3388 = vmatprep.mubr.f32.mxu0 0.0
        %3389 = vmatmul.mubr.f32.gmra.mrb[0].mxu0 %v3274
        %v3390 = vpop.f32.mrb[0].mxu0
        %v3391 = vadd.f32 0.0, %v3390
        %v3392 = vpop.f32.mrb[0].mxu0
        %3393 = vmatprep.mubr.f32.mxu0 0.0
        %3394 = vmatmul.mubr.f32.gmra.mrb[0].mxu0 %v3277
        %v3395 = vpop.f32.mrb[0].mxu0
        %v3396 = vadd.f32 0.0, %v3395
        %v3397 = vpop.f32.mrb[0].mxu0
        %3398 = vmatprep.mubr.f32.mxu0 0.0
        %3399 = vmatmul.mubr.f32.gmra.mrb[0].mxu0 %v3280
        %v3400 = vpop.f32.mrb[0].mxu0
        %v3401 = vadd.f32 0.0, %v3400
        %v3402 = vpop.f32.mrb[0].mxu0
        %3403 = vmatprep.mubr.f32.mxu0 0.0
        %3404 = vmatmul.mubr.f32.gmra.mrb[0].mxu0 %v3283
        %v3405 = vpop.f32.mrb[0].mxu0
        %v3406 = vadd.f32 0.0, %v3405
        %v3407 = vpop.f32.mrb[0].mxu0
        %3408 = vmatprep.mubr.f32.mxu0 0.0
        %3409 = vmatmul.mubr.f32.gmra.mrb[0].mxu0 %v3286
        %v3410 = vpop.f32.mrb[0].mxu0
        %v3411 = vadd.f32 0.0, %v3410
        %v3412 = vpop.f32.mrb[0].mxu0
        %3413 = vmatprep.mubr.f32.mxu0 0.0
        %3414 = vmatmul.mubr.f32.gmra.mrb[0].mxu0 %v3289
        %v3415 = vpop.f32.mrb[0].mxu0
        %v3416 = vadd.f32 0.0, %v3415
        %v3417 = vpop.f32.mrb[0].mxu0
        %3418 = vmatprep.mubr.f32.mxu0 0.0
        %3419 = vmatmul.mubr.f32.gmra.mrb[0].mxu0 %v3292
        %v3420 = vpop.f32.mrb[0].mxu0
        %v3421 = vadd.f32 0.0, %v3420
        %v3422 = vpop.f32.mrb[0].mxu0
        %3423 = vmatprep.mubr.f32.mxu0 0.0
        %3424 = vmatmul.mubr.f32.gmra.mrb[0].mxu0 %v3295
        %v3425 = vpop.f32.mrb[0].mxu0
        %v3426 = vadd.f32 0.0, %v3425
        %v3427 = vpop.f32.mrb[0].mxu0
        %3428 = vmatprep.mubr.f32.mxu0 0.0
        %3429 = vmatmul.mubr.f32.gmra.mrb[0].mxu0 %v3298
        %v3430 = vpop.f32.mrb[0].mxu0
        %v3431 = vadd.f32 0.0, %v3430
        %v3432 = vpop.f32.mrb[0].mxu0
        %3433 = vmatprep.mubr.f32.mxu0 0.0
        %3434 = vmatmul.mubr.f32.gmra.mrb[0].mxu0 %v3301
        %v3435 = vpop.f32.mrb[0].mxu0
        %v3436 = vadd.f32 0.0, %v3435
        %v3437 = vpop.f32.mrb[0].mxu0
        %3438 = vmatprep.mubr.f32.mxu0 0.0
        %3439 = vmatmul.mubr.f32.gmra.mrb[0].mxu0 %v3304
        %v3440 = vpop.f32.mrb[0].mxu0
        %v3441 = vadd.f32 0.0, %v3440
        %v3442 = vpop.f32.mrb[0].mxu0
        %3443 = vmatprep.mubr.f32.mxu0 0.0
        %3444 = vmatmul.mubr.f32.gmra.mrb[0].mxu0 %v3307
        %v3445 = vpop.f32.mrb[0].mxu0
        %v3446 = vadd.f32 0.0, %v3445
        %v3447 = vpop.f32.mrb[0].mxu0
        %3448 = vmatprep.mubr.f32.mxu0 0.0
        %3449 = vmatmul.mubr.f32.gmra.mrb[0].mxu0 %v3310
        %v3450 = vpop.f32.mrb[0].mxu0
        %v3451 = vadd.f32 0.0, %v3450
        %v3452 = vpop.f32.mrb[0].mxu0
        %3453 = vmatprep.mubr.f32.mxu0 0.0
        %3454 = vmatmul.mubr.f32.gmra.mrb[0].mxu0 %v3313
        %v3455 = vpop.f32.mrb[0].mxu0
        %v3456 = vadd.f32 0.0, %v3455
        %v3457 = vpop.f32.mrb[0].mxu0
        %3458 = vmatprep.mubr.f32.mxu0 0.0
        %3459 = vmatmul.mubr.f32.gmra.mrb[0].mxu0 %v3316
        %v3460 = vpop.f32.mrb[0].mxu0
        %v3461 = vadd.f32 0.0, %v3460
        %v3462 = vpop.f32.mrb[0].mxu0
        %3463 = vmatprep.mubr.f32.mxu0 0.0
        %3464 = vmatmul.mubr.f32.gmra.mrb[0].mxu0 %v3319
        %v3465 = vpop.f32.mrb[0].mxu0
        %v3466 = vadd.f32 0.0, %v3465
        %v3467 = vpop.f32.mrb[0].mxu0
        %3468 = vdwg.mxu0
        %v3469 = vld [vmem:[%s9] sm:$0x1]
        %v3471 = vlaneseq
        %v3472 = vshrl.u32 %v3471, 7
        %v3473 = vsub.s32 0, %v3472
        %v3474 = vrot.slane %v3469, %v3473
        %v3476 = vmul.f32 %v3391, %v3474
        %v3477 = vmul.f32 %v3396, %v3474
        %v3478 = vmul.f32 %v3401, %v3474
        %v3479 = vmul.f32 %v3406, %v3474
        %v3480 = vmul.f32 %v3411, %v3474
        %v3481 = vmul.f32 %v3416, %v3474
        %v3482 = vmul.f32 %v3421, %v3474
        %v3483 = vmul.f32 %v3426, %v3474
        %v3484 = vmul.f32 %v3431, %v3474
        %v3485 = vmul.f32 %v3436, %v3474
        %v3486 = vmul.f32 %v3441, %v3474
        %v3487 = vmul.f32 %v3446, %v3474
        %v3488 = vmul.f32 %v3451, %v3474
        %v3489 = vmul.f32 %v3456, %v3474
        %v3490 = vmul.f32 %v3461, %v3474
        %v3491 = vmul.f32 %v3466, %v3474
        %v3492 = vld [vmem:[%s10] sm:$0x1]
        %v3494 = vlaneseq
        %v3495 = vshrl.u32 %v3494, 7
        %v3496 = vsub.s32 0, %v3495
        %v3497 = vrot.slane %v3492, %v3496
        %v3499 = vadd.f32 %v3476, %v3497
        %v3500 = vadd.f32 %v3477, %v3497
        %v3501 = vadd.f32 %v3478, %v3497
        %v3502 = vadd.f32 %v3479, %v3497
        %v3503 = vadd.f32 %v3480, %v3497
        %v3504 = vadd.f32 %v3481, %v3497
        %v3505 = vadd.f32 %v3482, %v3497
        %v3506 = vadd.f32 %v3483, %v3497
        %v3507 = vadd.f32 %v3484, %v3497
        %v3508 = vadd.f32 %v3485, %v3497
        %v3509 = vadd.f32 %v3486, %v3497
        %v3510 = vadd.f32 %v3487, %v3497
        %v3511 = vadd.f32 %v3488, %v3497
        %v3512 = vadd.f32 %v3489, %v3497
        %v3513 = vadd.f32 %v3490, %v3497
        %v3514 = vadd.f32 %v3491, %v3497
        %v3515 = vmax.f32 %v3499, 0.0
        %v3516 = vmax.f32 %v3500, 0.0
        %v3517 = vmax.f32 %v3501, 0.0
        %v3518 = vmax.f32 %v3502, 0.0
        %v3519 = vmax.f32 %v3503, 0.0
        %v3520 = vmax.f32 %v3504, 0.0
        %v3521 = vmax.f32 %v3505, 0.0
        %v3522 = vmax.f32 %v3506, 0.0
        %v3523 = vmax.f32 %v3507, 0.0
        %v3524 = vmax.f32 %v3508, 0.0
        %v3525 = vmax.f32 %v3509, 0.0
        %v3526 = vmax.f32 %v3510, 0.0
        %v3527 = vmax.f32 %v3511, 0.0
        %v3528 = vmax.f32 %v3512, 0.0
        %v3529 = vmax.f32 %v3513, 0.0
        %v3530 = vmax.f32 %v3514, 0.0
        %s3531 = scalar_lea.vmem %s452, 256 [#allocation2]
        %3532 = vst.msk [vmem:[%s3531] sm:$0xff] %vm2855, %v3515
        %3533 = vst.msk [vmem:[%s3531 + $0x8] sm:$0xff] %vm2855, %v3516
        %3534 = vst.msk [vmem:[%s3531 + $0x10] sm:$0xff] %vm2855, %v3517
        %3535 = vst.msk [vmem:[%s3531 + $0x18] sm:$0xff] %vm2855, %v3518
        %3536 = vst.msk [vmem:[%s3531 + $0x20] sm:$0xff] %vm2855, %v3519
        %3537 = vst.msk [vmem:[%s3531 + $0x28] sm:$0xff] %vm2855, %v3520
        %3538 = vst.msk [vmem:[%s3531 + $0x30] sm:$0xff] %vm2855, %v3521
        %3539 = vst.msk [vmem:[%s3531 + $0x38] sm:$0xff] %vm2855, %v3522
        %3540 = vst.msk [vmem:[%s3531 + $0x40] sm:$0xff] %vm2855, %v3523
        %3541 = vst.msk [vmem:[%s3531 + $0x48] sm:$0xff] %vm2855, %v3524
        %3542 = vst.msk [vmem:[%s3531 + $0x50] sm:$0xff] %vm2855, %v3525
        %3543 = vst.msk [vmem:[%s3531 + $0x58] sm:$0xff] %vm2855, %v3526
        %3544 = vst.msk [vmem:[%s3531 + $0x60] sm:$0xff] %vm2855, %v3527
        %3545 = vst.msk [vmem:[%s3531 + $0x68] sm:$0xff] %vm2855, %v3528
        %3546 = vst.msk [vmem:[%s3531 + $0x70] sm:$0xff] %vm2855, %v3529
        %3547 = vst.msk [vmem:[%s3531 + $0x78] sm:$0xff] %vm2855, %v3530
        %v3548 = vld [vmem:[%s6] sm:$0x1]
        %v3550 = vlaneseq
        %v3551 = vshrl.u32 %v3550, 7
        %v3552 = vsub.s32 0, %v3551
        %v3553 = vrot.slane %v3548, %v3552
        %v3555 = vmul.f32 %v2518, %v3553
        %v3556 = vmul.f32 %v2519, %v3553
        %v3557 = vmul.f32 %v2520, %v3553
        %v3558 = vmul.f32 %v2521, %v3553
        %v3559 = vmul.f32 %v2522, %v3553
        %v3560 = vmul.f32 %v2523, %v3553
        %v3561 = vmul.f32 %v2524, %v3553
        %v3562 = vmul.f32 %v2525, %v3553
        %v3563 = vmul.f32 %v2526, %v3553
        %v3564 = vmul.f32 %v2527, %v3553
        %v3565 = vmul.f32 %v2528, %v3553
        %v3566 = vmul.f32 %v2529, %v3553
        %v3567 = vmul.f32 %v2530, %v3553
        %v3568 = vmul.f32 %v2531, %v3553
        %v3569 = vmul.f32 %v2532, %v3553
        %v3570 = vmul.f32 %v2533, %v3553
        %v3571 = vld [vmem:[%s7] sm:$0x1]
        %v3573 = vlaneseq
        %v3574 = vshrl.u32 %v3573, 7
        %v3575 = vsub.s32 0, %v3574
        %v3576 = vrot.slane %v3571, %v3575
        %v3578 = vadd.f32 %v3555, %v3576
        %v3579 = vadd.f32 %v3556, %v3576
        %v3580 = vadd.f32 %v3557, %v3576
        %v3581 = vadd.f32 %v3558, %v3576
        %v3582 = vadd.f32 %v3559, %v3576
        %v3583 = vadd.f32 %v3560, %v3576
        %v3584 = vadd.f32 %v3561, %v3576
        %v3585 = vadd.f32 %v3562, %v3576
        %v3586 = vadd.f32 %v3563, %v3576
        %v3587 = vadd.f32 %v3564, %v3576
        %v3588 = vadd.f32 %v3565, %v3576
        %v3589 = vadd.f32 %v3566, %v3576
        %v3590 = vadd.f32 %v3567, %v3576
        %v3591 = vadd.f32 %v3568, %v3576
        %v3592 = vadd.f32 %v3569, %v3576
        %v3593 = vadd.f32 %v3570, %v3576
        %v3594 = vmax.f32 %v3578, 0.0
        %v3595 = vmax.f32 %v3579, 0.0
        %v3596 = vmax.f32 %v3580, 0.0
        %v3597 = vmax.f32 %v3581, 0.0
        %v3598 = vmax.f32 %v3582, 0.0
        %v3599 = vmax.f32 %v3583, 0.0
        %v3600 = vmax.f32 %v3584, 0.0
        %v3601 = vmax.f32 %v3585, 0.0
        %v3602 = vmax.f32 %v3586, 0.0
        %v3603 = vmax.f32 %v3587, 0.0
        %v3604 = vmax.f32 %v3588, 0.0
        %v3605 = vmax.f32 %v3589, 0.0
        %v3606 = vmax.f32 %v3590, 0.0
        %v3607 = vmax.f32 %v3591, 0.0
        %v3608 = vmax.f32 %v3592, 0.0
        %v3609 = vmax.f32 %v3593, 0.0
        %v3610 = vld [vmem:[%s8] sm:$0xf]
        %v3612 = vsel %vm1081, %v3594, 0
        %v3615 = vsel %vm1081, %v3595, 0
        %v3618 = vsel %vm1081, %v3596, 0
        %v3621 = vsel %vm1081, %v3597, 0
        %v3624 = vsel %vm1081, %v3598, 0
        %v3627 = vsel %vm1081, %v3599, 0
        %v3630 = vsel %vm1081, %v3600, 0
        %v3633 = vsel %vm1081, %v3601, 0
        %v3636 = vsel %vm1081, %v3602, 0
        %v3639 = vsel %vm1081, %v3603, 0
        %v3642 = vsel %vm1081, %v3604, 0
        %v3645 = vsel %vm1081, %v3605, 0
        %v3648 = vsel %vm1081, %v3606, 0
        %v3651 = vsel %vm1081, %v3607, 0
        %v3654 = vsel %vm1081, %v3608, 0
        %v3657 = vsel %vm1081, %v3609, 0
        %v3660 = vsel %vm1114, %v3610, 0
        %3662 = vmatprep.subr.mxu0 0.0
        %3663 = vmatpush1.msra.mxu0 %v3660
        %3664 = vmatprep.subr.mxu0 0.0
        %3665 = vmatpush1.msra.mxu0 0.0
        %3666 = vmatprep.subr.mxu0 0.0
        %3667 = vmatpush1.msra.mxu0 0.0
        %3668 = vmatprep.subr.mxu0 0.0
        %3669 = vmatpush1.msra.mxu0 0.0
        %3670 = vmatprep.subr.mxu0 0.0
        %3671 = vmatpush1.msra.mxu0 0.0
        %3672 = vmatprep.subr.mxu0 0.0
        %3673 = vmatpush1.msra.mxu0 0.0
        %3674 = vmatprep.subr.mxu0 0.0
        %3675 = vmatpush1.msra.mxu0 0.0
        %3676 = vmatprep.subr.mxu0 0.0
        %3677 = vmatpush1.msra.mxu0 0.0
        %3678 = vmatprep.subr.mxu0 0.0
        %3679 = vmatpush1.msra.mxu0 0.0
        %3680 = vmatprep.subr.mxu0 0.0
        %3681 = vmatpush1.msra.mxu0 0.0
        %3682 = vmatprep.subr.mxu0 0.0
        %3683 = vmatpush1.msra.mxu0 0.0
        %3684 = vmatprep.subr.mxu0 0.0
        %3685 = vmatpush1.msra.mxu0 0.0
        %3686 = vmatprep.subr.mxu0 0.0
        %3687 = vmatpush1.msra.mxu0 0.0
        %3688 = vmatprep.subr.mxu0 0.0
        %3689 = vmatpush1.msra.mxu0 0.0
        %3690 = vmatprep.subr.mxu0 0.0
        %3691 = vmatpush1.msra.mxu0 0.0
        %3692 = vmatprep.subr.mxu0 0.0
        %3693 = vmatpush1.msra.mxu0 0.0
        %3694 = vmatprep.subr.mxu0 0.0
        %3695 = vmatpush1.msra.mxu0 0.0
        %3696 = vmatprep.subr.mxu0 0.0
        %3697 = vmatpush1.msra.mxu0 0.0
        %3698 = vmatprep.subr.mxu0 0.0
        %3699 = vmatpush1.msra.mxu0 0.0
        %3700 = vmatprep.subr.mxu0 0.0
        %3701 = vmatpush1.msra.mxu0 0.0
        %3702 = vmatprep.subr.mxu0 0.0
        %3703 = vmatpush1.msra.mxu0 0.0
        %3704 = vmatprep.subr.mxu0 0.0
        %3705 = vmatpush1.msra.mxu0 0.0
        %3706 = vmatprep.subr.mxu0 0.0
        %3707 = vmatpush1.msra.mxu0 0.0
        %3708 = vmatprep.subr.mxu0 0.0
        %3709 = vmatpush1.msra.mxu0 0.0
        %3710 = vmatprep.subr.mxu0 0.0
        %3711 = vmatpush1.msra.mxu0 0.0
        %3712 = vmatprep.subr.mxu0 0.0
        %3713 = vmatpush1.msra.mxu0 0.0
        %3714 = vmatprep.subr.mxu0 0.0
        %3715 = vmatpush1.msra.mxu0 0.0
        %3716 = vmatprep.subr.mxu0 0.0
        %3717 = vmatpush1.msra.mxu0 0.0
        %3718 = vmatprep.subr.mxu0 0.0
        %3719 = vmatpush1.msra.mxu0 0.0
        %3720 = vmatprep.subr.mxu0 0.0
        %3721 = vmatpush1.msra.mxu0 0.0
        %3722 = vmatprep.subr.mxu0 0.0
        %3723 = vmatpush1.msra.mxu0 0.0
        %3724 = vmatprep.subr.mxu0 0.0
        %3725 = vmatpush1.msra.mxu0 0.0
        %3726 = vmatprep.mubr.f32.mxu0 0.0
        %3727 = vmatmul.mubr.f32.gmra.mrb[0].mxu0 %v3612
        %v3728 = vpop.f32.mrb[0].mxu0
        %v3729 = vadd.f32 0.0, %v3728
        %v3730 = vpop.f32.mrb[0].mxu0
        %3731 = vmatprep.mubr.f32.mxu0 0.0
        %3732 = vmatmul.mubr.f32.gmra.mrb[0].mxu0 %v3615
        %v3733 = vpop.f32.mrb[0].mxu0
        %v3734 = vadd.f32 0.0, %v3733
        %v3735 = vpop.f32.mrb[0].mxu0
        %3736 = vmatprep.mubr.f32.mxu0 0.0
        %3737 = vmatmul.mubr.f32.gmra.mrb[0].mxu0 %v3618
        %v3738 = vpop.f32.mrb[0].mxu0
        %v3739 = vadd.f32 0.0, %v3738
        %v3740 = vpop.f32.mrb[0].mxu0
        %3741 = vmatprep.mubr.f32.mxu0 0.0
        %3742 = vmatmul.mubr.f32.gmra.mrb[0].mxu0 %v3621
        %v3743 = vpop.f32.mrb[0].mxu0
        %v3744 = vadd.f32 0.0, %v3743
        %v3745 = vpop.f32.mrb[0].mxu0
        %3746 = vmatprep.mubr.f32.mxu0 0.0
        %3747 = vmatmul.mubr.f32.gmra.mrb[0].mxu0 %v3624
        %v3748 = vpop.f32.mrb[0].mxu0
        %v3749 = vadd.f32 0.0, %v3748
        %v3750 = vpop.f32.mrb[0].mxu0
        %3751 = vmatprep.mubr.f32.mxu0 0.0
        %3752 = vmatmul.mubr.f32.gmra.mrb[0].mxu0 %v3627
        %v3753 = vpop.f32.mrb[0].mxu0
        %v3754 = vadd.f32 0.0, %v3753
        %v3755 = vpop.f32.mrb[0].mxu0
        %3756 = vmatprep.mubr.f32.mxu0 0.0
        %3757 = vmatmul.mubr.f32.gmra.mrb[0].mxu0 %v3630
        %v3758 = vpop.f32.mrb[0].mxu0
        %v3759 = vadd.f32 0.0, %v3758
        %v3760 = vpop.f32.mrb[0].mxu0
        %3761 = vmatprep.mubr.f32.mxu0 0.0
        %3762 = vmatmul.mubr.f32.gmra.mrb[0].mxu0 %v3633
        %v3763 = vpop.f32.mrb[0].mxu0
        %v3764 = vadd.f32 0.0, %v3763
        %v3765 = vpop.f32.mrb[0].mxu0
        %3766 = vmatprep.mubr.f32.mxu0 0.0
        %3767 = vmatmul.mubr.f32.gmra.mrb[0].mxu0 %v3636
        %v3768 = vpop.f32.mrb[0].mxu0
        %v3769 = vadd.f32 0.0, %v3768
        %v3770 = vpop.f32.mrb[0].mxu0
        %3771 = vmatprep.mubr.f32.mxu0 0.0
        %3772 = vmatmul.mubr.f32.gmra.mrb[0].mxu0 %v3639
        %v3773 = vpop.f32.mrb[0].mxu0
        %v3774 = vadd.f32 0.0, %v3773
        %v3775 = vpop.f32.mrb[0].mxu0
        %3776 = vmatprep.mubr.f32.mxu0 0.0
        %3777 = vmatmul.mubr.f32.gmra.mrb[0].mxu0 %v3642
        %v3778 = vpop.f32.mrb[0].mxu0
        %v3779 = vadd.f32 0.0, %v3778
        %v3780 = vpop.f32.mrb[0].mxu0
        %3781 = vmatprep.mubr.f32.mxu0 0.0
        %3782 = vmatmul.mubr.f32.gmra.mrb[0].mxu0 %v3645
        %v3783 = vpop.f32.mrb[0].mxu0
        %v3784 = vadd.f32 0.0, %v3783
        %v3785 = vpop.f32.mrb[0].mxu0
        %3786 = vmatprep.mubr.f32.mxu0 0.0
        %3787 = vmatmul.mubr.f32.gmra.mrb[0].mxu0 %v3648
        %v3788 = vpop.f32.mrb[0].mxu0
        %v3789 = vadd.f32 0.0, %v3788
        %v3790 = vpop.f32.mrb[0].mxu0
        %3791 = vmatprep.mubr.f32.mxu0 0.0
        %3792 = vmatmul.mubr.f32.gmra.mrb[0].mxu0 %v3651
        %v3793 = vpop.f32.mrb[0].mxu0
        %v3794 = vadd.f32 0.0, %v3793
        %v3795 = vpop.f32.mrb[0].mxu0
        %3796 = vmatprep.mubr.f32.mxu0 0.0
        %3797 = vmatmul.mubr.f32.gmra.mrb[0].mxu0 %v3654
        %v3798 = vpop.f32.mrb[0].mxu0
        %v3799 = vadd.f32 0.0, %v3798
        %v3800 = vpop.f32.mrb[0].mxu0
        %3801 = vmatprep.mubr.f32.mxu0 0.0
        %3802 = vmatmul.mubr.f32.gmra.mrb[0].mxu0 %v3657
        %v3803 = vpop.f32.mrb[0].mxu0
        %v3804 = vadd.f32 0.0, %v3803
        %v3805 = vpop.f32.mrb[0].mxu0
        %3806 = vdwg.mxu0
        %v3807 = vld [vmem:[%s9] sm:$0x1]
        %v3809 = vlaneseq
        %v3810 = vshrl.u32 %v3809, 7
        %v3811 = vsub.s32 0, %v3810
        %v3812 = vrot.slane %v3807, %v3811
        %v3814 = vmul.f32 %v3729, %v3812
        %v3815 = vmul.f32 %v3734, %v3812
        %v3816 = vmul.f32 %v3739, %v3812
        %v3817 = vmul.f32 %v3744, %v3812
        %v3818 = vmul.f32 %v3749, %v3812
        %v3819 = vmul.f32 %v3754, %v3812
        %v3820 = vmul.f32 %v3759, %v3812
        %v3821 = vmul.f32 %v3764, %v3812
        %v3822 = vmul.f32 %v3769, %v3812
        %v3823 = vmul.f32 %v3774, %v3812
        %v3824 = vmul.f32 %v3779, %v3812
        %v3825 = vmul.f32 %v3784, %v3812
        %v3826 = vmul.f32 %v3789, %v3812
        %v3827 = vmul.f32 %v3794, %v3812
        %v3828 = vmul.f32 %v3799, %v3812
        %v3829 = vmul.f32 %v3804, %v3812
        %v3830 = vld [vmem:[%s10] sm:$0x1]
        %v3832 = vlaneseq
        %v3833 = vshrl.u32 %v3832, 7
        %v3834 = vsub.s32 0, %v3833
        %v3835 = vrot.slane %v3830, %v3834
        %v3837 = vadd.f32 %v3814, %v3835
        %v3838 = vadd.f32 %v3815, %v3835
        %v3839 = vadd.f32 %v3816, %v3835
        %v3840 = vadd.f32 %v3817, %v3835
        %v3841 = vadd.f32 %v3818, %v3835
        %v3842 = vadd.f32 %v3819, %v3835
        %v3843 = vadd.f32 %v3820, %v3835
        %v3844 = vadd.f32 %v3821, %v3835
        %v3845 = vadd.f32 %v3822, %v3835
        %v3846 = vadd.f32 %v3823, %v3835
        %v3847 = vadd.f32 %v3824, %v3835
        %v3848 = vadd.f32 %v3825, %v3835
        %v3849 = vadd.f32 %v3826, %v3835
        %v3850 = vadd.f32 %v3827, %v3835
        %v3851 = vadd.f32 %v3828, %v3835
        %v3852 = vadd.f32 %v3829, %v3835
        %v3853 = vmax.f32 %v3837, 0.0
        %v3854 = vmax.f32 %v3838, 0.0
        %v3855 = vmax.f32 %v3839, 0.0
        %v3856 = vmax.f32 %v3840, 0.0
        %v3857 = vmax.f32 %v3841, 0.0
        %v3858 = vmax.f32 %v3842, 0.0
        %v3859 = vmax.f32 %v3843, 0.0
        %v3860 = vmax.f32 %v3844, 0.0
        %v3861 = vmax.f32 %v3845, 0.0
        %v3862 = vmax.f32 %v3846, 0.0
        %v3863 = vmax.f32 %v3847, 0.0
        %v3864 = vmax.f32 %v3848, 0.0
        %v3865 = vmax.f32 %v3849, 0.0
        %v3866 = vmax.f32 %v3850, 0.0
        %v3867 = vmax.f32 %v3851, 0.0
        %v3868 = vmax.f32 %v3852, 0.0
        %s3869 = scalar_lea.vmem %s452, 384 [#allocation2]
        %3870 = vst.msk [vmem:[%s3869] sm:$0xff] %vm2855, %v3853
        %3871 = vst.msk [vmem:[%s3869 + $0x8] sm:$0xff] %vm2855, %v3854
        %3872 = vst.msk [vmem:[%s3869 + $0x10] sm:$0xff] %vm2855, %v3855
        %3873 = vst.msk [vmem:[%s3869 + $0x18] sm:$0xff] %vm2855, %v3856
        %3874 = vst.msk [vmem:[%s3869 + $0x20] sm:$0xff] %vm2855, %v3857
        %3875 = vst.msk [vmem:[%s3869 + $0x28] sm:$0xff] %vm2855, %v3858
        %3876 = vst.msk [vmem:[%s3869 + $0x30] sm:$0xff] %vm2855, %v3859
        %3877 = vst.msk [vmem:[%s3869 + $0x38] sm:$0xff] %vm2855, %v3860
        %3878 = vst.msk [vmem:[%s3869 + $0x40] sm:$0xff] %vm2855, %v3861
        %3879 = vst.msk [vmem:[%s3869 + $0x48] sm:$0xff] %vm2855, %v3862
        %3880 = vst.msk [vmem:[%s3869 + $0x50] sm:$0xff] %vm2855, %v3863
        %3881 = vst.msk [vmem:[%s3869 + $0x58] sm:$0xff] %vm2855, %v3864
        %3882 = vst.msk [vmem:[%s3869 + $0x60] sm:$0xff] %vm2855, %v3865
        %3883 = vst.msk [vmem:[%s3869 + $0x68] sm:$0xff] %vm2855, %v3866
        %3884 = vst.msk [vmem:[%s3869 + $0x70] sm:$0xff] %vm2855, %v3867
        %3885 = vst.msk [vmem:[%s3869 + $0x78] sm:$0xff] %vm2855, %v3868
        %s3886 = sand.u32 %s293, 1
        %s3887 = sand.u32 %s293, 1
        %s3888 = smul.addr %s3887, 512
        %s3889 = scalar_lea.vmem [#allocation2], %s3888
        // Predicated region
        $region65: #{decoder_forward.1} parent=63 // pred_check
          %p3890 = pneg %p303
        $region66: #{decoder_forward.1} parent=63 // pred_check_branch
          %3892 = sbr.rel (%p3890) target = $region68
        $region67: #{decoder_forward.1} parent=63 // pred_region
          %s3893 = smul.u32 8, %s27
          %s3894 = smul.addr %s3893, 2
          %s3895 = smul.addr %s26, 128
          %s3896 = sadd.s32 %s3894, %s3895
          %s3897 = smul.addr %s3896, 8
          %s3898 = scalar_lea.vmem %s11, %s3897
          // Predicated region
          $region69: #{decoder_forward.1} parent=67 // pred_check
            _
          $region70: #{decoder_forward.1} parent=67 // pred_check_branch
            %3900 = sbr.rel (0) target = $region72
          $region71: #{decoder_forward.1} parent=67 // pred_region
            // Predicated region
            $region73: #{decoder_forward.1} parent=71 // pred_check
              _
            $region74: #{decoder_forward.1} parent=71 // pred_check_branch
              %3902 = sbr.rel (0) target = $region76
            $region75: #{decoder_forward.1} parent=71 // pred_region
              // Predicated region
              $region88: #{decoder_forward.1} parent=75 // pred_check
                _
              $region89: #{decoder_forward.1} parent=75 // pred_check_branch
                %4043 = sbr.rel (0) target = $region91
              $region90: #{decoder_forward.1} parent=75 // pred_region
                loop: start=0, step=1, limit=1
                $region92: #{decoder_forward.1} parent=90 // loop_pre_header
                  _
                $region93: #{decoder_forward.1} parent=90 // loop_header
                  %s4045 = sphi 0, %s4049
                  %p4046 = scmp.ge.s32.totalorder %s4045, 1
                  %s4050 = sphi %s3889, %s3889
                  %s4051 = sphi %s3898, %s3898
                $region94: #{decoder_forward.1} parent=90 // loop_header_branch
                  %4048 = sbr.rel (%p4046) target = $region98
                $region95: #{decoder_forward.1} parent=90 // loop_body
                  %v4052 = vld [vmem:[%s4050] sm:$0xff]
                  %4053 = vst [vmem:[%s4051] sm:$0xff] %v4052
                  %v4054 = vld [vmem:[%s4050 + $0x8] sm:$0xff]
                  %4055 = vst [vmem:[%s4051 + $0x8] sm:$0xff] %v4054
                  %v4056 = vld [vmem:[%s4050 + $0x10] sm:$0xff]
                  %4057 = vst [vmem:[%s4051 + $0x10] sm:$0xff] %v4056
                  %v4058 = vld [vmem:[%s4050 + $0x18] sm:$0xff]
                  %4059 = vst [vmem:[%s4051 + $0x18] sm:$0xff] %v4058
                  %v4060 = vld [vmem:[%s4050 + $0x20] sm:$0xff]
                  %4061 = vst [vmem:[%s4051 + $0x20] sm:$0xff] %v4060
                  %v4062 = vld [vmem:[%s4050 + $0x28] sm:$0xff]
                  %4063 = vst [vmem:[%s4051 + $0x28] sm:$0xff] %v4062
                  %v4064 = vld [vmem:[%s4050 + $0x30] sm:$0xff]
                  %4065 = vst [vmem:[%s4051 + $0x30] sm:$0xff] %v4064
                  %v4066 = vld [vmem:[%s4050 + $0x38] sm:$0xff]
                  %4067 = vst [vmem:[%s4051 + $0x38] sm:$0xff] %v4066
                  %v4068 = vld [vmem:[%s4050 + $0x40] sm:$0xff]
                  %4069 = vst [vmem:[%s4051 + $0x40] sm:$0xff] %v4068
                  %v4070 = vld [vmem:[%s4050 + $0x48] sm:$0xff]
                  %4071 = vst [vmem:[%s4051 + $0x48] sm:$0xff] %v4070
                  %v4072 = vld [vmem:[%s4050 + $0x50] sm:$0xff]
                  %4073 = vst [vmem:[%s4051 + $0x50] sm:$0xff] %v4072
                  %v4074 = vld [vmem:[%s4050 + $0x58] sm:$0xff]
                  %4075 = vst [vmem:[%s4051 + $0x58] sm:$0xff] %v4074
                  %v4076 = vld [vmem:[%s4050 + $0x60] sm:$0xff]
                  %4077 = vst [vmem:[%s4051 + $0x60] sm:$0xff] %v4076
                  %v4078 = vld [vmem:[%s4050 + $0x68] sm:$0xff]
                  %4079 = vst [vmem:[%s4051 + $0x68] sm:$0xff] %v4078
                  %v4080 = vld [vmem:[%s4050 + $0x70] sm:$0xff]
                  %4081 = vst [vmem:[%s4051 + $0x70] sm:$0xff] %v4080
                  %v4082 = vld [vmem:[%s4050 + $0x78] sm:$0xff]
                  %4083 = vst [vmem:[%s4051 + $0x78] sm:$0xff] %v4082
                  %v4084 = vld [vmem:[%s4050 + $0x80] sm:$0xff]
                  %4085 = vst [vmem:[%s4051 + $0x100] sm:$0xff] %v4084
                  %v4086 = vld [vmem:[%s4050 + $0x88] sm:$0xff]
                  %4087 = vst [vmem:[%s4051 + $0x108] sm:$0xff] %v4086
                  %v4088 = vld [vmem:[%s4050 + $0x90] sm:$0xff]
                  %4089 = vst [vmem:[%s4051 + $0x110] sm:$0xff] %v4088
                  %v4090 = vld [vmem:[%s4050 + $0x98] sm:$0xff]
                  %4091 = vst [vmem:[%s4051 + $0x118] sm:$0xff] %v4090
                  %v4092 = vld [vmem:[%s4050 + $0xa0] sm:$0xff]
                  %4093 = vst [vmem:[%s4051 + $0x120] sm:$0xff] %v4092
                  %v4094 = vld [vmem:[%s4050 + $0xa8] sm:$0xff]
                  %4095 = vst [vmem:[%s4051 + $0x128] sm:$0xff] %v4094
                  %v4096 = vld [vmem:[%s4050 + $0xb0] sm:$0xff]
                  %4097 = vst [vmem:[%s4051 + $0x130] sm:$0xff] %v4096
                  %v4098 = vld [vmem:[%s4050 + $0xb8] sm:$0xff]
                  %4099 = vst [vmem:[%s4051 + $0x138] sm:$0xff] %v4098
                  %v4100 = vld [vmem:[%s4050 + $0xc0] sm:$0xff]
                  %4101 = vst [vmem:[%s4051 + $0x140] sm:$0xff] %v4100
                  %v4102 = vld [vmem:[%s4050 + $0xc8] sm:$0xff]
                  %4103 = vst [vmem:[%s4051 + $0x148] sm:$0xff] %v4102
                  %v4104 = vld [vmem:[%s4050 + $0xd0] sm:$0xff]
                  %4105 = vst [vmem:[%s4051 + $0x150] sm:$0xff] %v4104
                  %v4106 = vld [vmem:[%s4050 + $0xd8] sm:$0xff]
                  %4107 = vst [vmem:[%s4051 + $0x158] sm:$0xff] %v4106
                  %v4108 = vld [vmem:[%s4050 + $0xe0] sm:$0xff]
                  %4109 = vst [vmem:[%s4051 + $0x160] sm:$0xff] %v4108
                  %v4110 = vld [vmem:[%s4050 + $0xe8] sm:$0xff]
                  %4111 = vst [vmem:[%s4051 + $0x168] sm:$0xff] %v4110
                  %v4112 = vld [vmem:[%s4050 + $0xf0] sm:$0xff]
                  %4113 = vst [vmem:[%s4051 + $0x170] sm:$0xff] %v4112
                  %v4114 = vld [vmem:[%s4050 + $0xf8] sm:$0xff]
                  %4115 = vst [vmem:[%s4051 + $0x178] sm:$0xff] %v4114
                  %v4116 = vld [vmem:[%s4050 + $0x100] sm:$0xff]
                  %4117 = vst [vmem:[%s4051 + $0x200] sm:$0xff] %v4116
                  %v4118 = vld [vmem:[%s4050 + $0x108] sm:$0xff]
                  %4119 = vst [vmem:[%s4051 + $0x208] sm:$0xff] %v4118
                  %v4120 = vld [vmem:[%s4050 + $0x110] sm:$0xff]
                  %4121 = vst [vmem:[%s4051 + $0x210] sm:$0xff] %v4120
                  %v4122 = vld [vmem:[%s4050 + $0x118] sm:$0xff]
                  %4123 = vst [vmem:[%s4051 + $0x218] sm:$0xff] %v4122
                  %v4124 = vld [vmem:[%s4050 + $0x120] sm:$0xff]
                  %4125 = vst [vmem:[%s4051 + $0x220] sm:$0xff] %v4124
                  %v4126 = vld [vmem:[%s4050 + $0x128] sm:$0xff]
                  %4127 = vst [vmem:[%s4051 + $0x228] sm:$0xff] %v4126
                  %v4128 = vld [vmem:[%s4050 + $0x130] sm:$0xff]
                  %4129 = vst [vmem:[%s4051 + $0x230] sm:$0xff] %v4128
                  %v4130 = vld [vmem:[%s4050 + $0x138] sm:$0xff]
                  %4131 = vst [vmem:[%s4051 + $0x238] sm:$0xff] %v4130
                  %v4132 = vld [vmem:[%s4050 + $0x140] sm:$0xff]
                  %4133 = vst [vmem:[%s4051 + $0x240] sm:$0xff] %v4132
                  %v4134 = vld [vmem:[%s4050 + $0x148] sm:$0xff]
                  %4135 = vst [vmem:[%s4051 + $0x248] sm:$0xff] %v4134
                  %v4136 = vld [vmem:[%s4050 + $0x150] sm:$0xff]
                  %4137 = vst [vmem:[%s4051 + $0x250] sm:$0xff] %v4136
                  %v4138 = vld [vmem:[%s4050 + $0x158] sm:$0xff]
                  %4139 = vst [vmem:[%s4051 + $0x258] sm:$0xff] %v4138
                  %v4140 = vld [vmem:[%s4050 + $0x160] sm:$0xff]
                  %4141 = vst [vmem:[%s4051 + $0x260] sm:$0xff] %v4140
                  %v4142 = vld [vmem:[%s4050 + $0x168] sm:$0xff]
                  %4143 = vst [vmem:[%s4051 + $0x268] sm:$0xff] %v4142
                  %v4144 = vld [vmem:[%s4050 + $0x170] sm:$0xff]
                  %4145 = vst [vmem:[%s4051 + $0x270] sm:$0xff] %v4144
                  %v4146 = vld [vmem:[%s4050 + $0x178] sm:$0xff]
                  %4147 = vst [vmem:[%s4051 + $0x278] sm:$0xff] %v4146
                  %v4148 = vld [vmem:[%s4050 + $0x180] sm:$0xff]
                  %4149 = vst [vmem:[%s4051 + $0x300] sm:$0xff] %v4148
                  %v4150 = vld [vmem:[%s4050 + $0x188] sm:$0xff]
                  %4151 = vst [vmem:[%s4051 + $0x308] sm:$0xff] %v4150
                  %v4152 = vld [vmem:[%s4050 + $0x190] sm:$0xff]
                  %4153 = vst [vmem:[%s4051 + $0x310] sm:$0xff] %v4152
                  %v4154 = vld [vmem:[%s4050 + $0x198] sm:$0xff]
                  %4155 = vst [vmem:[%s4051 + $0x318] sm:$0xff] %v4154
                  %v4156 = vld [vmem:[%s4050 + $0x1a0] sm:$0xff]
                  %4157 = vst [vmem:[%s4051 + $0x320] sm:$0xff] %v4156
                  %v4158 = vld [vmem:[%s4050 + $0x1a8] sm:$0xff]
                  %4159 = vst [vmem:[%s4051 + $0x328] sm:$0xff] %v4158
                  %v4160 = vld [vmem:[%s4050 + $0x1b0] sm:$0xff]
                  %4161 = vst [vmem:[%s4051 + $0x330] sm:$0xff] %v4160
                  %v4162 = vld [vmem:[%s4050 + $0x1b8] sm:$0xff]
                  %4163 = vst [vmem:[%s4051 + $0x338] sm:$0xff] %v4162
                  %v4164 = vld [vmem:[%s4050 + $0x1c0] sm:$0xff]
                  %4165 = vst [vmem:[%s4051 + $0x340] sm:$0xff] %v4164
                  %v4166 = vld [vmem:[%s4050 + $0x1c8] sm:$0xff]
                  %4167 = vst [vmem:[%s4051 + $0x348] sm:$0xff] %v4166
                  %v4168 = vld [vmem:[%s4050 + $0x1d0] sm:$0xff]
                  %4169 = vst [vmem:[%s4051 + $0x350] sm:$0xff] %v4168
                  %v4170 = vld [vmem:[%s4050 + $0x1d8] sm:$0xff]
                  %4171 = vst [vmem:[%s4051 + $0x358] sm:$0xff] %v4170
                  %v4172 = vld [vmem:[%s4050 + $0x1e0] sm:$0xff]
                  %4173 = vst [vmem:[%s4051 + $0x360] sm:$0xff] %v4172
                  %v4174 = vld [vmem:[%s4050 + $0x1e8] sm:$0xff]
                  %4175 = vst [vmem:[%s4051 + $0x368] sm:$0xff] %v4174
                  %v4176 = vld [vmem:[%s4050 + $0x1f0] sm:$0xff]
                  %4177 = vst [vmem:[%s4051 + $0x370] sm:$0xff] %v4176
                  %v4178 = vld [vmem:[%s4050 + $0x1f8] sm:$0xff]
                  %4179 = vst [vmem:[%s4051 + $0x378] sm:$0xff] %v4178
                $region96: #{decoder_forward.1} parent=90 // loop_footer
                  %s4049 = sadd.s32 1, %s4045
                $region97: #{decoder_forward.1} parent=90 // loop_footer_branch
                  %4044 = sbr.rel target = $region93
                $region98: #{decoder_forward.1} parent=90 // loop_exit
                  _
              $region91: #{decoder_forward.1} parent=75 // pred_fallthru
                _
              // Predicated region
              $region99: #{decoder_forward.1} parent=75 // pred_check
                _
              $region100: #{decoder_forward.1} parent=75 // pred_check_branch
                %4181 = sbr.rel target = $region102
              $region101: #{decoder_forward.1} parent=75 // pred_region
                _
              $region102: #{decoder_forward.1} parent=75 // pred_fallthru
                _
            $region76: #{decoder_forward.1} parent=71 // pred_fallthru
              _
            // Predicated region
            $region77: #{decoder_forward.1} parent=71 // pred_check
              _
            $region78: #{decoder_forward.1} parent=71 // pred_check_branch
              %3904 = sbr.rel target = $region80
            $region79: #{decoder_forward.1} parent=71 // pred_region
              loop: start=0, step=1, limit=1
              $region81: #{decoder_forward.1} parent=79 // loop_pre_header
                _
              $region82: #{decoder_forward.1} parent=79 // loop_header
                %s3907 = sphi 0, %s3911
                %p3908 = scmp.ge.s32.totalorder %s3907, 1
                %s3912 = sphi %s3889, %s3889
                %s3913 = sphi %s3898, %s3898
              $region83: #{decoder_forward.1} parent=79 // loop_header_branch
                %3910 = sbr.rel (%p3908) target = $region87
              $region84: #{decoder_forward.1} parent=79 // loop_body
                %v3914 = vld [vmem:[%s3912] sm:$0xff]
                %3915 = vst [vmem:[%s3913] sm:$0xff] %v3914
                %v3916 = vld [vmem:[%s3912 + $0x8] sm:$0xff]
                %3917 = vst [vmem:[%s3913 + $0x8] sm:$0xff] %v3916
                %v3918 = vld [vmem:[%s3912 + $0x10] sm:$0xff]
                %3919 = vst [vmem:[%s3913 + $0x10] sm:$0xff] %v3918
                %v3920 = vld [vmem:[%s3912 + $0x18] sm:$0xff]
                %3921 = vst [vmem:[%s3913 + $0x18] sm:$0xff] %v3920
                %v3922 = vld [vmem:[%s3912 + $0x20] sm:$0xff]
                %3923 = vst [vmem:[%s3913 + $0x20] sm:$0xff] %v3922
                %v3924 = vld [vmem:[%s3912 + $0x28] sm:$0xff]
                %3925 = vst [vmem:[%s3913 + $0x28] sm:$0xff] %v3924
                %v3926 = vld [vmem:[%s3912 + $0x30] sm:$0xff]
                %3927 = vst [vmem:[%s3913 + $0x30] sm:$0xff] %v3926
                %v3928 = vld [vmem:[%s3912 + $0x38] sm:$0xff]
                %3929 = vst [vmem:[%s3913 + $0x38] sm:$0xff] %v3928
                %v3930 = vld [vmem:[%s3912 + $0x40] sm:$0xff]
                %3931 = vst [vmem:[%s3913 + $0x40] sm:$0xff] %v3930
                %v3932 = vld [vmem:[%s3912 + $0x48] sm:$0xff]
                %3933 = vst [vmem:[%s3913 + $0x48] sm:$0xff] %v3932
                %v3934 = vld [vmem:[%s3912 + $0x50] sm:$0xff]
                %3935 = vst [vmem:[%s3913 + $0x50] sm:$0xff] %v3934
                %v3936 = vld [vmem:[%s3912 + $0x58] sm:$0xff]
                %3937 = vst [vmem:[%s3913 + $0x58] sm:$0xff] %v3936
                %v3938 = vld [vmem:[%s3912 + $0x60] sm:$0xff]
                %3939 = vst [vmem:[%s3913 + $0x60] sm:$0xff] %v3938
                %v3940 = vld [vmem:[%s3912 + $0x68] sm:$0xff]
                %3941 = vst [vmem:[%s3913 + $0x68] sm:$0xff] %v3940
                %v3942 = vld [vmem:[%s3912 + $0x70] sm:$0xff]
                %3943 = vst [vmem:[%s3913 + $0x70] sm:$0xff] %v3942
                %v3944 = vld [vmem:[%s3912 + $0x78] sm:$0xff]
                %3945 = vst [vmem:[%s3913 + $0x78] sm:$0xff] %v3944
                %v3946 = vld [vmem:[%s3912 + $0x80] sm:$0xff]
                %3947 = vst [vmem:[%s3913 + $0x100] sm:$0xff] %v3946
                %v3948 = vld [vmem:[%s3912 + $0x88] sm:$0xff]
                %3949 = vst [vmem:[%s3913 + $0x108] sm:$0xff] %v3948
                %v3950 = vld [vmem:[%s3912 + $0x90] sm:$0xff]
                %3951 = vst [vmem:[%s3913 + $0x110] sm:$0xff] %v3950
                %v3952 = vld [vmem:[%s3912 + $0x98] sm:$0xff]
                %3953 = vst [vmem:[%s3913 + $0x118] sm:$0xff] %v3952
                %v3954 = vld [vmem:[%s3912 + $0xa0] sm:$0xff]
                %3955 = vst [vmem:[%s3913 + $0x120] sm:$0xff] %v3954
                %v3956 = vld [vmem:[%s3912 + $0xa8] sm:$0xff]
                %3957 = vst [vmem:[%s3913 + $0x128] sm:$0xff] %v3956
                %v3958 = vld [vmem:[%s3912 + $0xb0] sm:$0xff]
                %3959 = vst [vmem:[%s3913 + $0x130] sm:$0xff] %v3958
                %v3960 = vld [vmem:[%s3912 + $0xb8] sm:$0xff]
                %3961 = vst [vmem:[%s3913 + $0x138] sm:$0xff] %v3960
                %v3962 = vld [vmem:[%s3912 + $0xc0] sm:$0xff]
                %3963 = vst [vmem:[%s3913 + $0x140] sm:$0xff] %v3962
                %v3964 = vld [vmem:[%s3912 + $0xc8] sm:$0xff]
                %3965 = vst [vmem:[%s3913 + $0x148] sm:$0xff] %v3964
                %v3966 = vld [vmem:[%s3912 + $0xd0] sm:$0xff]
                %3967 = vst [vmem:[%s3913 + $0x150] sm:$0xff] %v3966
                %v3968 = vld [vmem:[%s3912 + $0xd8] sm:$0xff]
                %3969 = vst [vmem:[%s3913 + $0x158] sm:$0xff] %v3968
                %v3970 = vld [vmem:[%s3912 + $0xe0] sm:$0xff]
                %3971 = vst [vmem:[%s3913 + $0x160] sm:$0xff] %v3970
                %v3972 = vld [vmem:[%s3912 + $0xe8] sm:$0xff]
                %3973 = vst [vmem:[%s3913 + $0x168] sm:$0xff] %v3972
                %v3974 = vld [vmem:[%s3912 + $0xf0] sm:$0xff]
                %3975 = vst [vmem:[%s3913 + $0x170] sm:$0xff] %v3974
                %v3976 = vld [vmem:[%s3912 + $0xf8] sm:$0xff]
                %3977 = vst [vmem:[%s3913 + $0x178] sm:$0xff] %v3976
                %v3978 = vld [vmem:[%s3912 + $0x100] sm:$0xff]
                %3979 = vst [vmem:[%s3913 + $0x200] sm:$0xff] %v3978
                %v3980 = vld [vmem:[%s3912 + $0x108] sm:$0xff]
                %3981 = vst [vmem:[%s3913 + $0x208] sm:$0xff] %v3980
                %v3982 = vld [vmem:[%s3912 + $0x110] sm:$0xff]
                %3983 = vst [vmem:[%s3913 + $0x210] sm:$0xff] %v3982
                %v3984 = vld [vmem:[%s3912 + $0x118] sm:$0xff]
                %3985 = vst [vmem:[%s3913 + $0x218] sm:$0xff] %v3984
                %v3986 = vld [vmem:[%s3912 + $0x120] sm:$0xff]
                %3987 = vst [vmem:[%s3913 + $0x220] sm:$0xff] %v3986
                %v3988 = vld [vmem:[%s3912 + $0x128] sm:$0xff]
                %3989 = vst [vmem:[%s3913 + $0x228] sm:$0xff] %v3988
                %v3990 = vld [vmem:[%s3912 + $0x130] sm:$0xff]
                %3991 = vst [vmem:[%s3913 + $0x230] sm:$0xff] %v3990
                %v3992 = vld [vmem:[%s3912 + $0x138] sm:$0xff]
                %3993 = vst [vmem:[%s3913 + $0x238] sm:$0xff] %v3992
                %v3994 = vld [vmem:[%s3912 + $0x140] sm:$0xff]
                %3995 = vst [vmem:[%s3913 + $0x240] sm:$0xff] %v3994
                %v3996 = vld [vmem:[%s3912 + $0x148] sm:$0xff]
                %3997 = vst [vmem:[%s3913 + $0x248] sm:$0xff] %v3996
                %v3998 = vld [vmem:[%s3912 + $0x150] sm:$0xff]
                %3999 = vst [vmem:[%s3913 + $0x250] sm:$0xff] %v3998
                %v4000 = vld [vmem:[%s3912 + $0x158] sm:$0xff]
                %4001 = vst [vmem:[%s3913 + $0x258] sm:$0xff] %v4000
                %v4002 = vld [vmem:[%s3912 + $0x160] sm:$0xff]
                %4003 = vst [vmem:[%s3913 + $0x260] sm:$0xff] %v4002
                %v4004 = vld [vmem:[%s3912 + $0x168] sm:$0xff]
                %4005 = vst [vmem:[%s3913 + $0x268] sm:$0xff] %v4004
                %v4006 = vld [vmem:[%s3912 + $0x170] sm:$0xff]
                %4007 = vst [vmem:[%s3913 + $0x270] sm:$0xff] %v4006
                %v4008 = vld [vmem:[%s3912 + $0x178] sm:$0xff]
                %4009 = vst [vmem:[%s3913 + $0x278] sm:$0xff] %v4008
                %v4010 = vld [vmem:[%s3912 + $0x180] sm:$0xff]
                %4011 = vst [vmem:[%s3913 + $0x300] sm:$0xff] %v4010
                %v4012 = vld [vmem:[%s3912 + $0x188] sm:$0xff]
                %4013 = vst [vmem:[%s3913 + $0x308] sm:$0xff] %v4012
                %v4014 = vld [vmem:[%s3912 + $0x190] sm:$0xff]
                %4015 = vst [vmem:[%s3913 + $0x310] sm:$0xff] %v4014
                %v4016 = vld [vmem:[%s3912 + $0x198] sm:$0xff]
                %4017 = vst [vmem:[%s3913 + $0x318] sm:$0xff] %v4016
                %v4018 = vld [vmem:[%s3912 + $0x1a0] sm:$0xff]
                %4019 = vst [vmem:[%s3913 + $0x320] sm:$0xff] %v4018
                %v4020 = vld [vmem:[%s3912 + $0x1a8] sm:$0xff]
                %4021 = vst [vmem:[%s3913 + $0x328] sm:$0xff] %v4020
                %v4022 = vld [vmem:[%s3912 + $0x1b0] sm:$0xff]
                %4023 = vst [vmem:[%s3913 + $0x330] sm:$0xff] %v4022
                %v4024 = vld [vmem:[%s3912 + $0x1b8] sm:$0xff]
                %4025 = vst [vmem:[%s3913 + $0x338] sm:$0xff] %v4024
                %v4026 = vld [vmem:[%s3912 + $0x1c0] sm:$0xff]
                %4027 = vst [vmem:[%s3913 + $0x340] sm:$0xff] %v4026
                %v4028 = vld [vmem:[%s3912 + $0x1c8] sm:$0xff]
                %4029 = vst [vmem:[%s3913 + $0x348] sm:$0xff] %v4028
                %v4030 = vld [vmem:[%s3912 + $0x1d0] sm:$0xff]
                %4031 = vst [vmem:[%s3913 + $0x350] sm:$0xff] %v4030
                %v4032 = vld [vmem:[%s3912 + $0x1d8] sm:$0xff]
                %4033 = vst [vmem:[%s3913 + $0x358] sm:$0xff] %v4032
                %v4034 = vld [vmem:[%s3912 + $0x1e0] sm:$0xff]
                %4035 = vst [vmem:[%s3913 + $0x360] sm:$0xff] %v4034
                %v4036 = vld [vmem:[%s3912 + $0x1e8] sm:$0xff]
                %4037 = vst [vmem:[%s3913 + $0x368] sm:$0xff] %v4036
                %v4038 = vld [vmem:[%s3912 + $0x1f0] sm:$0xff]
                %4039 = vst [vmem:[%s3913 + $0x370] sm:$0xff] %v4038
                %v4040 = vld [vmem:[%s3912 + $0x1f8] sm:$0xff]
                %4041 = vst [vmem:[%s3913 + $0x378] sm:$0xff] %v4040
              $region85: #{decoder_forward.1} parent=79 // loop_footer
                %s3911 = sadd.s32 1, %s3907
              $region86: #{decoder_forward.1} parent=79 // loop_footer_branch
                %3906 = sbr.rel target = $region82
              $region87: #{decoder_forward.1} parent=79 // loop_exit
                _
            $region80: #{decoder_forward.1} parent=71 // pred_fallthru
              _
          $region72: #{decoder_forward.1} parent=67 // pred_fallthru
            _
          %4182 = vnop
        $region68: #{decoder_forward.1} parent=63 // pred_fallthru
          _
      $region64: #{decoder_forward.1} parent=5 // pred_fallthru
        _
      %p4183 = scmp.le.s32.totalorder 2, %s17
      // Predicated region
      $region103: #{decoder_forward.1} parent=5 // pred_check
        %p4184 = pneg %p4183
      $region104: #{decoder_forward.1} parent=5 // pred_check_branch
        %4186 = sbr.rel (%p4184) target = $region106
      $region105: #{decoder_forward.1} parent=5 // pred_region
        %s4187 = ssub.s32 %s17, 2
        // Predicated region
        $region107: #{decoder_forward.1} parent=105 // pred_check
          %p4188 = pneg %p309
        $region108: #{decoder_forward.1} parent=105 // pred_check_branch
          %4190 = sbr.rel (%p4188) target = $region110
        $region109: #{decoder_forward.1} parent=105 // pred_region
          %s4191 = sand.u32 %s294, 1
          %s4192 = sand.u32 %s294, 1
          %s4193 = smul.addr %s4192, 512
          %s4194 = scalar_lea.vmem [#allocation2], %s4193
        $region110: #{decoder_forward.1} parent=105 // pred_fallthru
          _
      $region106: #{decoder_forward.1} parent=5 // pred_fallthru
        _
    $region6: #{decoder_forward.1} parent=1 // loop_footer
      %s21 = sadd.s32 1, %s17
    $region7: #{decoder_forward.1} parent=1 // loop_footer_branch
      %16 = sbr.rel target = $region3
    $region8: #{decoder_forward.1} parent=1 // loop_exit
      _

</llo_original>
